<compile_context>
chip_gen: v7x
topology: tpu7x:2x2x1
jax: 0.10.0
libtpu: 0.0.40
codegen_flags: <defaults>
</compile_context>

<pallas_src>
import jax
import jax.numpy as jnp
from jax.experimental import pallas as pl
from jax.experimental.pallas import tpu as pltpu


# ------------------------------ configuration -------------------------------

C_IN = 3
C_RES4 = 128       # lane-dense "res4" channel count
C_RPN = 128
C_RES5 = 128
NUM_ANCHORS = 3
NUM_CLASSES = 5
HEAD_PAD = 128     # lane-dense padded width for the concatenated head outputs


# ----------------------------- Pallas kernels ------------------------------

def _backbone_conv_kernel(p_ref, w_ref, b_ref, o_ref):
    """im2col'ed stride-4 3x3 conv as matmul + bias + ReLU.

    Pixel normalization ((x - mean)/std) is pre-folded into w/b by the wrapper.
    """
    acc = jnp.dot(p_ref[...], w_ref[...], preferred_element_type=jnp.float32)
    o_ref[...] = jnp.maximum(acc + b_ref[...], 0.0).astype(o_ref.dtype)


def _rpn_roi_fused_kernel(feat_ref, aff_w_ref, aff_b_ref, wconv_ref, bconv_ref,
                          wrpn_ref, brpn_ref, w5_ref, b5_ref, wroi_ref, broi_ref,
                          rpn_out_ref, roi_out_ref, xpad_ref):
    """Fused RPN + ROI branches for one image; the res4 feature is read once.

    RPN: AffineLayer -> zero-pad (VMEM halo tile) -> 3x3 conv as 9 shifted MXU
         matmuls -> ReLU -> concatenated (objectness | anchor_deltas | pad) heads.
    ROI: (affine_rcnn pre-folded into w5/b5) res5 1x1 conv + ReLU -> mean pool
         (sublane reduce) -> concatenated (cls | box | pad) heads.
    Neither rpn_hidden nor res5 ever leaves VMEM.
    """
    hf, wf, c = feat_ref.shape
    c_rpn = wconv_ref.shape[-1]
    hw = hf * wf
    feat = feat_ref[...].reshape(hw, c)

    # ---------------- RPN branch ----------------
    # AffineLayer(num_channels=res4, bias=True); decouple_layer is identity in fwd.
    x2 = feat.astype(jnp.float32) * aff_w_ref[...] + aff_b_ref[...]

    # In-kernel 'same' zero padding of the *affined* feature (exact even for bias != 0).
    xpad_ref[...] = jnp.zeros_like(xpad_ref)
    xpad_ref[1:hf + 1, 1:wf + 1, :] = x2.reshape(hf, wf, c)

    # 3x3 conv as 9 shifted matmuls accumulated in f32 (direct conv, no im2col in HBM).
    acc = jnp.zeros((hw, c_rpn), jnp.float32)
    for dy in range(3):
        for dx in range(3):
            win = xpad_ref[dy:dy + hf, dx:dx + wf, :].reshape(hw, c)
            acc = acc + jnp.dot(win.astype(jnp.bfloat16), wconv_ref[3 * dy + dx],
                                preferred_element_type=jnp.float32)
    hidden = jnp.maximum(acc + bconv_ref[...], 0.0).astype(jnp.bfloat16)

    # Single lane-dense head matmul: columns = [objectness(3) | deltas(12) | zero pad].
    rpn_out_ref[...] = jnp.dot(hidden, wrpn_ref[...],
                               preferred_element_type=jnp.float32) + brpn_ref[...]

    # ---------------- ROI branch ----------------
    # TODO(synk): real ROIAlign over RPN proposals (data-dependent gather); the whole
    # feature map stands in as one "proposal" per image.
    res5 = jnp.dot(feat, w5_ref[...], preferred_element_type=jnp.float32)
    res5 = jnp.maximum(res5 + b5_ref[...], 0.0)
    pooled = jnp.sum(res5, axis=0, keepdims=True) * (1.0 / hw)          # (1, c_res5)
    roi_out_ref[...] = jnp.dot(pooled.astype(jnp.bfloat16), wroi_ref[...],
                               preferred_element_type=jnp.float32) + broi_ref[...]


# ----------------------------- Pallas wrappers ------------------------------

def backbone_conv_pallas(patches2d, w, b, *, tm=128, out_dtype=jnp.bfloat16):
    M, K = patches2d.shape
    Kw, N = w.shape
    assert K == Kw and M % tm == 0
    # At real DeFRCN shapes: keep this grid over M with ~256-512 row tiles (v7x VMEM)
    # or 1024+ (v6e) and let BlockSpec double-buffering pipeline the DMA.
    return pl.pallas_call(
        _backbone_conv_kernel,
        out_shape=jax.ShapeDtypeStruct((M, N), out_dtype),
        grid=(M // tm,),
        in_specs=[pl.BlockSpec((tm, K), lambda i: (i, 0)),
                  pl.BlockSpec((K, N), lambda i: (0, 0)),
                  pl.BlockSpec((1, N), lambda i: (0, 0))],
        out_specs=pl.BlockSpec((tm, N), lambda i: (i, 0)),
        compiler_params=pltpu.CompilerParams(dimension_semantics=("parallel",)),
    )(patches2d, w, b.reshape(1, N))


def rpn_roi_fused_pallas(feat_nhwc, aff_w, aff_b, w_conv, b_conv,
                         w_rpn, b_rpn, w5, b5, w_roi, b_roi):
    N, Hf, Wf, C = feat_nhwc.shape
    c_rpn = w_conv.shape[-1]
    c_res5 = w5.shape[-1]
    n_rpn = w_rpn.shape[-1]
    n_roi = w_roi.shape[-1]
    HW = Hf * Wf
    const2 = lambda n: (0, 0)
    return pl.pallas_call(
        _rpn_roi_fused_kernel,
        out_shape=(jax.ShapeDtypeStruct((N, HW, n_rpn), jnp.float32),
                   jax.ShapeDtypeStruct((N, 1, n_roi), jnp.float32)),
        grid=(N,),
        in_specs=[pl.BlockSpec((None, Hf, Wf, C), lambda n: (n, 0, 0, 0)),
                  pl.BlockSpec((1, C), const2),
                  pl.BlockSpec((1, C), const2),
                  pl.BlockSpec((9, C, c_rpn), lambda n: (0, 0, 0)),
                  pl.BlockSpec((1, c_rpn), const2),
                  pl.BlockSpec((c_rpn, n_rpn), const2),
                  pl.BlockSpec((1, n_rpn), const2),
                  pl.BlockSpec((C, c_res5), const2),
                  pl.BlockSpec((1, c_res5), const2),
                  pl.BlockSpec((c_res5, n_roi), const2),
                  pl.BlockSpec((1, n_roi), const2)],
        out_specs=(pl.BlockSpec((None, HW, n_rpn), lambda n: (n, 0, 0)),
                   pl.BlockSpec((None, 1, n_roi), lambda n: (n, 0, 0))),
        scratch_shapes=[pltpu.VMEM((Hf + 2, Wf + 2, C), jnp.float32)],
        compiler_params=pltpu.CompilerParams(dimension_semantics=("parallel",)),
    )(feat_nhwc, aff_w, aff_b, w_conv, b_conv, w_rpn, b_rpn, w5, b5, w_roi, b_roi)


# ------------------------------- parameters ---------------------------------

def init_params(key, *, c_in=C_IN, c_res4=C_RES4, c_rpn=C_RPN,
                num_anchors=NUM_ANCHORS, c_res5=C_RES5, num_classes=NUM_CLASSES):
    ks = jax.random.split(key, 8)

    def w(k, shape, scale=0.05):
        return scale * jax.random.normal(k, shape, dtype=jnp.float32)

    return {
        # normalize_fn constants (cfg.MODEL.PIXEL_MEAN / PIXEL_STD)
        "pixel_mean": jnp.array([103.53, 116.28, 123.675], dtype=jnp.float32),
        "pixel_std": jnp.array([57.375, 57.12, 58.395], dtype=jnp.float32),
        # backbone: single 3x3 stride-4 conv standing in for ResNet up to res4 (+ReLU)
        "backbone_w": w(ks[0], (9 * c_in, c_res4)),
        "backbone_b": jnp.zeros((c_res4,), jnp.float32),
        # AffineLayer(num_channels=res4.channels, bias=True), DeFRCN init (w=1, b=0)
        "affine_rpn_w": jnp.ones((c_res4,), jnp.float32),
        "affine_rpn_b": jnp.zeros((c_res4,), jnp.float32),
        "affine_rcnn_w": jnp.ones((c_res4,), jnp.float32),
        "affine_rcnn_b": jnp.zeros((c_res4,), jnp.float32),
        # proposal_generator (StandardRPNHead): 3x3 conv + 1x1 objectness + 1x1 deltas
        "rpn_conv_w": w(ks[1], (9, c_res4, c_rpn)),
        "rpn_conv_b": jnp.zeros((c_rpn,), jnp.float32),
        "rpn_obj_w": w(ks[2], (c_rpn, num_anchors)),
        "rpn_obj_b": jnp.zeros((num_anchors,), jnp.float32),
        "rpn_del_w": w(ks[3], (c_rpn, 4 * num_anchors)),
        "rpn_del_b": jnp.zeros((4 * num_anchors,), jnp.float32),
        # roi_heads: res5 stand-in (1x1 conv + ReLU) + cls / box predictors
        "res5_w": w(ks[4], (c_res4, c_res5)),
        "res5_b": jnp.zeros((c_res5,), jnp.float32),
        "cls_w": w(ks[5], (c_res5, num_classes + 1)),
        "cls_b": jnp.zeros((num_classes + 1,), jnp.float32),
        "box_w": w(ks[6], (c_res5, 4 * num_classes)),
        "box_b": jnp.zeros((4 * num_classes,), jnp.float32),
    }


# ------------------------------- forward pass --------------------------------

def generalized_rcnn_forward(params, images_nchw):
    """Inference-mode forward of the (simplified) DeFRCN GeneralizedRCNN."""
    N, C, H, W = images_nchw.shape
    x = jnp.transpose(images_nchw, (0, 2, 3, 1))  # NCHW -> NHWC

    mean = params["pixel_mean"]
    std = params["pixel_std"]

    # --- preprocess_image folded into the backbone conv ---------------------
    # (x-mean)/std followed by conv == conv with w/std and bias shifted by
    # -sum_taps(w*mean/std), provided the raw image is border-padded with `mean`
    # (which is exactly 0 after normalization -> identical to zero-padding the
    # normalized image).  No standalone normalize kernel.
    xpad = jnp.broadcast_to(mean, (N, H + 2, W + 2, C)).astype(x.dtype)
    xpad = xpad.at[:, 1:-1, 1:-1, :].set(x)

    # --- backbone -> 'res4' features: 3x3 conv, stride 4, ReLU --------------
    # Stride-4 im2col is *downsampling* (no HBM blow-up at this stride); the 9x
    # expanding stride-1 conv of the RPN is done fully in-kernel below.
    # TODO(synk): at real DeFRCN shapes do this strided conv in-kernel with halo tiles.
    stride = 4
    cols = []
    for dy in range(3):
        for dx in range(3):
            cols.append(xpad[:, dy:dy + H:stride, dx:dx + W:stride, :])
    patches = jnp.concatenate(cols, axis=-1)            # (N, H/4, W/4, 9*C)
    Nh, Hf, Wf, Kp = patches.shape
    M0 = Nh * Hf * Wf

    inv_std_k = jnp.tile(1.0 / std, 9)                  # per-tap 1/std, tap-major (dy,dx,c)
    mean_k = jnp.tile(mean, 9)
    bb_w = (params["backbone_w"] * inv_std_k[:, None]).astype(jnp.bfloat16)
    bb_b = params["backbone_b"] - (params["backbone_w"]
                                   * (mean_k * inv_std_k)[:, None]).sum(axis=0)

    feat2d = backbone_conv_pallas(
        patches.reshape(M0, Kp).astype(jnp.bfloat16), bb_w, bb_b,
        tm=min(M0, 128))                                 # (M0, C_RES4) bf16
    c_res4 = feat2d.shape[-1]
    feat_nhwc = feat2d.reshape(Nh, Hf, Wf, c_res4)

    # --- head weight packing (lane-dense 128-wide concatenated heads) --------
    n_obj = params["rpn_obj_w"].shape[1]
    n_del = params["rpn_del_w"].shape[1]
    w_rpn = jnp.concatenate([params["rpn_obj_w"], params["rpn_del_w"]], axis=1)
    b_rpn = jnp.concatenate([params["rpn_obj_b"], params["rpn_del_b"]])
    w_rpn = jnp.pad(w_rpn, ((0, 0), (0, HEAD_PAD - w_rpn.shape[1]))).astype(jnp.bfloat16)
    b_rpn = jnp.pad(b_rpn, (0, HEAD_PAD - b_rpn.shape[0])).reshape(1, HEAD_PAD)

    # affine_rcnn folded into res5 (exact: per-channel linear into a 1x1 conv).
    a_rc = params["affine_rcnn_w"]
    b_rc = params["affine_rcnn_b"]
    w5 = (a_rc[:, None] * params["res5_w"]).astype(jnp.bfloat16)
    b5 = (params["res5_b"] + b_rc @ params["res5_w"]).reshape(1, -1)

    n_cls = params["cls_w"].shape[1]
    n_box = params["box_w"].shape[1]
    w_roi = jnp.concatenate([params["cls_w"], params["box_w"]], axis=1)
    b_roi = jnp.concatenate([params["cls_b"], params["box_b"]])
    w_roi = jnp.pad(w_roi, ((0, 0), (0, HEAD_PAD - w_roi.shape[1]))).astype(jnp.bfloat16)
    b_roi = jnp.pad(b_roi, (0, HEAD_PAD - b_roi.shape[0])).reshape(1, HEAD_PAD)

    # --- RPN + ROI branches: ONE fused kernel (feature read from HBM once) ---
    rpn_out, roi_out = rpn_roi_fused_pallas(
        feat_nhwc,
        params["affine_rpn_w"].reshape(1, c_res4),
        params["affine_rpn_b"].reshape(1, c_res4),
        params["rpn_conv_w"].astype(jnp.bfloat16),
        params["rpn_conv_b"].reshape(1, -1),
        w_rpn, b_rpn, w5, b5, w_roi, b_roi)

    rpn_out = rpn_out.reshape(Nh, Hf, Wf, HEAD_PAD)      # (N, Hf, Wf, 128) f32
    objectness = rpn_out[..., :n_obj]
    anchor_deltas = rpn_out[..., n_obj:n_obj + n_del]

    roi_out = roi_out.reshape(Nh, HEAD_PAD)               # (N, 128) f32
    cls_logits = roi_out[:, :n_cls]
    box_deltas = roi_out[:, n_cls:n_cls + n_box]

    return {
        "rpn_objectness_logits": objectness,
        "rpn_anchor_deltas": anchor_deltas,
        "roi_cls_logits": cls_logits,
        "roi_box_deltas": box_deltas,
    }


if __name__ == "__main__":
    key = jax.random.PRNGKey(0)
    k_params, k_img = jax.random.split(key)
    params = init_params(k_params)

    # Synthetic "batched_inputs": batch=2, 3-channel 32x32 images in [0, 255].
    images = jax.random.uniform(k_img, (2, 3, 32, 32), dtype=jnp.float32,
                                minval=0.0, maxval=255.0)

    outputs = jax.jit(generalized_rcnn_forward)(params, images)
    jax.block_until_ready(outputs)

    assert outputs["rpn_objectness_logits"].shape == (2, 8, 8, 3)
    assert outputs["rpn_anchor_deltas"].shape == (2, 8, 8, 12)
    assert outputs["roi_cls_logits"].shape == (2, 6)
    assert outputs["roi_box_deltas"].shape == (2, 20)
    print("KERNEL_OK")
</pallas_src>

<mosaic_0001>
module attributes {stable_mosaic.version = 11 : i64} {
  func.func @_backbone_conv_kernel(%arg0: i32, %arg1: memref<128x27xbf16, #tpu.memory_space<vmem>>, %arg2: memref<27x128xbf16, #tpu.memory_space<vmem>>, %arg3: memref<1x128xf32, #tpu.memory_space<vmem>>, %arg4: memref<128x128xbf16, #tpu.memory_space<vmem>>) attributes {dimension_semantics = [#tpu.dimension_semantics<parallel>], iteration_bounds = array<i64: 1>, scalar_prefetch = 0 : i64, scratch_operands = 0 : i64, tpu.core_type = #tpu.core_type<tc>, window_params = [{transform_indices = @transform_0, window_bounds = array<i64: 128, 27>}, {pipeline_mode = #tpu.pipeline_mode<synchronous>, transform_indices = @transform_1, window_bounds = array<i64: 27, 128>}, {pipeline_mode = #tpu.pipeline_mode<synchronous>, transform_indices = @transform_2, window_bounds = array<i64: 1, 128>}, {transform_indices = @transform_3, window_bounds = array<i64: 128, 128>}]} {
    %c0 = arith.constant 0 : index
    %c0_0 = arith.constant 0 : index
    %0 = vector.load %arg1[%c0, %c0_0] : memref<128x27xbf16, #tpu.memory_space<vmem>>, vector<128x27xbf16>
    %c0_1 = arith.constant 0 : index
    %c0_2 = arith.constant 0 : index
    %1 = vector.load %arg2[%c0_1, %c0_2] : memref<27x128xbf16, #tpu.memory_space<vmem>>, vector<27x128xbf16>
    %cst = arith.constant dense<0.000000e+00> : vector<128x128xf32>
    %2 = tpu.matmul %0, %1, %cst {dimension_numbers = #tpu.dot_dimension_numbers<[1], [0], [0], [1], [0, 0, 1, 1], [], []>} : vector<128x27xbf16>, vector<27x128xbf16>, vector<128x128xf32> -> vector<128x128xf32>
    %c0_3 = arith.constant 0 : index
    %c0_4 = arith.constant 0 : index
    %3 = vector.load %arg3[%c0_3, %c0_4] : memref<1x128xf32, #tpu.memory_space<vmem>>, vector<1x128xf32>
    %4 = vector.broadcast %3 : vector<1x128xf32> to vector<128x128xf32>
    %5 = arith.addf %2, %4 : vector<128x128xf32>
    %cst_5 = arith.constant 0.000000e+00 : f32
    %6 = vector.broadcast %cst_5 : f32 to vector<128x128xf32>
    %7 = arith.maximumf %5, %6 : vector<128x128xf32>
    %8 = arith.truncf %7 : vector<128x128xf32> to vector<128x128xbf16>
    %c0_6 = arith.constant 0 : index
    %c0_7 = arith.constant 0 : index
    %9 = vector.load %arg4[%c0_6, %c0_7] : memref<128x128xbf16, #tpu.memory_space<vmem>>, vector<128x128xbf16>
    tpu.vector_store %arg4[%c0_6, %c0_7], %8 {strides = array<i32>} : memref<128x128xbf16, #tpu.memory_space<vmem>>, vector<128x128xbf16>,
    return
  }
  func.func @transform_0(%arg0: i32) -> (i32, i32) {
    %c0_i32 = arith.constant 0 : i32
    %c0_i32_0 = arith.constant 0 : i32
    return %arg0, %c0_i32 : i32, i32
  }
  func.func @transform_1(%arg0: i32) -> (i32, i32) {
    %c0_i32 = arith.constant 0 : i32
    %c0_i32_0 = arith.constant 0 : i32
    %c0_i32_1 = arith.constant 0 : i32
    return %c0_i32, %c0_i32_0 : i32, i32
  }
  func.func @transform_2(%arg0: i32) -> (i32, i32) {
    %c0_i32 = arith.constant 0 : i32
    %c0_i32_0 = arith.constant 0 : i32
    %c0_i32_1 = arith.constant 0 : i32
    return %c0_i32, %c0_i32_0 : i32, i32
  }
  func.func @transform_3(%arg0: i32) -> (i32, i32) {
    %c0_i32 = arith.constant 0 : i32
    %c0_i32_0 = arith.constant 0 : i32
    return %arg0, %c0_i32 : i32, i32
  }
}

module attributes {stable_mosaic.version = 11 : i64} {
  func.func @_rpn_roi_fused_kernel(%arg0: i32, %arg1: memref<1x8x8x128xbf16, #tpu.memory_space<vmem>>, %arg2: memref<1x128xf32, #tpu.memory_space<vmem>>, %arg3: memref<1x128xf32, #tpu.memory_space<vmem>>, %arg4: memref<9x128x128xbf16, #tpu.memory_space<vmem>>, %arg5: memref<1x128xf32, #tpu.memory_space<vmem>>, %arg6: memref<128x128xbf16, #tpu.memory_space<vmem>>, %arg7: memref<1x128xf32, #tpu.memory_space<vmem>>, %arg8: memref<128x128xbf16, #tpu.memory_space<vmem>>, %arg9: memref<1x128xf32, #tpu.memory_space<vmem>>, %arg10: memref<128x128xbf16, #tpu.memory_space<vmem>>, %arg11: memref<1x128xf32, #tpu.memory_space<vmem>>, %arg12: memref<1x64x128xf32, #tpu.memory_space<vmem>>, %arg13: memref<1x1x128xf32, #tpu.memory_space<vmem>>, %arg14: memref<10x10x128xf32, #tpu.memory_space<vmem>>) attributes {dimension_semantics = [#tpu.dimension_semantics<parallel>], iteration_bounds = array<i64: 2>, scalar_prefetch = 0 : i64, scratch_operands = 1 : i64, tpu.core_type = #tpu.core_type<tc>, window_params = [{transform_indices = @transform_0, window_bounds = array<i64: 1, 8, 8, 128>}, {pipeline_mode = #tpu.pipeline_mode<synchronous>, transform_indices = @transform_1, window_bounds = array<i64: 1, 128>}, {pipeline_mode = #tpu.pipeline_mode<synchronous>, transform_indices = @transform_2, window_bounds = array<i64: 1, 128>}, {pipeline_mode = #tpu.pipeline_mode<synchronous>, transform_indices = @transform_3, window_bounds = array<i64: 9, 128, 128>}, {pipeline_mode = #tpu.pipeline_mode<synchronous>, transform_indices = @transform_4, window_bounds = array<i64: 1, 128>}, {pipeline_mode = #tpu.pipeline_mode<synchronous>, transform_indices = @transform_5, window_bounds = array<i64: 128, 128>}, {pipeline_mode = #tpu.pipeline_mode<synchronous>, transform_indices = @transform_6, window_bounds = array<i64: 1, 128>}, {pipeline_mode = #tpu.pipeline_mode<synchronous>, transform_indices = @transform_7, window_bounds = array<i64: 128, 128>}, {pipeline_mode = #tpu.pipeline_mode<synchronous>, transform_indices = @transform_8, window_bounds = array<i64: 1, 128>}, {pipeline_mode = #tpu.pipeline_mode<synchronous>, transform_indices = @transform_9, window_bounds = array<i64: 128, 128>}, {pipeline_mode = #tpu.pipeline_mode<synchronous>, transform_indices = @transform_10, window_bounds = array<i64: 1, 128>}, {transform_indices = @transform_11, window_bounds = array<i64: 1, 64, 128>}, {transform_indices = @transform_12, window_bounds = array<i64: 1, 1, 128>}]} {
    %c0 = arith.constant 0 : index
    %c0_0 = arith.constant 0 : index
    %c0_1 = arith.constant 0 : index
    %c0_2 = arith.constant 0 : index
    %0 = vector.load %arg1[%c0, %c0_0, %c0_1, %c0_2] : memref<1x8x8x128xbf16, #tpu.memory_space<vmem>>, vector<1x8x8x128xbf16>
    %1 = vector.shape_cast %0 : vector<1x8x8x128xbf16> to vector<8x8x128xbf16>
    %2 = vector.shape_cast %1 : vector<8x8x128xbf16> to vector<64x128xbf16>
    %3 = arith.extf %2 : vector<64x128xbf16> to vector<64x128xf32>
    %c0_3 = arith.constant 0 : index
    %c0_4 = arith.constant 0 : index
    %4 = vector.load %arg2[%c0_3, %c0_4] : memref<1x128xf32, #tpu.memory_space<vmem>>, vector<1x128xf32>
    %5 = vector.broadcast %4 : vector<1x128xf32> to vector<64x128xf32>
    %6 = arith.mulf %3, %5 : vector<64x128xf32>
    %c0_5 = arith.constant 0 : index
    %c0_6 = arith.constant 0 : index
    %7 = vector.load %arg3[%c0_5, %c0_6] : memref<1x128xf32, #tpu.memory_space<vmem>>, vector<1x128xf32>
    %8 = vector.broadcast %7 : vector<1x128xf32> to vector<64x128xf32>
    %9 = arith.addf %6, %8 : vector<64x128xf32>
    %cst = arith.constant 0.000000e+00 : f32
    %10 = vector.broadcast %cst : f32 to vector<10x10x128xf32>
    %c0_7 = arith.constant 0 : index
    %c0_8 = arith.constant 0 : index
    %c0_9 = arith.constant 0 : index
    %11 = vector.load %arg14[%c0_7, %c0_8, %c0_9] : memref<10x10x128xf32, #tpu.memory_space<vmem>>, vector<10x10x128xf32>
    tpu.vector_store %arg14[%c0_7, %c0_8, %c0_9], %10 {strides = array<i32>} : memref<10x10x128xf32, #tpu.memory_space<vmem>>, vector<10x10x128xf32>,
    %12 = vector.shape_cast %9 : vector<64x128xf32> to vector<8x8x128xf32>
    %c1 = arith.constant 1 : index
    %c1_10 = arith.constant 1 : index
    %c0_11 = arith.constant 0 : index
    %13 = vector.load %arg14[%c1, %c1_10, %c0_11] : memref<10x10x128xf32, #tpu.memory_space<vmem>>, vector<8x8x128xf32>
    tpu.vector_store %arg14[%c1, %c1_10, %c0_11], %12 {strides = array<i32>} : memref<10x10x128xf32, #tpu.memory_space<vmem>>, vector<8x8x128xf32>,
    %cst_12 = arith.constant 0.000000e+00 : f32
    %14 = vector.broadcast %cst_12 : f32 to vector<64x128xf32>
    %c0_13 = arith.constant 0 : index
    %c0_14 = arith.constant 0 : index
    %c0_15 = arith.constant 0 : index
    %15 = vector.load %arg14[%c0_13, %c0_14, %c0_15] : memref<10x10x128xf32, #tpu.memory_space<vmem>>, vector<8x8x128xf32>
    %16 = vector.shape_cast %15 : vector<8x8x128xf32> to vector<64x128xf32>
    %17 = arith.truncf %16 : vector<64x128xf32> to vector<64x128xbf16>
    %c0_16 = arith.constant 0 : index
    %c0_17 = arith.constant 0 : index
    %c0_18 = arith.constant 0 : index
    %18 = vector.load %arg4[%c0_16, %c0_17, %c0_18] : memref<9x128x128xbf16, #tpu.memory_space<vmem>>, vector<1x128x128xbf16>
    %19 = vector.shape_cast %18 : vector<1x128x128xbf16> to vector<128x128xbf16>
    %cst_19 = arith.constant dense<0.000000e+00> : vector<64x128xf32>
    %20 = tpu.matmul %17, %19, %cst_19 {dimension_numbers = #tpu.dot_dimension_numbers<[1], [0], [0], [1], [0, 0, 1, 1], [], []>} : vector<64x128xbf16>, vector<128x128xbf16>, vector<64x128xf32> -> vector<64x128xf32>
    %21 = arith.addf %14, %20 : vector<64x128xf32>
    %c0_20 = arith.constant 0 : index
    %c1_21 = arith.constant 1 : index
    %c0_22 = arith.constant 0 : index
    %22 = vector.load %arg14[%c0_20, %c1_21, %c0_22] : memref<10x10x128xf32, #tpu.memory_space<vmem>>, vector<8x8x128xf32>
    %23 = vector.shape_cast %22 : vector<8x8x128xf32> to vector<64x128xf32>
    %24 = arith.truncf %23 : vector<64x128xf32> to vector<64x128xbf16>
    %c1_23 = arith.constant 1 : index
    %c0_24 = arith.constant 0 : index
    %c0_25 = arith.constant 0 : index
    %25 = vector.load %arg4[%c1_23, %c0_24, %c0_25] : memref<9x128x128xbf16, #tpu.memory_space<vmem>>, vector<1x128x128xbf16>
    %26 = vector.shape_cast %25 : vector<1x128x128xbf16> to vector<128x128xbf16>
    %cst_26 = arith.constant dense<0.000000e+00> : vector<64x128xf32>
    %27 = tpu.matmul %24, %26, %cst_26 {dimension_numbers = #tpu.dot_dimension_numbers<[1], [0], [0], [1], [0, 0, 1, 1], [], []>} : vector<64x128xbf16>, vector<128x128xbf16>, vector<64x128xf32> -> vector<64x128xf32>
    %28 = arith.addf %21, %27 : vector<64x128xf32>
    %c0_27 = arith.constant 0 : index
    %c2 = arith.constant 2 : index
    %c0_28 = arith.constant 0 : index
    %29 = vector.load %arg14[%c0_27, %c2, %c0_28] : memref<10x10x128xf32, #tpu.memory_space<vmem>>, vector<8x8x128xf32>
    %30 = vector.shape_cast %29 : vector<8x8x128xf32> to vector<64x128xf32>
    %31 = arith.truncf %30 : vector<64x128xf32> to vector<64x128xbf16>
    %c2_29 = arith.constant 2 : index
    %c0_30 = arith.constant 0 : index
    %c0_31 = arith.constant 0 : index
    %32 = vector.load %arg4[%c2_29, %c0_30, %c0_31] : memref<9x128x128xbf16, #tpu.memory_space<vmem>>, vector<1x128x128xbf16>
    %33 = vector.shape_cast %32 : vector<1x128x128xbf16> to vector<128x128xbf16>
    %cst_32 = arith.constant dense<0.000000e+00> : vector<64x128xf32>
    %34 = tpu.matmul %31, %33, %cst_32 {dimension_numbers = #tpu.dot_dimension_numbers<[1], [0], [0], [1], [0, 0, 1, 1], [], []>} : vector<64x128xbf16>, vector<128x128xbf16>, vector<64x128xf32> -> vector<64x128xf32>
    %35 = arith.addf %28, %34 : vector<64x128xf32>
    %c1_33 = arith.constant 1 : index
    %c0_34 = arith.constant 0 : index
    %c0_35 = arith.constant 0 : index
    %36 = vector.load %arg14[%c1_33, %c0_34, %c0_35] : memref<10x10x128xf32, #tpu.memory_space<vmem>>, vector<8x8x128xf32>
    %37 = vector.shape_cast %36 : vector<8x8x128xf32> to vector<64x128xf32>
    %38 = arith.truncf %37 : vector<64x128xf32> to vector<64x128xbf16>
    %c3 = arith.constant 3 : index
    %c0_36 = arith.constant 0 : index
    %c0_37 = arith.constant 0 : index
    %39 = vector.load %arg4[%c3, %c0_36, %c0_37] : memref<9x128x128xbf16, #tpu.memory_space<vmem>>, vector<1x128x128xbf16>
    %40 = vector.shape_cast %39 : vector<1x128x128xbf16> to vector<128x128xbf16>
    %cst_38 = arith.constant dense<0.000000e+00> : vector<64x128xf32>
    %41 = tpu.matmul %38, %40, %cst_38 {dimension_numbers = #tpu.dot_dimension_numbers<[1], [0], [0], [1], [0, 0, 1, 1], [], []>} : vector<64x128xbf16>, vector<128x128xbf16>, vector<64x128xf32> -> vector<64x128xf32>
    %42 = arith.addf %35, %41 : vector<64x128xf32>
    %c1_39 = arith.constant 1 : index
    %c1_40 = arith.constant 1 : index
    %c0_41 = arith.constant 0 : index
    %43 = vector.load %arg14[%c1_39, %c1_40, %c0_41] : memref<10x10x128xf32, #tpu.memory_space<vmem>>, vector<8x8x128xf32>
    %44 = vector.shape_cast %43 : vector<8x8x128xf32> to vector<64x128xf32>
    %45 = arith.truncf %44 : vector<64x128xf32> to vector<64x128xbf16>
    %c4 = arith.constant 4 : index
    %c0_42 = arith.constant 0 : index
    %c0_43 = arith.constant 0 : index
    %46 = vector.load %arg4[%c4, %c0_42, %c0_43] : memref<9x128x128xbf16, #tpu.memory_space<vmem>>, vector<1x128x128xbf16>
    %47 = vector.shape_cast %46 : vector<1x128x128xbf16> to vector<128x128xbf16>
    %cst_44 = arith.constant dense<0.000000e+00> : vector<64x128xf32>
    %48 = tpu.matmul %45, %47, %cst_44 {dimension_numbers = #tpu.dot_dimension_numbers<[1], [0], [0], [1], [0, 0, 1, 1], [], []>} : vector<64x128xbf16>, vector<128x128xbf16>, vector<64x128xf32> -> vector<64x128xf32>
    %49 = arith.addf %42, %48 : vector<64x128xf32>
    %c1_45 = arith.constant 1 : index
    %c2_46 = arith.constant 2 : index
    %c0_47 = arith.constant 0 : index
    %50 = vector.load %arg14[%c1_45, %c2_46, %c0_47] : memref<10x10x128xf32, #tpu.memory_space<vmem>>, vector<8x8x128xf32>
    %51 = vector.shape_cast %50 : vector<8x8x128xf32> to vector<64x128xf32>
    %52 = arith.truncf %51 : vector<64x128xf32> to vector<64x128xbf16>
    %c5 = arith.constant 5 : index
    %c0_48 = arith.constant 0 : index
    %c0_49 = arith.constant 0 : index
    %53 = vector.load %arg4[%c5, %c0_48, %c0_49] : memref<9x128x128xbf16, #tpu.memory_space<vmem>>, vector<1x128x128xbf16>
    %54 = vector.shape_cast %53 : vector<1x128x128xbf16> to vector<128x128xbf16>
    %cst_50 = arith.constant dense<0.000000e+00> : vector<64x128xf32>
    %55 = tpu.matmul %52, %54, %cst_50 {dimension_numbers = #tpu.dot_dimension_numbers<[1], [0], [0], [1], [0, 0, 1, 1], [], []>} : vector<64x128xbf16>, vector<128x128xbf16>, vector<64x128xf32> -> vector<64x128xf32>
    %56 = arith.addf %49, %55 : vector<64x128xf32>
    %c2_51 = arith.constant 2 : index
    %c0_52 = arith.constant 0 : index
    %c0_53 = arith.constant 0 : index
    %57 = vector.load %arg14[%c2_51, %c0_52, %c0_53] : memref<10x10x128xf32, #tpu.memory_space<vmem>>, vector<8x8x128xf32>
    %58 = vector.shape_cast %57 : vector<8x8x128xf32> to vector<64x128xf32>
    %59 = arith.truncf %58 : vector<64x128xf32> to vector<64x128xbf16>
    %c6 = arith.constant 6 : index
    %c0_54 = arith.constant 0 : index
    %c0_55 = arith.constant 0 : index
    %60 = vector.load %arg4[%c6, %c0_54, %c0_55] : memref<9x128x128xbf16, #tpu.memory_space<vmem>>, vector<1x128x128xbf16>
    %61 = vector.shape_cast %60 : vector<1x128x128xbf16> to vector<128x128xbf16>
    %cst_56 = arith.constant dense<0.000000e+00> : vector<64x128xf32>
    %62 = tpu.matmul %59, %61, %cst_56 {dimension_numbers = #tpu.dot_dimension_numbers<[1], [0], [0], [1], [0, 0, 1, 1], [], []>} : vector<64x128xbf16>, vector<128x128xbf16>, vector<64x128xf32> -> vector<64x128xf32>
    %63 = arith.addf %56, %62 : vector<64x128xf32>
    %c2_57 = arith.constant 2 : index
    %c1_58 = arith.constant 1 : index
    %c0_59 = arith.constant 0 : index
    %64 = vector.load %arg14[%c2_57, %c1_58, %c0_59] : memref<10x10x128xf32, #tpu.memory_space<vmem>>, vector<8x8x128xf32>
    %65 = vector.shape_cast %64 : vector<8x8x128xf32> to vector<64x128xf32>
    %66 = arith.truncf %65 : vector<64x128xf32> to vector<64x128xbf16>
    %c7 = arith.constant 7 : index
    %c0_60 = arith.constant 0 : index
    %c0_61 = arith.constant 0 : index
    %67 = vector.load %arg4[%c7, %c0_60, %c0_61] : memref<9x128x128xbf16, #tpu.memory_space<vmem>>, vector<1x128x128xbf16>
    %68 = vector.shape_cast %67 : vector<1x128x128xbf16> to vector<128x128xbf16>
    %cst_62 = arith.constant dense<0.000000e+00> : vector<64x128xf32>
    %69 = tpu.matmul %66, %68, %cst_62 {dimension_numbers = #tpu.dot_dimension_numbers<[1], [0], [0], [1], [0, 0, 1, 1], [], []>} : vector<64x128xbf16>, vector<128x128xbf16>, vector<64x128xf32> -> vector<64x128xf32>
    %70 = arith.addf %63, %69 : vector<64x128xf32>
    %c2_63 = arith.constant 2 : index
    %c2_64 = arith.constant 2 : index
    %c0_65 = arith.constant 0 : index
    %71 = vector.load %arg14[%c2_63, %c2_64, %c0_65] : memref<10x10x128xf32, #tpu.memory_space<vmem>>, vector<8x8x128xf32>
    %72 = vector.shape_cast %71 : vector<8x8x128xf32> to vector<64x128xf32>
    %73 = arith.truncf %72 : vector<64x128xf32> to vector<64x128xbf16>
    %c8 = arith.constant 8 : index
    %c0_66 = arith.constant 0 : index
    %c0_67 = arith.constant 0 : index
    %74 = vector.load %arg4[%c8, %c0_66, %c0_67] : memref<9x128x128xbf16, #tpu.memory_space<vmem>>, vector<1x128x128xbf16>
    %75 = vector.shape_cast %74 : vector<1x128x128xbf16> to vector<128x128xbf16>
    %cst_68 = arith.constant dense<0.000000e+00> : vector<64x128xf32>
    %76 = tpu.matmul %73, %75, %cst_68 {dimension_numbers = #tpu.dot_dimension_numbers<[1], [0], [0], [1], [0, 0, 1, 1], [], []>} : vector<64x128xbf16>, vector<128x128xbf16>, vector<64x128xf32> -> vector<64x128xf32>
    %77 = arith.addf %70, %76 : vector<64x128xf32>
    %c0_69 = arith.constant 0 : index
    %c0_70 = arith.constant 0 : index
    %78 = vector.load %arg5[%c0_69, %c0_70] : memref<1x128xf32, #tpu.memory_space<vmem>>, vector<1x128xf32>
    %79 = vector.broadcast %78 : vector<1x128xf32> to vector<64x128xf32>
    %80 = arith.addf %77, %79 : vector<64x128xf32>
    %cst_71 = arith.constant 0.000000e+00 : f32
    %81 = vector.broadcast %cst_71 : f32 to vector<64x128xf32>
    %82 = arith.maximumf %80, %81 : vector<64x128xf32>
    %83 = arith.truncf %82 : vector<64x128xf32> to vector<64x128xbf16>
    %c0_72 = arith.constant 0 : index
    %c0_73 = arith.constant 0 : index
    %84 = vector.load %arg6[%c0_72, %c0_73] : memref<128x128xbf16, #tpu.memory_space<vmem>>, vector<128x128xbf16>
    %cst_74 = arith.constant dense<0.000000e+00> : vector<64x128xf32>
    %85 = tpu.matmul %83, %84, %cst_74 {dimension_numbers = #tpu.dot_dimension_numbers<[1], [0], [0], [1], [0, 0, 1, 1], [], []>} : vector<64x128xbf16>, vector<128x128xbf16>, vector<64x128xf32> -> vector<64x128xf32>
    %c0_75 = arith.constant 0 : index
    %c0_76 = arith.constant 0 : index
    %86 = vector.load %arg7[%c0_75, %c0_76] : memref<1x128xf32, #tpu.memory_space<vmem>>, vector<1x128xf32>
    %87 = vector.broadcast %86 : vector<1x128xf32> to vector<64x128xf32>
    %88 = arith.addf %85, %87 : vector<64x128xf32>
    %c0_77 = arith.constant 0 : index
    %c0_78 = arith.constant 0 : index
    %c0_79 = arith.constant 0 : index
    %89 = vector.load %arg12[%c0_77, %c0_78, %c0_79] : memref<1x64x128xf32, #tpu.memory_space<vmem>>, vector<1x64x128xf32>
    %90 = vector.shape_cast %89 : vector<1x64x128xf32> to vector<64x128xf32>
    %91 = vector.shape_cast %88 : vector<64x128xf32> to vector<1x64x128xf32>
    tpu.vector_store %arg12[%c0_77, %c0_78, %c0_79], %91 {strides = array<i32>} : memref<1x64x128xf32, #tpu.memory_space<vmem>>, vector<1x64x128xf32>,
    %c0_80 = arith.constant 0 : index
    %c0_81 = arith.constant 0 : index
    %92 = vector.load %arg8[%c0_80, %c0_81] : memref<128x128xbf16, #tpu.memory_space<vmem>>, vector<128x128xbf16>
    %cst_82 = arith.constant dense<0.000000e+00> : vector<64x128xf32>
    %93 = tpu.matmul %2, %92, %cst_82 {dimension_numbers = #tpu.dot_dimension_numbers<[1], [0], [0], [1], [0, 0, 1, 1], [], []>} : vector<64x128xbf16>, vector<128x128xbf16>, vector<64x128xf32> -> vector<64x128xf32>
    %c0_83 = arith.constant 0 : index
    %c0_84 = arith.constant 0 : index
    %94 = vector.load %arg9[%c0_83, %c0_84] : memref<1x128xf32, #tpu.memory_space<vmem>>, vector<1x128xf32>
    %95 = vector.broadcast %94 : vector<1x128xf32> to vector<64x128xf32>
    %96 = arith.addf %93, %95 : vector<64x128xf32>
    %cst_85 = arith.constant 0.000000e+00 : f32
    %97 = vector.broadcast %cst_85 : f32 to vector<64x128xf32>
    %98 = arith.maximumf %96, %97 : vector<64x128xf32>
    %cst_86 = arith.constant dense<0.000000e+00> : vector<128xf32>
    %99 = vector.multi_reduction <add>, %98, %cst_86 [0] : vector<64x128xf32> to vector<128xf32>
    %100 = vector.shape_cast %99 : vector<128xf32> to vector<1x128xf32>
    %cst_87 = arith.constant 1.562500e-02 : f32
    %101 = vector.broadcast %cst_87 : f32 to vector<1x128xf32>
    %102 = arith.mulf %100, %101 : vector<1x128xf32>
    %103 = arith.truncf %102 : vector<1x128xf32> to vector<1x128xbf16>
    %c0_88 = arith.constant 0 : index
    %c0_89 = arith.constant 0 : index
    %104 = vector.load %arg10[%c0_88, %c0_89] : memref<128x128xbf16, #tpu.memory_space<vmem>>, vector<128x128xbf16>
    %cst_90 = arith.constant dense<0.000000e+00> : vector<1x128xf32>
    %105 = tpu.matmul %103, %104, %cst_90 {dimension_numbers = #tpu.dot_dimension_numbers<[1], [0], [0], [1], [0, 0, 1, 1], [], []>} : vector<1x128xbf16>, vector<128x128xbf16>, vector<1x128xf32> -> vector<1x128xf32>
    %c0_91 = arith.constant 0 : index
    %c0_92 = arith.constant 0 : index
    %106 = vector.load %arg11[%c0_91, %c0_92] : memref<1x128xf32, #tpu.memory_space<vmem>>, vector<1x128xf32>
    %107 = arith.addf %105, %106 : vector<1x128xf32>
    %c0_93 = arith.constant 0 : index
    %c0_94 = arith.constant 0 : index
    %c0_95 = arith.constant 0 : index
    %108 = vector.load %arg13[%c0_93, %c0_94, %c0_95] : memref<1x1x128xf32, #tpu.memory_space<vmem>>, vector<1x1x128xf32>
    %109 = vector.shape_cast %108 : vector<1x1x128xf32> to vector<1x128xf32>
    %110 = vector.shape_cast %107 : vector<1x128xf32> to vector<1x1x128xf32>
    tpu.vector_store %arg13[%c0_93, %c0_94, %c0_95], %110 {strides = array<i32>} : memref<1x1x128xf32, #tpu.memory_space<vmem>>, vector<1x1x128xf32>,
    return
  }
  func.func @transform_0(%arg0: i32) -> (i32, i32, i32, i32) {
    %c0_i32 = arith.constant 0 : i32
    %c0_i32_0 = arith.constant 0 : i32
    %c0_i32_1 = arith.constant 0 : i32
    %c0_i32_2 = arith.constant 0 : i32
    return %arg0, %c0_i32, %c0_i32_0, %c0_i32_1 : i32, i32, i32, i32
  }
  func.func @transform_1(%arg0: i32) -> (i32, i32) {
    %c0_i32 = arith.constant 0 : i32
    %c0_i32_0 = arith.constant 0 : i32
    %c0_i32_1 = arith.constant 0 : i32
    return %c0_i32, %c0_i32_0 : i32, i32
  }
  func.func @transform_2(%arg0: i32) -> (i32, i32) {
    %c0_i32 = arith.constant 0 : i32
    %c0_i32_0 = arith.constant 0 : i32
    %c0_i32_1 = arith.constant 0 : i32
    return %c0_i32, %c0_i32_0 : i32, i32
  }
  func.func @transform_3(%arg0: i32) -> (i32, i32, i32) {
    %c0_i32 = arith.constant 0 : i32
    %c0_i32_0 = arith.constant 0 : i32
    %c0_i32_1 = arith.constant 0 : i32
    %c0_i32_2 = arith.constant 0 : i32
    return %c0_i32, %c0_i32_0, %c0_i32_1 : i32, i32, i32
  }
  func.func @transform_4(%arg0: i32) -> (i32, i32) {
    %c0_i32 = arith.constant 0 : i32
    %c0_i32_0 = arith.constant 0 : i32
    %c0_i32_1 = arith.constant 0 : i32
    return %c0_i32, %c0_i32_0 : i32, i32
  }
  func.func @transform_5(%arg0: i32) -> (i32, i32) {
    %c0_i32 = arith.constant 0 : i32
    %c0_i32_0 = arith.constant 0 : i32
    %c0_i32_1 = arith.constant 0 : i32
    return %c0_i32, %c0_i32_0 : i32, i32
  }
  func.func @transform_6(%arg0: i32) -> (i32, i32) {
    %c0_i32 = arith.constant 0 : i32
    %c0_i32_0 = arith.constant 0 : i32
    %c0_i32_1 = arith.constant 0 : i32
    return %c0_i32, %c0_i32_0 : i32, i32
  }
  func.func @transform_7(%arg0: i32) -> (i32, i32) {
    %c0_i32 = arith.constant 0 : i32
    %c0_i32_0 = arith.constant 0 : i32
    %c0_i32_1 = arith.constant 0 : i32
    return %c0_i32, %c0_i32_0 : i32, i32
  }
  func.func @transform_8(%arg0: i32) -> (i32, i32) {
    %c0_i32 = arith.constant 0 : i32
    %c0_i32_0 = arith.constant 0 : i32
    %c0_i32_1 = arith.constant 0 : i32
    return %c0_i32, %c0_i32_0 : i32, i32
  }
  func.func @transform_9(%arg0: i32) -> (i32, i32) {
    %c0_i32 = arith.constant 0 : i32
    %c0_i32_0 = arith.constant 0 : i32
    %c0_i32_1 = arith.constant 0 : i32
    return %c0_i32, %c0_i32_0 : i32, i32
  }
  func.func @transform_10(%arg0: i32) -> (i32, i32) {
    %c0_i32 = arith.constant 0 : i32
    %c0_i32_0 = arith.constant 0 : i32
    %c0_i32_1 = arith.constant 0 : i32
    return %c0_i32, %c0_i32_0 : i32, i32
  }
  func.func @transform_11(%arg0: i32) -> (i32, i32, i32) {
    %c0_i32 = arith.constant 0 : i32
    %c0_i32_0 = arith.constant 0 : i32
    %c0_i32_1 = arith.constant 0 : i32
    return %arg0, %c0_i32, %c0_i32_0 : i32, i32, i32
  }
  func.func @transform_12(%arg0: i32) -> (i32, i32, i32) {
    %c0_i32 = arith.constant 0 : i32
    %c0_i32_0 = arith.constant 0 : i32
    %c0_i32_1 = arith.constant 0 : i32
    return %arg0, %c0_i32, %c0_i32_0 : i32, i32, i32
  }
}

</mosaic_0001>

<llo_original>
// kernel: tile.14
$region0: #{tile.14}
  #allocation0 [shape = 's32[1]{0}', space=sflag, size = 0x4, scoped, tag = 'scoped memory for tile.14']
  %s0 = inlined_call_operand.vmem [shape: f32[3], index: 0, kind: input, shape index: {}]
  %s1 = inlined_call_operand.vmem [shape: f32[9,3], index: 1, kind: output, shape index: {}]
  // Predicated region
  $region2: #{tile.14} parent=0 // pred_check
    _
  $region3: #{tile.14} parent=0 // pred_check_branch
    %3 = sbr.rel (0) target = $region5
  $region4: #{tile.14} parent=0 // pred_region
    _
  $region5: #{tile.14} parent=0 // pred_fallthru
    _
  %v4 = vld [vmem:[%s0] ss:$0 sm:$0xff]
  %5 = vst [vmem:[%s1] sm:$0xff] %v4
  %s6 = scalar_lea.vmem %s1, 8
  %7 = vst [vmem:[%s6] sm:$0xff] %v4

// kernel: mul.14
$region0: #{mul.14}
  %s0 = inlined_call_operand.vmem [shape: f32[9,3], index: 0, kind: input, shape index: {}]
  %s1 = inlined_call_operand.vmem [shape: f32[27], index: 1, kind: output, shape index: {}]
  $region1: #{mul.14} parent=0
    #allocation0 [shape = 'u8[4096]{0}', space=vmem, size = 0x1000, scoped, tag = 'scoped mem for output reshape']
    %v2 = vld [vmem:[%s0] sm:$0x1]
    %vm3 = vcmask 23552
    %4 = vst.msk [vmem:[#allocation0] sm:$0x1] %vm3, %v2
    %s5 = scalar_lea.vmem %s0, 8
    %v6 = vld [vmem:[%s5] sm:$0x1]
    %7 = vrot.lane.b32.xlu0 %v6, 24
    %v8 = vpop.permute.xlu0 %7
    %vm9 = vcmask 220352
    %10 = vst.msk [vmem:[#allocation0] sm:$0x1] %vm9, %v8
    %s11 = scalar_lea.vmem %s0, 7
    %v12 = vld [vmem:[%s11] sm:$0x1]
    %13 = vrot.lane.b32.xlu0 %v12, 21
    %v14 = vpop.permute.xlu0 %13
    %vm15 = vcmask 195752
    %16 = vst.msk [vmem:[#allocation0] sm:$0x1] %vm15, %v14
    %s17 = scalar_lea.vmem %s0, 6
    %v18 = vld [vmem:[%s17] sm:$0x1]
    %19 = vrot.lane.b32.xlu0 %v18, 18
    %v20 = vpop.permute.xlu0 %19
    %vm21 = vcmask 171152
    %22 = vst.msk [vmem:[#allocation0] sm:$0x1] %vm21, %v20
    %s23 = scalar_lea.vmem %s0, 5
    %v24 = vld [vmem:[%s23] sm:$0x1]
    %25 = vrot.lane.b32.xlu0 %v24, 15
    %v26 = vpop.permute.xlu0 %25
    %vm27 = vcmask 146552
    %28 = vst.msk [vmem:[#allocation0] sm:$0x1] %vm27, %v26
    %s29 = scalar_lea.vmem %s0, 4
    %v30 = vld [vmem:[%s29] sm:$0x1]
    %31 = vrot.lane.b32.xlu0 %v30, 12
    %v32 = vpop.permute.xlu0 %31
    %vm33 = vcmask 121952
    %34 = vst.msk [vmem:[#allocation0] sm:$0x1] %vm33, %v32
    %s35 = scalar_lea.vmem %s0, 3
    %v36 = vld [vmem:[%s35] sm:$0x1]
    %37 = vrot.lane.b32.xlu0 %v36, 9
    %v38 = vpop.permute.xlu0 %37
    %vm39 = vcmask 97352
    %40 = vst.msk [vmem:[#allocation0] sm:$0x1] %vm39, %v38
    %s41 = scalar_lea.vmem %s0, 2
    %v42 = vld [vmem:[%s41] sm:$0x1]
    %43 = vrot.lane.b32.xlu0 %v42, 6
    %v44 = vpop.permute.xlu0 %43
    %vm45 = vcmask 72752
    %46 = vst.msk [vmem:[#allocation0] sm:$0x1] %vm45, %v44
    %s47 = scalar_lea.vmem %s0, 1
    %v48 = vld [vmem:[%s47] sm:$0x1]
    %49 = vrot.lane.b32.xlu0 %v48, 3
    %v50 = vpop.permute.xlu0 %49
    %vm51 = vcmask 48152
    %52 = vst.msk [vmem:[#allocation0] sm:$0x1] %vm51, %v50
    %s54 = sshllo.u32 0, 1
    %v56 = vld [vmem:[#allocation0] sm:%s54]
    %s57 = sshllo.u32 0, 1
    %58 = vst [vmem:[%s1] sm:%s57] %v56

// kernel: mul.3
$region0: #{mul.3}
  #allocation0 [shape = 's32[1]{0}', space=sflag, size = 0x4, scoped, tag = 'scoped memory for mul.3']
  %s0 = inlined_call_operand.vmem [shape: f32[27], index: 0, kind: input, shape index: {}]
  %s1 = inlined_call_operand.vmem [shape: f32[27], index: 1, kind: input, shape index: {}]
  %s2 = inlined_call_operand.vmem [shape: f32[27], index: 2, kind: output, shape index: {}]
  %v3 = vld [vmem:[%s0] sm:$0x1]
  %v4 = vld [vmem:[%s1] sm:$0x1]
  %5 = xla_tuple %v3, %v4
  %6 = xla_tuple %5
  %v7 = vmul.f32 %v3, %v4
  %8 = xla_tuple %v7
  %9 = vst [vmem:[%s2] sm:$0x1] %v7

// kernel: generalized_rcnn_forward.2
$region0: #{generalized_rcnn_forward.2}
  #allocation0 [shape = 'u32[]', space=smem, size = 0x4, offset = 0x4, fixed_abs, tag = 'smem constant byte address 0x4 - core index']
  #allocation1 [shape = 'u32[144,128]{1,0:T(1,128)}', space=vmem, size = 0x12000, scoped, tag = 'internal scratch']
  %s0 = inlined_call_operand.vmem [shape: bf16[128,27], index: 0, kind: input, shape index: {}]
  %s1 = inlined_call_operand.vmem [shape: bf16[27,128], index: 1, kind: input, shape index: {}]
  %s2 = inlined_call_operand.vmem [shape: f32[1,128], index: 2, kind: input, shape index: {}]
  %s3 = inlined_call_operand.vmem [shape: bf16[128,128], index: 3, kind: output, shape index: {}]
  %s4 = sld [smem:[#allocation0]]
  $region22: #{generalized_rcnn_forward.2} parent=0
    _
  %s6 = ssub.s32 1, %s4
  %s7 = scalar_select 0, %s6, %s4
  // Predicated region
  $region2: #{generalized_rcnn_forward.2} parent=0 // pred_check
    _
  $region3: #{generalized_rcnn_forward.2} parent=0 // pred_check_branch
    %9 = sbr.rel (0) target = $region5
  $region4: #{generalized_rcnn_forward.2} parent=0 // pred_region
    _
  $region5: #{generalized_rcnn_forward.2} parent=0 // pred_fallthru
    _
  // Predicated region
  $region6: #{generalized_rcnn_forward.2} parent=0 // pred_check
    _
  $region7: #{generalized_rcnn_forward.2} parent=0 // pred_check_branch
    %11 = sbr.rel (0) target = $region9
  $region8: #{generalized_rcnn_forward.2} parent=0 // pred_region
    _
  $region9: #{generalized_rcnn_forward.2} parent=0 // pred_fallthru
    _
  // Predicated region
  $region10: #{generalized_rcnn_forward.2} parent=0 // pred_check
    _
  $region11: #{generalized_rcnn_forward.2} parent=0 // pred_check_branch
    %13 = sbr.rel (0) target = $region13
  $region12: #{generalized_rcnn_forward.2} parent=0 // pred_region
    _
  $region13: #{generalized_rcnn_forward.2} parent=0 // pred_fallthru
    _
  %v15 = vld [vmem:[%s0] sm:$0xf]
  %v16 = vld [vmem:[%s0 + $0x4] sm:$0xf]
  %v17 = vld [vmem:[%s0 + $0x8] sm:$0xf]
  %v18 = vld [vmem:[%s0 + $0xc] sm:$0xf]
  %v19 = vld [vmem:[%s0 + $0x10] sm:$0xf]
  %v20 = vld [vmem:[%s0 + $0x14] sm:$0xf]
  %v21 = vld [vmem:[%s0 + $0x18] sm:$0xf]
  %v22 = vld [vmem:[%s0 + $0x1c] sm:$0xf]
  %v23 = vld [vmem:[%s0 + $0x20] sm:$0xf]
  %v24 = vld [vmem:[%s0 + $0x24] sm:$0xf]
  %v25 = vld [vmem:[%s0 + $0x28] sm:$0xf]
  %v26 = vld [vmem:[%s0 + $0x2c] sm:$0xf]
  %v27 = vld [vmem:[%s0 + $0x30] sm:$0xf]
  %v28 = vld [vmem:[%s0 + $0x34] sm:$0xf]
  %v29 = vld [vmem:[%s0 + $0x38] sm:$0xf]
  %v30 = vld [vmem:[%s0 + $0x3c] sm:$0xf]
  %v31 = vld [vmem:[%s1] sm:$0xf]
  %v32 = vld [vmem:[%s1 + $0x4] sm:$0xf]
  %v33 = vld [vmem:[%s1 + $0x8] sm:$0xf]
  %v34 = vld [vmem:[%s1 + $0xc] sm:$0x3]
  %v35 = vld [vmem:[%s2] sm:$0x1]
  %v37 = vlaneseq
  %v38 = vshrl.u32 %v37, 7
  %v39 = vsub.s32 0, %v38
  %v40 = vrot.slane %v35, %v39
  %v58 = vunpack.c.l.b16 %v15
  %v59 = vunpack.c.l.b16 %v16
  %v60 = vunpack.c.l.b16 %v17
  %v61 = vunpack.c.l.b16 %v18
  %v62 = vunpack.c.l.b16 %v19
  %v63 = vunpack.c.l.b16 %v20
  %v64 = vunpack.c.l.b16 %v21
  %v65 = vunpack.c.l.b16 %v22
  %v66 = vunpack.c.l.b16 %v23
  %v67 = vunpack.c.l.b16 %v24
  %v68 = vunpack.c.l.b16 %v25
  %v69 = vunpack.c.l.b16 %v26
  %v70 = vunpack.c.l.b16 %v27
  %v71 = vunpack.c.l.b16 %v28
  %v72 = vunpack.c.l.b16 %v29
  %v73 = vunpack.c.l.b16 %v30
  %v74 = vpack.c.b16 %v59, %v58
  %v75 = vpack.c.b16 %v61, %v60
  %v76 = vpack.c.b16 %v63, %v62
  %v77 = vpack.c.b16 %v65, %v64
  %v78 = vpack.c.b16 %v67, %v66
  %v79 = vpack.c.b16 %v69, %v68
  %v80 = vpack.c.b16 %v71, %v70
  %v81 = vpack.c.b16 %v73, %v72
  %v86 = vunpack.c.l.b16 %v31
  %v87 = vunpack.c.l.b16 %v32
  %v88 = vunpack.c.l.b16 %v33
  %v89 = vunpack.c.l.b16 %v34
  %v90 = vpack.c.b16 %v87, %v86
  %v91 = vpack.c.b16 %v89, %v88
  %vm93 = vcmask 220160
  %v95 = vsel %vm93, %v74, 0
  %v98 = vsel %vm93, %v75, 0
  %v101 = vsel %vm93, %v76, 0
  %v104 = vsel %vm93, %v77, 0
  %v107 = vsel %vm93, %v78, 0
  %v110 = vsel %vm93, %v79, 0
  %v113 = vsel %vm93, %v80, 0
  %v116 = vsel %vm93, %v81, 0
  %vm118 = vcmask 1044480
  %vm119 = vcmask 1045504
  %v120 = vsel %vm118, 4294967295, 65535
  %v121 = vsel %vm119, %v120, 0
  %v123 = vand.u32 %v91, %v121
  %125 = vmatprep.subr.bf16.mxu0 0
  %126 = vmatpush1.bf16.msra.mxu0 %v90
  %127 = vmatprep.subr.bf16.mxu0 0
  %128 = vmatpush1.bf16.msra.mxu0 %v123
  %129 = vmatprep.subr.bf16.mxu0 0
  %130 = vmatpush1.bf16.msra.mxu0 0
  %131 = vmatprep.subr.bf16.mxu0 0
  %132 = vmatpush1.bf16.msra.mxu0 0
  %133 = vmatprep.subr.bf16.mxu0 0
  %134 = vmatpush1.bf16.msra.mxu0 0
  %135 = vmatprep.subr.bf16.mxu0 0
  %136 = vmatpush1.bf16.msra.mxu0 0
  %137 = vmatprep.subr.bf16.mxu0 0
  %138 = vmatpush1.bf16.msra.mxu0 0
  %139 = vmatprep.subr.bf16.mxu0 0
  %140 = vmatpush1.bf16.msra.mxu0 0
  %141 = vmatprep.subr.bf16.mxu0 0
  %142 = vmatpush1.bf16.msra.mxu0 0
  %143 = vmatprep.subr.bf16.mxu0 0
  %144 = vmatpush1.bf16.msra.mxu0 0
  %145 = vmatprep.subr.bf16.mxu0 0
  %146 = vmatpush1.bf16.msra.mxu0 0
  %147 = vmatprep.subr.bf16.mxu0 0
  %148 = vmatpush1.bf16.msra.mxu0 0
  %149 = vmatprep.subr.bf16.mxu0 0
  %150 = vmatpush1.bf16.msra.mxu0 0
  %151 = vmatprep.subr.bf16.mxu0 0
  %152 = vmatpush1.bf16.msra.mxu0 0
  %153 = vmatprep.subr.bf16.mxu0 0
  %154 = vmatpush1.bf16.msra.mxu0 0
  %155 = vmatprep.subr.bf16.mxu0 0
  %156 = vmatpush1.bf16.msra.mxu0 0
  %157 = vmatprep.mubr.bf16.mxu0 0
  %158 = vmatmul.mubr.bf16.gmra.mrb[0].mxu0 %v95
  %v159 = vpop.f32.mrb[0].mxu0
  %v160 = vadd.f32 %v40, %v159
  %v161 = vpop.f32.mrb[0].mxu0
  %v162 = vpop.f32.mrb[0].mxu0
  %v163 = vadd.f32 %v40, %v162
  %v164 = vpop.f32.mrb[0].mxu0
  %165 = vmatprep.mubr.bf16.mxu0 0
  %166 = vmatmul.mubr.bf16.gmra.mrb[0].mxu0 %v98
  %v167 = vpop.f32.mrb[0].mxu0
  %v168 = vadd.f32 %v40, %v167
  %v169 = vpop.f32.mrb[0].mxu0
  %v170 = vpop.f32.mrb[0].mxu0
  %v171 = vadd.f32 %v40, %v170
  %v172 = vpop.f32.mrb[0].mxu0
  %173 = vmatprep.mubr.bf16.mxu0 0
  %174 = vmatmul.mubr.bf16.gmra.mrb[0].mxu0 %v101
  %v175 = vpop.f32.mrb[0].mxu0
  %v176 = vadd.f32 %v40, %v175
  %v177 = vpop.f32.mrb[0].mxu0
  %v178 = vpop.f32.mrb[0].mxu0
  %v179 = vadd.f32 %v40, %v178
  %v180 = vpop.f32.mrb[0].mxu0
  %181 = vmatprep.mubr.bf16.mxu0 0
  %182 = vmatmul.mubr.bf16.gmra.mrb[0].mxu0 %v104
  %v183 = vpop.f32.mrb[0].mxu0
  %v184 = vadd.f32 %v40, %v183
  %v185 = vpop.f32.mrb[0].mxu0
  %v186 = vpop.f32.mrb[0].mxu0
  %v187 = vadd.f32 %v40, %v186
  %v188 = vpop.f32.mrb[0].mxu0
  %189 = vmatprep.mubr.bf16.mxu0 0
  %190 = vmatmul.mubr.bf16.gmra.mrb[0].mxu0 %v107
  %v191 = vpop.f32.mrb[0].mxu0
  %v192 = vadd.f32 %v40, %v191
  %v193 = vpop.f32.mrb[0].mxu0
  %v194 = vpop.f32.mrb[0].mxu0
  %v195 = vadd.f32 %v40, %v194
  %v196 = vpop.f32.mrb[0].mxu0
  %197 = vmatprep.mubr.bf16.mxu0 0
  %198 = vmatmul.mubr.bf16.gmra.mrb[0].mxu0 %v110
  %v199 = vpop.f32.mrb[0].mxu0
  %v200 = vadd.f32 %v40, %v199
  %v201 = vpop.f32.mrb[0].mxu0
  %v202 = vpop.f32.mrb[0].mxu0
  %v203 = vadd.f32 %v40, %v202
  %v204 = vpop.f32.mrb[0].mxu0
  %205 = vmatprep.mubr.bf16.mxu0 0
  %206 = vmatmul.mubr.bf16.gmra.mrb[0].mxu0 %v113
  %v207 = vpop.f32.mrb[0].mxu0
  %v208 = vadd.f32 %v40, %v207
  %v209 = vpop.f32.mrb[0].mxu0
  %v210 = vpop.f32.mrb[0].mxu0
  %v211 = vadd.f32 %v40, %v210
  %v212 = vpop.f32.mrb[0].mxu0
  %213 = vmatprep.mubr.bf16.mxu0 0
  %214 = vmatmul.mubr.bf16.gmra.mrb[0].mxu0 %v116
  %v215 = vpop.f32.mrb[0].mxu0
  %v216 = vadd.f32 %v40, %v215
  %v217 = vpop.f32.mrb[0].mxu0
  %v218 = vpop.f32.mrb[0].mxu0
  %v219 = vadd.f32 %v40, %v218
  %v220 = vpop.f32.mrb[0].mxu0
  %221 = vdwg.mxu0
  %v222 = vmax.f32 %v160, 0.0
  %v223 = vmax.f32 %v163, 0.0
  %v224 = vmax.f32 %v168, 0.0
  %v225 = vmax.f32 %v171, 0.0
  %v226 = vmax.f32 %v176, 0.0
  %v227 = vmax.f32 %v179, 0.0
  %v228 = vmax.f32 %v184, 0.0
  %v229 = vmax.f32 %v187, 0.0
  %v230 = vmax.f32 %v192, 0.0
  %v231 = vmax.f32 %v195, 0.0
  %v232 = vmax.f32 %v200, 0.0
  %v233 = vmax.f32 %v203, 0.0
  %v234 = vmax.f32 %v208, 0.0
  %v235 = vmax.f32 %v211, 0.0
  %v236 = vmax.f32 %v216, 0.0
  %v237 = vmax.f32 %v219, 0.0
  %v238 = vpack.c.bf16 %v223, %v222
  %v239 = vpack.c.bf16 %v225, %v224
  %v240 = vpack.c.bf16 %v227, %v226
  %v241 = vpack.c.bf16 %v229, %v228
  %v242 = vpack.c.bf16 %v231, %v230
  %v243 = vpack.c.bf16 %v233, %v232
  %v244 = vpack.c.bf16 %v235, %v234
  %v245 = vpack.c.bf16 %v237, %v236
  %v254 = vunpack.c.l.b16 %v238
  %v255 = vunpack.c.h.b16 %v238
  %v256 = vunpack.c.l.b16 %v239
  %v257 = vunpack.c.h.b16 %v239
  %v258 = vunpack.c.l.b16 %v240
  %v259 = vunpack.c.h.b16 %v240
  %v260 = vunpack.c.l.b16 %v241
  %v261 = vunpack.c.h.b16 %v241
  %v262 = vunpack.c.l.b16 %v242
  %v263 = vunpack.c.h.b16 %v242
  %v264 = vunpack.c.l.b16 %v243
  %v265 = vunpack.c.h.b16 %v243
  %v266 = vunpack.c.l.b16 %v244
  %v267 = vunpack.c.h.b16 %v244
  %v268 = vunpack.c.l.b16 %v245
  %v269 = vunpack.c.h.b16 %v245
  %v270 = vpack.c.b16 %v254, %v254
  %v271 = vpack.c.b16 %v255, %v255
  %v272 = vpack.c.b16 %v256, %v256
  %v273 = vpack.c.b16 %v257, %v257
  %v274 = vpack.c.b16 %v258, %v258
  %v275 = vpack.c.b16 %v259, %v259
  %v276 = vpack.c.b16 %v260, %v260
  %v277 = vpack.c.b16 %v261, %v261
  %v278 = vpack.c.b16 %v262, %v262
  %v279 = vpack.c.b16 %v263, %v263
  %v280 = vpack.c.b16 %v264, %v264
  %v281 = vpack.c.b16 %v265, %v265
  %v282 = vpack.c.b16 %v266, %v266
  %v283 = vpack.c.b16 %v267, %v267
  %v284 = vpack.c.b16 %v268, %v268
  %v285 = vpack.c.b16 %v269, %v269
  %302 = vst [vmem:[%s3] sm:$0xf] %v270
  %303 = vst [vmem:[%s3 + $0x4] sm:$0xf] %v271
  %304 = vst [vmem:[%s3 + $0x8] sm:$0xf] %v272
  %305 = vst [vmem:[%s3 + $0xc] sm:$0xf] %v273
  %306 = vst [vmem:[%s3 + $0x10] sm:$0xf] %v274
  %307 = vst [vmem:[%s3 + $0x14] sm:$0xf] %v275
  %308 = vst [vmem:[%s3 + $0x18] sm:$0xf] %v276
  %309 = vst [vmem:[%s3 + $0x1c] sm:$0xf] %v277
  %310 = vst [vmem:[%s3 + $0x20] sm:$0xf] %v278
  %311 = vst [vmem:[%s3 + $0x24] sm:$0xf] %v279
  %312 = vst [vmem:[%s3 + $0x28] sm:$0xf] %v280
  %313 = vst [vmem:[%s3 + $0x2c] sm:$0xf] %v281
  %314 = vst [vmem:[%s3 + $0x30] sm:$0xf] %v282
  %315 = vst [vmem:[%s3 + $0x34] sm:$0xf] %v283
  %316 = vst [vmem:[%s3 + $0x38] sm:$0xf] %v284
  %317 = vst [vmem:[%s3 + $0x3c] sm:$0xf] %v285
  // Predicated region
  $region14: #{generalized_rcnn_forward.2} parent=0 // pred_check
    _
  $region15: #{generalized_rcnn_forward.2} parent=0 // pred_check_branch
    %319 = sbr.rel (0) target = $region17
  $region16: #{generalized_rcnn_forward.2} parent=0 // pred_region
    _
  $region17: #{generalized_rcnn_forward.2} parent=0 // pred_fallthru
    _
  // Predicated region
  $region18: #{generalized_rcnn_forward.2} parent=0 // pred_check
    _
  $region19: #{generalized_rcnn_forward.2} parent=0 // pred_check_branch
    %321 = sbr.rel (0) target = $region21
  $region20: #{generalized_rcnn_forward.2} parent=0 // pred_region
    _
  $region21: #{generalized_rcnn_forward.2} parent=0 // pred_fallthru
    _

// kernel: generalized_rcnn_forward.3
$region0: #{generalized_rcnn_forward.3}
  #allocation0 [shape = 'u32[]', space=smem, size = 0x4, offset = 0x4, fixed_abs, tag = 'smem constant byte address 0x4 - core index']
  #allocation1 [shape = 'u32[144,128]{1,0:T(1,128)}', space=vmem, size = 0x12000, scoped, tag = 'internal scratch']
  #allocation2 [shape = 'f32[10,10,128]{2,1,0:T(8,128)}', space=vmem, size = 0x14000, scoped, tag = 'scratch operand']
  %s0 = inlined_call_operand.vmem [shape: bf16[2,8,8,128], index: 0, kind: input, shape index: {}]
  %s1 = inlined_call_operand.vmem [shape: f32[1,128], index: 1, kind: input, shape index: {}]
  %s2 = inlined_call_operand.vmem [shape: f32[1,128], index: 2, kind: input, shape index: {}]
  %s3 = inlined_call_operand.vmem [shape: bf16[9,128,128], index: 3, kind: input, shape index: {}]
  %s4 = inlined_call_operand.vmem [shape: f32[1,128], index: 4, kind: input, shape index: {}]
  %s5 = inlined_call_operand.vmem [shape: bf16[128,128], index: 5, kind: input, shape index: {}]
  %s6 = inlined_call_operand.vmem [shape: f32[1,128], index: 6, kind: input, shape index: {}]
  %s7 = inlined_call_operand.vmem [shape: bf16[128,128], index: 7, kind: input, shape index: {}]
  %s8 = inlined_call_operand.vmem [shape: f32[1,128], index: 8, kind: input, shape index: {}]
  %s9 = inlined_call_operand.vmem [shape: bf16[128,128], index: 9, kind: input, shape index: {}]
  %s10 = inlined_call_operand.vmem [shape: f32[1,128], index: 10, kind: input, shape index: {}]
  %s11 = inlined_call_operand.vmem [shape: f32[2,64,128], index: 11, kind: output, shape index: {0}]
  %s12 = inlined_call_operand.vmem [shape: f32[2,1,128], index: 12, kind: output, shape index: {1}]
  %13 = xla_tuple %s11, %s12
  %s14 = sld [smem:[#allocation0]]
  $region85: #{generalized_rcnn_forward.3} parent=0
    _
  %s16 = ssub.s32 1, %s14
  %s17 = scalar_select 0, %s16, %s14
  loop: start=0, step=1, limit=4
  $region2: #{generalized_rcnn_forward.3} parent=0 // loop_pre_header
    _
  $region3: #{generalized_rcnn_forward.3} parent=0 // loop_header
    %s19 = sphi 0, %s23
    %p20 = scmp.ge.s32.totalorder %s19, 4
    %s29 = sphi 0, %s31
    %s32 = sphi 0, %s29
    %s33 = sphi 0, %s32
    %s49 = sphi 0, %s33
    %s53 = sphi 0, %s53
    %s55 = sphi 0, %s53
    %s56 = sphi 0, %s55
    %s70 = sphi 0, %s56
    %s74 = sphi 0, %s74
    %s76 = sphi 0, %s74
    %s77 = sphi 0, %s76
    %s91 = sphi 0, %s77
    %s95 = sphi 0, %s95
    %s97 = sphi 0, %s95
    %s98 = sphi 0, %s97
    %s112 = sphi 0, %s98
    %s116 = sphi 0, %s116
    %s118 = sphi 0, %s116
    %s119 = sphi 0, %s118
    %s133 = sphi 0, %s119
    %s137 = sphi 0, %s137
    %s139 = sphi 0, %s137
    %s140 = sphi 0, %s139
    %s154 = sphi 0, %s140
    %s158 = sphi 0, %s158
    %s160 = sphi 0, %s158
    %s161 = sphi 0, %s160
    %s175 = sphi 0, %s161
    %s179 = sphi 0, %s179
    %s181 = sphi 0, %s179
    %s182 = sphi 0, %s181
    %s196 = sphi 0, %s182
    %s200 = sphi 0, %s200
    %s202 = sphi 0, %s200
    %s203 = sphi 0, %s202
    %s217 = sphi 0, %s203
    %s221 = sphi 0, %s221
    %s223 = sphi 0, %s221
    %s224 = sphi 0, %s223
    %s238 = sphi 0, %s224
    %s242 = sphi 0, %s242
    %s244 = sphi 0, %s242
    %s245 = sphi 0, %s244
    %s259 = sphi 0, %s245
    %s265 = sphi 0, %s267
    %s268 = sphi 0, %s265
    %s269 = sphi 0, %s268
    %s285 = sphi 0, %s269
    %s291 = sphi 0, %s293
    %s294 = sphi 0, %s291
    %s295 = sphi 0, %s294
    %s311 = sphi 0, %s295
  $region4: #{generalized_rcnn_forward.3} parent=0 // loop_header_branch
    %22 = sbr.rel (%p20) target = $region8
  $region5: #{generalized_rcnn_forward.3} parent=0 // loop_body
    %s24 = ssub.s32 %s19, 1
    %s25 = ssub.s32 %s19, 2
    %s26 = sadd.s32 %s19, 1
    %s27 = ssub.s32 %s19, %s26
    %p28 = scmp.eq.s32.totalorder %s27, 0
    %s30 = sadd.s32 %s29, 1
    %s31 = scalar_select %p28, %s29, %s30
    %p34 = pneg %p28
    %p35 = scmp.eq.s32.totalorder %s19, 1
    %p36 = por %p34, %p35
    %p37 = scmp.ne.s32.totalorder %s29, %s32
    %p38 = scmp.eq.s32.totalorder %s19, 0
    %p39 = por %p37, %p38
    %p40 = scmp.ne.s32.totalorder %s29, %s32
    %p41 = scmp.eq.s32.totalorder %s24, 1
    %p42 = por %p40, %p41
    %p43 = scmp.ne.s32.totalorder %s32, %s33
    %p44 = scmp.eq.s32.totalorder %s24, 0
    %p45 = por %p43, %p44
    %p46 = scmp.ne.s32.totalorder %s32, %s33
    %p47 = scmp.eq.s32.totalorder %s25, 1
    %p48 = por %p46, %p47
    %p50 = scmp.ne.s32.totalorder %s33, %s49
    %p51 = scmp.eq.s32.totalorder %s25, 0
    %p52 = por %p50, %p51
    %s54 = sadd.s32 %s53, 1
    %p57 = scmp.eq.s32.totalorder %s19, 1
    %p58 = scmp.ne.s32.totalorder %s53, %s55
    %p59 = scmp.eq.s32.totalorder %s19, 0
    %p60 = por %p58, %p59
    %p61 = scmp.ne.s32.totalorder %s53, %s55
    %p62 = scmp.eq.s32.totalorder %s24, 1
    %p63 = por %p61, %p62
    %p64 = scmp.ne.s32.totalorder %s55, %s56
    %p65 = scmp.eq.s32.totalorder %s24, 0
    %p66 = por %p64, %p65
    %p67 = scmp.ne.s32.totalorder %s55, %s56
    %p68 = scmp.eq.s32.totalorder %s25, 1
    %p69 = por %p67, %p68
    %p71 = scmp.ne.s32.totalorder %s56, %s70
    %p72 = scmp.eq.s32.totalorder %s25, 0
    %p73 = por %p71, %p72
    %s75 = sadd.s32 %s74, 1
    %p78 = scmp.eq.s32.totalorder %s19, 1
    %p79 = scmp.ne.s32.totalorder %s74, %s76
    %p80 = scmp.eq.s32.totalorder %s19, 0
    %p81 = por %p79, %p80
    %p82 = scmp.ne.s32.totalorder %s74, %s76
    %p83 = scmp.eq.s32.totalorder %s24, 1
    %p84 = por %p82, %p83
    %p85 = scmp.ne.s32.totalorder %s76, %s77
    %p86 = scmp.eq.s32.totalorder %s24, 0
    %p87 = por %p85, %p86
    %p88 = scmp.ne.s32.totalorder %s76, %s77
    %p89 = scmp.eq.s32.totalorder %s25, 1
    %p90 = por %p88, %p89
    %p92 = scmp.ne.s32.totalorder %s77, %s91
    %p93 = scmp.eq.s32.totalorder %s25, 0
    %p94 = por %p92, %p93
    %s96 = sadd.s32 %s95, 1
    %p99 = scmp.eq.s32.totalorder %s19, 1
    %p100 = scmp.ne.s32.totalorder %s95, %s97
    %p101 = scmp.eq.s32.totalorder %s19, 0
    %p102 = por %p100, %p101
    %p103 = scmp.ne.s32.totalorder %s95, %s97
    %p104 = scmp.eq.s32.totalorder %s24, 1
    %p105 = por %p103, %p104
    %p106 = scmp.ne.s32.totalorder %s97, %s98
    %p107 = scmp.eq.s32.totalorder %s24, 0
    %p108 = por %p106, %p107
    %p109 = scmp.ne.s32.totalorder %s97, %s98
    %p110 = scmp.eq.s32.totalorder %s25, 1
    %p111 = por %p109, %p110
    %p113 = scmp.ne.s32.totalorder %s98, %s112
    %p114 = scmp.eq.s32.totalorder %s25, 0
    %p115 = por %p113, %p114
    %s117 = sadd.s32 %s116, 1
    %p120 = scmp.eq.s32.totalorder %s19, 1
    %p121 = scmp.ne.s32.totalorder %s116, %s118
    %p122 = scmp.eq.s32.totalorder %s19, 0
    %p123 = por %p121, %p122
    %p124 = scmp.ne.s32.totalorder %s116, %s118
    %p125 = scmp.eq.s32.totalorder %s24, 1
    %p126 = por %p124, %p125
    %p127 = scmp.ne.s32.totalorder %s118, %s119
    %p128 = scmp.eq.s32.totalorder %s24, 0
    %p129 = por %p127, %p128
    %p130 = scmp.ne.s32.totalorder %s118, %s119
    %p131 = scmp.eq.s32.totalorder %s25, 1
    %p132 = por %p130, %p131
    %p134 = scmp.ne.s32.totalorder %s119, %s133
    %p135 = scmp.eq.s32.totalorder %s25, 0
    %p136 = por %p134, %p135
    %s138 = sadd.s32 %s137, 1
    %p141 = scmp.eq.s32.totalorder %s19, 1
    %p142 = scmp.ne.s32.totalorder %s137, %s139
    %p143 = scmp.eq.s32.totalorder %s19, 0
    %p144 = por %p142, %p143
    %p145 = scmp.ne.s32.totalorder %s137, %s139
    %p146 = scmp.eq.s32.totalorder %s24, 1
    %p147 = por %p145, %p146
    %p148 = scmp.ne.s32.totalorder %s139, %s140
    %p149 = scmp.eq.s32.totalorder %s24, 0
    %p150 = por %p148, %p149
    %p151 = scmp.ne.s32.totalorder %s139, %s140
    %p152 = scmp.eq.s32.totalorder %s25, 1
    %p153 = por %p151, %p152
    %p155 = scmp.ne.s32.totalorder %s140, %s154
    %p156 = scmp.eq.s32.totalorder %s25, 0
    %p157 = por %p155, %p156
    %s159 = sadd.s32 %s158, 1
    %p162 = scmp.eq.s32.totalorder %s19, 1
    %p163 = scmp.ne.s32.totalorder %s158, %s160
    %p164 = scmp.eq.s32.totalorder %s19, 0
    %p165 = por %p163, %p164
    %p166 = scmp.ne.s32.totalorder %s158, %s160
    %p167 = scmp.eq.s32.totalorder %s24, 1
    %p168 = por %p166, %p167
    %p169 = scmp.ne.s32.totalorder %s160, %s161
    %p170 = scmp.eq.s32.totalorder %s24, 0
    %p171 = por %p169, %p170
    %p172 = scmp.ne.s32.totalorder %s160, %s161
    %p173 = scmp.eq.s32.totalorder %s25, 1
    %p174 = por %p172, %p173
    %p176 = scmp.ne.s32.totalorder %s161, %s175
    %p177 = scmp.eq.s32.totalorder %s25, 0
    %p178 = por %p176, %p177
    %s180 = sadd.s32 %s179, 1
    %p183 = scmp.eq.s32.totalorder %s19, 1
    %p184 = scmp.ne.s32.totalorder %s179, %s181
    %p185 = scmp.eq.s32.totalorder %s19, 0
    %p186 = por %p184, %p185
    %p187 = scmp.ne.s32.totalorder %s179, %s181
    %p188 = scmp.eq.s32.totalorder %s24, 1
    %p189 = por %p187, %p188
    %p190 = scmp.ne.s32.totalorder %s181, %s182
    %p191 = scmp.eq.s32.totalorder %s24, 0
    %p192 = por %p190, %p191
    %p193 = scmp.ne.s32.totalorder %s181, %s182
    %p194 = scmp.eq.s32.totalorder %s25, 1
    %p195 = por %p193, %p194
    %p197 = scmp.ne.s32.totalorder %s182, %s196
    %p198 = scmp.eq.s32.totalorder %s25, 0
    %p199 = por %p197, %p198
    %s201 = sadd.s32 %s200, 1
    %p204 = scmp.eq.s32.totalorder %s19, 1
    %p205 = scmp.ne.s32.totalorder %s200, %s202
    %p206 = scmp.eq.s32.totalorder %s19, 0
    %p207 = por %p205, %p206
    %p208 = scmp.ne.s32.totalorder %s200, %s202
    %p209 = scmp.eq.s32.totalorder %s24, 1
    %p210 = por %p208, %p209
    %p211 = scmp.ne.s32.totalorder %s202, %s203
    %p212 = scmp.eq.s32.totalorder %s24, 0
    %p213 = por %p211, %p212
    %p214 = scmp.ne.s32.totalorder %s202, %s203
    %p215 = scmp.eq.s32.totalorder %s25, 1
    %p216 = por %p214, %p215
    %p218 = scmp.ne.s32.totalorder %s203, %s217
    %p219 = scmp.eq.s32.totalorder %s25, 0
    %p220 = por %p218, %p219
    %s222 = sadd.s32 %s221, 1
    %p225 = scmp.eq.s32.totalorder %s19, 1
    %p226 = scmp.ne.s32.totalorder %s221, %s223
    %p227 = scmp.eq.s32.totalorder %s19, 0
    %p228 = por %p226, %p227
    %p229 = scmp.ne.s32.totalorder %s221, %s223
    %p230 = scmp.eq.s32.totalorder %s24, 1
    %p231 = por %p229, %p230
    %p232 = scmp.ne.s32.totalorder %s223, %s224
    %p233 = scmp.eq.s32.totalorder %s24, 0
    %p234 = por %p232, %p233
    %p235 = scmp.ne.s32.totalorder %s223, %s224
    %p236 = scmp.eq.s32.totalorder %s25, 1
    %p237 = por %p235, %p236
    %p239 = scmp.ne.s32.totalorder %s224, %s238
    %p240 = scmp.eq.s32.totalorder %s25, 0
    %p241 = por %p239, %p240
    %s243 = sadd.s32 %s242, 1
    %p246 = scmp.eq.s32.totalorder %s19, 1
    %p247 = scmp.ne.s32.totalorder %s242, %s244
    %p248 = scmp.eq.s32.totalorder %s19, 0
    %p249 = por %p247, %p248
    %p250 = scmp.ne.s32.totalorder %s242, %s244
    %p251 = scmp.eq.s32.totalorder %s24, 1
    %p252 = por %p250, %p251
    %p253 = scmp.ne.s32.totalorder %s244, %s245
    %p254 = scmp.eq.s32.totalorder %s24, 0
    %p255 = por %p253, %p254
    %p256 = scmp.ne.s32.totalorder %s244, %s245
    %p257 = scmp.eq.s32.totalorder %s25, 1
    %p258 = por %p256, %p257
    %p260 = scmp.ne.s32.totalorder %s245, %s259
    %p261 = scmp.eq.s32.totalorder %s25, 0
    %p262 = por %p260, %p261
    %s263 = ssub.s32 %s19, %s26
    %p264 = scmp.eq.s32.totalorder %s263, 0
    %s266 = sadd.s32 %s265, 1
    %s267 = scalar_select %p264, %s265, %s266
    %p270 = pneg %p264
    %p271 = scmp.eq.s32.totalorder %s19, 1
    %p272 = por %p270, %p271
    %p273 = scmp.ne.s32.totalorder %s265, %s268
    %p274 = scmp.eq.s32.totalorder %s19, 0
    %p275 = por %p273, %p274
    %p276 = scmp.ne.s32.totalorder %s265, %s268
    %p277 = scmp.eq.s32.totalorder %s24, 1
    %p278 = por %p276, %p277
    %p279 = scmp.ne.s32.totalorder %s268, %s269
    %p280 = scmp.eq.s32.totalorder %s24, 0
    %p281 = por %p279, %p280
    %p282 = scmp.ne.s32.totalorder %s268, %s269
    %p283 = scmp.eq.s32.totalorder %s25, 1
    %p284 = por %p282, %p283
    %p286 = scmp.ne.s32.totalorder %s269, %s285
    %p287 = scmp.eq.s32.totalorder %s25, 0
    %p288 = por %p286, %p287
    %s289 = ssub.s32 %s19, %s26
    %p290 = scmp.eq.s32.totalorder %s289, 0
    %s292 = sadd.s32 %s291, 1
    %s293 = scalar_select %p290, %s291, %s292
    %p296 = pneg %p290
    %p297 = scmp.eq.s32.totalorder %s19, 1
    %p298 = por %p296, %p297
    %p299 = scmp.ne.s32.totalorder %s291, %s294
    %p300 = scmp.eq.s32.totalorder %s19, 0
    %p301 = por %p299, %p300
    %p302 = scmp.ne.s32.totalorder %s291, %s294
    %p303 = scmp.eq.s32.totalorder %s24, 1
    %p304 = por %p302, %p303
    %p305 = scmp.ne.s32.totalorder %s294, %s295
    %p306 = scmp.eq.s32.totalorder %s24, 0
    %p307 = por %p305, %p306
    %p308 = scmp.ne.s32.totalorder %s294, %s295
    %p309 = scmp.eq.s32.totalorder %s25, 1
    %p310 = por %p308, %p309
    %p312 = scmp.ne.s32.totalorder %s295, %s311
    %p313 = scmp.eq.s32.totalorder %s25, 0
    %p314 = por %p312, %p313
    %p315 = scmp.le.s32.totalorder 1, %s19
    %p316 = scmp.lt.s32.totalorder %s19, 3
    %p317 = pnand %p315, %p316
    %p318 = pneg %p317
    // Predicated region
    $region9: #{generalized_rcnn_forward.3} parent=5 // pred_check
      _
    $region10: #{generalized_rcnn_forward.3} parent=5 // pred_check_branch
      %320 = sbr.rel (%p317) target = $region12
    $region11: #{generalized_rcnn_forward.3} parent=5 // pred_region
      %s321 = ssub.s32 %s19, 1
      // Predicated region
      $region13: #{generalized_rcnn_forward.3} parent=11 // pred_check
        %p322 = pneg %p66
      $region14: #{generalized_rcnn_forward.3} parent=11 // pred_check_branch
        %324 = sbr.rel (%p322) target = $region16
      $region15: #{generalized_rcnn_forward.3} parent=11 // pred_region
        _
      $region16: #{generalized_rcnn_forward.3} parent=11 // pred_fallthru
        _
      // Predicated region
      $region17: #{generalized_rcnn_forward.3} parent=11 // pred_check
        %p325 = pneg %p87
      $region18: #{generalized_rcnn_forward.3} parent=11 // pred_check_branch
        %327 = sbr.rel (%p325) target = $region20
      $region19: #{generalized_rcnn_forward.3} parent=11 // pred_region
        _
      $region20: #{generalized_rcnn_forward.3} parent=11 // pred_fallthru
        _
      // Predicated region
      $region21: #{generalized_rcnn_forward.3} parent=11 // pred_check
        %p328 = pneg %p108
      $region22: #{generalized_rcnn_forward.3} parent=11 // pred_check_branch
        %330 = sbr.rel (%p328) target = $region24
      $region23: #{generalized_rcnn_forward.3} parent=11 // pred_region
        _
      $region24: #{generalized_rcnn_forward.3} parent=11 // pred_fallthru
        _
      // Predicated region
      $region25: #{generalized_rcnn_forward.3} parent=11 // pred_check
        %p331 = pneg %p129
      $region26: #{generalized_rcnn_forward.3} parent=11 // pred_check_branch
        %333 = sbr.rel (%p331) target = $region28
      $region27: #{generalized_rcnn_forward.3} parent=11 // pred_region
        _
      $region28: #{generalized_rcnn_forward.3} parent=11 // pred_fallthru
        _
      // Predicated region
      $region29: #{generalized_rcnn_forward.3} parent=11 // pred_check
        %p334 = pneg %p150
      $region30: #{generalized_rcnn_forward.3} parent=11 // pred_check_branch
        %336 = sbr.rel (%p334) target = $region32
      $region31: #{generalized_rcnn_forward.3} parent=11 // pred_region
        _
      $region32: #{generalized_rcnn_forward.3} parent=11 // pred_fallthru
        _
      // Predicated region
      $region33: #{generalized_rcnn_forward.3} parent=11 // pred_check
        %p337 = pneg %p171
      $region34: #{generalized_rcnn_forward.3} parent=11 // pred_check_branch
        %339 = sbr.rel (%p337) target = $region36
      $region35: #{generalized_rcnn_forward.3} parent=11 // pred_region
        _
      $region36: #{generalized_rcnn_forward.3} parent=11 // pred_fallthru
        _
      // Predicated region
      $region37: #{generalized_rcnn_forward.3} parent=11 // pred_check
        %p340 = pneg %p192
      $region38: #{generalized_rcnn_forward.3} parent=11 // pred_check_branch
        %342 = sbr.rel (%p340) target = $region40
      $region39: #{generalized_rcnn_forward.3} parent=11 // pred_region
        _
      $region40: #{generalized_rcnn_forward.3} parent=11 // pred_fallthru
        _
      // Predicated region
      $region41: #{generalized_rcnn_forward.3} parent=11 // pred_check
        %p343 = pneg %p213
      $region42: #{generalized_rcnn_forward.3} parent=11 // pred_check_branch
        %345 = sbr.rel (%p343) target = $region44
      $region43: #{generalized_rcnn_forward.3} parent=11 // pred_region
        _
      $region44: #{generalized_rcnn_forward.3} parent=11 // pred_fallthru
        _
      // Predicated region
      $region45: #{generalized_rcnn_forward.3} parent=11 // pred_check
        %p346 = pneg %p234
      $region46: #{generalized_rcnn_forward.3} parent=11 // pred_check_branch
        %348 = sbr.rel (%p346) target = $region48
      $region47: #{generalized_rcnn_forward.3} parent=11 // pred_region
        _
      $region48: #{generalized_rcnn_forward.3} parent=11 // pred_fallthru
        _
      // Predicated region
      $region49: #{generalized_rcnn_forward.3} parent=11 // pred_check
        %p349 = pneg %p255
      $region50: #{generalized_rcnn_forward.3} parent=11 // pred_check_branch
        %351 = sbr.rel (%p349) target = $region52
      $region51: #{generalized_rcnn_forward.3} parent=11 // pred_region
        _
      $region52: #{generalized_rcnn_forward.3} parent=11 // pred_fallthru
        _
    $region12: #{generalized_rcnn_forward.3} parent=5 // pred_fallthru
      _
    %p352 = scmp.lt.s32.totalorder %s19, 2
    // Predicated region
    $region53: #{generalized_rcnn_forward.3} parent=5 // pred_check
      %p353 = pneg %p352
    $region54: #{generalized_rcnn_forward.3} parent=5 // pred_check_branch
      %355 = sbr.rel (%p353) target = $region56
    $region55: #{generalized_rcnn_forward.3} parent=5 // pred_region
      // Predicated region
      $region57: #{generalized_rcnn_forward.3} parent=55 // pred_check
        %p356 = pneg %p39
      $region58: #{generalized_rcnn_forward.3} parent=55 // pred_check_branch
        %358 = sbr.rel (%p356) target = $region60
      $region59: #{generalized_rcnn_forward.3} parent=55 // pred_region
        %p359 = scmp.lt.s32.totalorder %s19, 1
        %s360 = scalar_select %p359, %s19, 1
        %s361 = smul.addr %s360, 8
        %s362 = smul.addr %s361, 4
        %s363 = scalar_lea.vmem %s0, %s362
      $region60: #{generalized_rcnn_forward.3} parent=55 // pred_fallthru
        _
    $region56: #{generalized_rcnn_forward.3} parent=5 // pred_fallthru
      _
    %p364 = scmp.le.s32.totalorder 1, %s19
    %p365 = scmp.lt.s32.totalorder %s19, 3
    %p366 = pnand %p364, %p365
    %p367 = pneg %p366
    // Predicated region
    $region61: #{generalized_rcnn_forward.3} parent=5 // pred_check
      _
    $region62: #{generalized_rcnn_forward.3} parent=5 // pred_check_branch
      %369 = sbr.rel (%p366) target = $region64
    $region63: #{generalized_rcnn_forward.3} parent=5 // pred_region
      %s370 = ssub.s32 %s19, 1
      %p371 = scmp.lt.s32.totalorder %s24, 1
      %s372 = scalar_select %p371, %s24, 1
      %s373 = smul.addr %s372, 8
      %s374 = smul.addr %s373, 4
      %s375 = scalar_lea.vmem %s0, %s374
      %p376 = pneg %p45
      %p377 = pneg %p42
      %p378 = pneg %p66
      %p379 = pneg %p63
      %p380 = pneg %p87
      %p381 = pneg %p84
      %p382 = pneg %p108
      %p383 = pneg %p105
      %p384 = pneg %p129
      %p385 = pneg %p126
      %p386 = pneg %p150
      %p387 = pneg %p147
      %p388 = pneg %p171
      %p389 = pneg %p168
      %p390 = pneg %p192
      %p391 = pneg %p189
      %p392 = pneg %p213
      %p393 = pneg %p210
      %p394 = pneg %p234
      %p395 = pneg %p231
      %p396 = pneg %p255
      %p397 = pneg %p252
      %p398 = pneg %p281
      %p399 = pneg %p278
      %p400 = scmp.lt.s32.totalorder %s24, 1
      %s401 = scalar_select %p400, %s24, 1
      %s402 = smul.addr %s401, 8
      %s403 = smul.addr %s402, 8
      %s404 = scalar_lea.vmem %s11, %s403
      %p405 = pneg %p307
      %p406 = pneg %p304
      %p407 = scmp.lt.s32.totalorder %s24, 1
      %s408 = scalar_select %p407, %s24, 1
      %s409 = scalar_lea.vmem %s12, %s408
      %p410 = scmp.lt.s32.totalorder %s24, 1
      %s411 = scalar_select %p410, %s24, 1
      %s412 = smul.addr %s411, 8
      %s413 = smul.addr %s412, 4
      %s414 = scalar_lea.vmem %s0, %s413
      %p415 = scmp.lt.s32.totalorder %s24, 1
      %s416 = scalar_select %p415, %s24, 1
      %s417 = smul.addr %s416, 8
      %s418 = smul.addr %s417, 8
      %s419 = scalar_lea.vmem %s11, %s418
      %p420 = scmp.lt.s32.totalorder %s24, 1
      %s421 = scalar_select %p420, %s24, 1
      %s422 = scalar_lea.vmem %s12, %s421
      %v424 = vld [vmem:[%s414] sm:$0xf]
      %v425 = vld [vmem:[%s414 + $0x4] sm:$0xf]
      %v426 = vld [vmem:[%s414 + $0x8] sm:$0xf]
      %v427 = vld [vmem:[%s414 + $0xc] sm:$0xf]
      %v428 = vld [vmem:[%s414 + $0x10] sm:$0xf]
      %v429 = vld [vmem:[%s414 + $0x14] sm:$0xf]
      %v430 = vld [vmem:[%s414 + $0x18] sm:$0xf]
      %v431 = vld [vmem:[%s414 + $0x1c] sm:$0xf]
      %v432 = vunpack.c.l.bf16 %v424
      %v433 = vunpack.c.l.bf16 %v425
      %v434 = vunpack.c.l.bf16 %v426
      %v435 = vunpack.c.l.bf16 %v427
      %v436 = vunpack.c.l.bf16 %v428
      %v437 = vunpack.c.l.bf16 %v429
      %v438 = vunpack.c.l.bf16 %v430
      %v439 = vunpack.c.l.bf16 %v431
      %v440 = vld [vmem:[%s1] sm:$0x1]
      %v442 = vlaneseq
      %v443 = vshrl.u32 %v442, 7
      %v444 = vsub.s32 0, %v443
      %v445 = vrot.slane %v440, %v444
      %v447 = vmul.f32 %v432, %v445
      %v448 = vmul.f32 %v433, %v445
      %v449 = vmul.f32 %v434, %v445
      %v450 = vmul.f32 %v435, %v445
      %v451 = vmul.f32 %v436, %v445
      %v452 = vmul.f32 %v437, %v445
      %v453 = vmul.f32 %v438, %v445
      %v454 = vmul.f32 %v439, %v445
      %v455 = vld [vmem:[%s2] sm:$0x1]
      %v457 = vlaneseq
      %v458 = vshrl.u32 %v457, 7
      %v459 = vsub.s32 0, %v458
      %v460 = vrot.slane %v455, %v459
      %v462 = vadd.f32 %v447, %v460
      %v463 = vadd.f32 %v448, %v460
      %v464 = vadd.f32 %v449, %v460
      %v465 = vadd.f32 %v450, %v460
      %v466 = vadd.f32 %v451, %v460
      %v467 = vadd.f32 %v452, %v460
      %v468 = vadd.f32 %v453, %v460
      %v469 = vadd.f32 %v454, %v460
      %470 = vst [vmem:[#allocation2] sm:$0xff] 0.0
      %471 = vst [vmem:[#allocation2 + $0x8] sm:$0x3] 0.0
      %472 = vst [vmem:[#allocation2 + $0x10] sm:$0xff] 0.0
      %473 = vst [vmem:[#allocation2 + $0x18] sm:$0x3] 0.0
      %474 = vst [vmem:[#allocation2 + $0x20] sm:$0xff] 0.0
      %475 = vst [vmem:[#allocation2 + $0x28] sm:$0x3] 0.0
      %476 = vst [vmem:[#allocation2 + $0x30] sm:$0xff] 0.0
      %477 = vst [vmem:[#allocation2 + $0x38] sm:$0x3] 0.0
      %478 = vst [vmem:[#allocation2 + $0x40] sm:$0xff] 0.0
      %479 = vst [vmem:[#allocation2 + $0x48] sm:$0x3] 0.0
      %480 = vst [vmem:[#allocation2 + $0x50] sm:$0xff] 0.0
      %481 = vst [vmem:[#allocation2 + $0x58] sm:$0x3] 0.0
      %482 = vst [vmem:[#allocation2 + $0x60] sm:$0xff] 0.0
      %483 = vst [vmem:[#allocation2 + $0x68] sm:$0x3] 0.0
      %484 = vst [vmem:[#allocation2 + $0x70] sm:$0xff] 0.0
      %485 = vst [vmem:[#allocation2 + $0x78] sm:$0x3] 0.0
      %486 = vst [vmem:[#allocation2 + $0x80] sm:$0xff] 0.0
      %487 = vst [vmem:[#allocation2 + $0x88] sm:$0x3] 0.0
      %488 = vst [vmem:[#allocation2 + $0x90] sm:$0xff] 0.0
      %489 = vst [vmem:[#allocation2 + $0x98] sm:$0x3] 0.0
      %s490 = scalar_lea.vmem [#allocation2], 16
      %491 = vst [vmem:[%s490 + $0x1] sm:$0xff] %v462
      %492 = vst [vmem:[%s490 + $0x11] sm:$0xff] %v463
      %493 = vst [vmem:[%s490 + $0x21] sm:$0xff] %v464
      %494 = vst [vmem:[%s490 + $0x31] sm:$0xff] %v465
      %495 = vst [vmem:[%s490 + $0x41] sm:$0xff] %v466
      %496 = vst [vmem:[%s490 + $0x51] sm:$0xff] %v467
      %497 = vst [vmem:[%s490 + $0x61] sm:$0xff] %v468
      %498 = vst [vmem:[%s490 + $0x71] sm:$0xff] %v469
      %v499 = vld [vmem:[#allocation2] sm:$0xff]
      %v500 = vld [vmem:[#allocation2 + $0x10] sm:$0xff]
      %v501 = vld [vmem:[#allocation2 + $0x20] sm:$0xff]
      %v502 = vld [vmem:[#allocation2 + $0x30] sm:$0xff]
      %v503 = vld [vmem:[#allocation2 + $0x40] sm:$0xff]
      %v504 = vld [vmem:[#allocation2 + $0x50] sm:$0xff]
      %v505 = vld [vmem:[#allocation2 + $0x60] sm:$0xff]
      %v506 = vld [vmem:[#allocation2 + $0x70] sm:$0xff]
      %v507 = vpack.c.bf16 %v500, %v499
      %v508 = vpack.c.bf16 %v502, %v501
      %v509 = vpack.c.bf16 %v504, %v503
      %v510 = vpack.c.bf16 %v506, %v505
      %v511 = vld [vmem:[%s3] sm:$0xf]
      %v512 = vld [vmem:[%s3 + $0x4] sm:$0xf]
      %v513 = vld [vmem:[%s3 + $0x8] sm:$0xf]
      %v514 = vld [vmem:[%s3 + $0xc] sm:$0xf]
      %v515 = vld [vmem:[%s3 + $0x10] sm:$0xf]
      %v516 = vld [vmem:[%s3 + $0x14] sm:$0xf]
      %v517 = vld [vmem:[%s3 + $0x18] sm:$0xf]
      %v518 = vld [vmem:[%s3 + $0x1c] sm:$0xf]
      %v519 = vld [vmem:[%s3 + $0x20] sm:$0xf]
      %v520 = vld [vmem:[%s3 + $0x24] sm:$0xf]
      %v521 = vld [vmem:[%s3 + $0x28] sm:$0xf]
      %v522 = vld [vmem:[%s3 + $0x2c] sm:$0xf]
      %v523 = vld [vmem:[%s3 + $0x30] sm:$0xf]
      %v524 = vld [vmem:[%s3 + $0x34] sm:$0xf]
      %v525 = vld [vmem:[%s3 + $0x38] sm:$0xf]
      %v526 = vld [vmem:[%s3 + $0x3c] sm:$0xf]
      %v527 = vld [vmem:[#allocation2 + $0x1] sm:$0xff]
      %v528 = vld [vmem:[#allocation2 + $0x11] sm:$0xff]
      %v529 = vld [vmem:[#allocation2 + $0x21] sm:$0xff]
      %v530 = vld [vmem:[#allocation2 + $0x31] sm:$0xff]
      %v531 = vld [vmem:[#allocation2 + $0x41] sm:$0xff]
      %v532 = vld [vmem:[#allocation2 + $0x51] sm:$0xff]
      %v533 = vld [vmem:[#allocation2 + $0x61] sm:$0xff]
      %v534 = vld [vmem:[#allocation2 + $0x71] sm:$0xff]
      %v535 = vpack.c.bf16 %v528, %v527
      %v536 = vpack.c.bf16 %v530, %v529
      %v537 = vpack.c.bf16 %v532, %v531
      %v538 = vpack.c.bf16 %v534, %v533
      %s539 = scalar_lea.vmem %s3, 64
      %v540 = vld [vmem:[%s539] sm:$0xf]
      %v541 = vld [vmem:[%s539 + $0x4] sm:$0xf]
      %v542 = vld [vmem:[%s539 + $0x8] sm:$0xf]
      %v543 = vld [vmem:[%s539 + $0xc] sm:$0xf]
      %v544 = vld [vmem:[%s539 + $0x10] sm:$0xf]
      %v545 = vld [vmem:[%s539 + $0x14] sm:$0xf]
      %v546 = vld [vmem:[%s539 + $0x18] sm:$0xf]
      %v547 = vld [vmem:[%s539 + $0x1c] sm:$0xf]
      %v548 = vld [vmem:[%s539 + $0x20] sm:$0xf]
      %v549 = vld [vmem:[%s539 + $0x24] sm:$0xf]
      %v550 = vld [vmem:[%s539 + $0x28] sm:$0xf]
      %v551 = vld [vmem:[%s539 + $0x2c] sm:$0xf]
      %v552 = vld [vmem:[%s539 + $0x30] sm:$0xf]
      %v553 = vld [vmem:[%s539 + $0x34] sm:$0xf]
      %v554 = vld [vmem:[%s539 + $0x38] sm:$0xf]
      %v555 = vld [vmem:[%s539 + $0x3c] sm:$0xf]
      %v572 = vunpack.c.l.b16 %v540
      %v573 = vunpack.c.l.b16 %v541
      %v574 = vunpack.c.l.b16 %v542
      %v575 = vunpack.c.l.b16 %v543
      %v576 = vunpack.c.l.b16 %v544
      %v577 = vunpack.c.l.b16 %v545
      %v578 = vunpack.c.l.b16 %v546
      %v579 = vunpack.c.l.b16 %v547
      %v580 = vunpack.c.l.b16 %v548
      %v581 = vunpack.c.l.b16 %v549
      %v582 = vunpack.c.l.b16 %v550
      %v583 = vunpack.c.l.b16 %v551
      %v584 = vunpack.c.l.b16 %v552
      %v585 = vunpack.c.l.b16 %v553
      %v586 = vunpack.c.l.b16 %v554
      %v587 = vunpack.c.l.b16 %v555
      %v588 = vpack.c.b16 %v573, %v572
      %v589 = vpack.c.b16 %v575, %v574
      %v590 = vpack.c.b16 %v577, %v576
      %v591 = vpack.c.b16 %v579, %v578
      %v592 = vpack.c.b16 %v581, %v580
      %v593 = vpack.c.b16 %v583, %v582
      %v594 = vpack.c.b16 %v585, %v584
      %v595 = vpack.c.b16 %v587, %v586
      %604 = vmatprep.subr.bf16.mxu0 0
      %605 = vmatpush1.bf16.msra.mxu0 %v588
      %606 = vmatprep.subr.bf16.mxu0 0
      %607 = vmatpush1.bf16.msra.mxu0 %v589
      %608 = vmatprep.subr.bf16.mxu0 0
      %609 = vmatpush1.bf16.msra.mxu0 %v590
      %610 = vmatprep.subr.bf16.mxu0 0
      %611 = vmatpush1.bf16.msra.mxu0 %v591
      %612 = vmatprep.subr.bf16.mxu0 0
      %613 = vmatpush1.bf16.msra.mxu0 %v592
      %614 = vmatprep.subr.bf16.mxu0 0
      %615 = vmatpush1.bf16.msra.mxu0 %v593
      %616 = vmatprep.subr.bf16.mxu0 0
      %617 = vmatpush1.bf16.msra.mxu0 %v594
      %618 = vmatprep.subr.bf16.mxu0 0
      %619 = vmatpush1.bf16.msra.mxu0 %v595
      %620 = vmatprep.subr.bf16.mxu0 0
      %621 = vmatpush1.bf16.msra.mxu0 0
      %622 = vmatprep.subr.bf16.mxu0 0
      %623 = vmatpush1.bf16.msra.mxu0 0
      %624 = vmatprep.subr.bf16.mxu0 0
      %625 = vmatpush1.bf16.msra.mxu0 0
      %626 = vmatprep.subr.bf16.mxu0 0
      %627 = vmatpush1.bf16.msra.mxu0 0
      %628 = vmatprep.subr.bf16.mxu0 0
      %629 = vmatpush1.bf16.msra.mxu0 0
      %630 = vmatprep.subr.bf16.mxu0 0
      %631 = vmatpush1.bf16.msra.mxu0 0
      %632 = vmatprep.subr.bf16.mxu0 0
      %633 = vmatpush1.bf16.msra.mxu0 0
      %634 = vmatprep.subr.bf16.mxu0 0
      %635 = vmatpush1.bf16.msra.mxu0 0
      %636 = vmatprep.mubr.bf16.mxu0 0
      %637 = vmatmul.mubr.bf16.gmra.mrb[0].mxu0 %v535
      %v638 = vpop.f32.mrb[0].mxu0
      %v639 = vadd.f32 0.0, %v638
      %v640 = vpop.f32.mrb[0].mxu0
      %v641 = vpop.f32.mrb[0].mxu0
      %v642 = vadd.f32 0.0, %v641
      %v643 = vpop.f32.mrb[0].mxu0
      %644 = vmatprep.mubr.bf16.mxu0 0
      %645 = vmatmul.mubr.bf16.gmra.mrb[0].mxu0 %v536
      %v646 = vpop.f32.mrb[0].mxu0
      %v647 = vadd.f32 0.0, %v646
      %v648 = vpop.f32.mrb[0].mxu0
      %v649 = vpop.f32.mrb[0].mxu0
      %v650 = vadd.f32 0.0, %v649
      %v651 = vpop.f32.mrb[0].mxu0
      %652 = vmatprep.mubr.bf16.mxu0 0
      %653 = vmatmul.mubr.bf16.gmra.mrb[0].mxu0 %v537
      %v654 = vpop.f32.mrb[0].mxu0
      %v655 = vadd.f32 0.0, %v654
      %v656 = vpop.f32.mrb[0].mxu0
      %v657 = vpop.f32.mrb[0].mxu0
      %v658 = vadd.f32 0.0, %v657
      %v659 = vpop.f32.mrb[0].mxu0
      %660 = vmatprep.mubr.bf16.mxu0 0
      %661 = vmatmul.mubr.bf16.gmra.mrb[0].mxu0 %v538
      %v662 = vpop.f32.mrb[0].mxu0
      %v663 = vadd.f32 0.0, %v662
      %v664 = vpop.f32.mrb[0].mxu0
      %v665 = vpop.f32.mrb[0].mxu0
      %v666 = vadd.f32 0.0, %v665
      %v667 = vpop.f32.mrb[0].mxu0
      %668 = vdwg.mxu0
      %v685 = vunpack.c.l.b16 %v511
      %v686 = vunpack.c.l.b16 %v512
      %v687 = vunpack.c.l.b16 %v513
      %v688 = vunpack.c.l.b16 %v514
      %v689 = vunpack.c.l.b16 %v515
      %v690 = vunpack.c.l.b16 %v516
      %v691 = vunpack.c.l.b16 %v517
      %v692 = vunpack.c.l.b16 %v518
      %v693 = vunpack.c.l.b16 %v519
      %v694 = vunpack.c.l.b16 %v520
      %v695 = vunpack.c.l.b16 %v521
      %v696 = vunpack.c.l.b16 %v522
      %v697 = vunpack.c.l.b16 %v523
      %v698 = vunpack.c.l.b16 %v524
      %v699 = vunpack.c.l.b16 %v525
      %v700 = vunpack.c.l.b16 %v526
      %v701 = vpack.c.b16 %v686, %v685
      %v702 = vpack.c.b16 %v688, %v687
      %v703 = vpack.c.b16 %v690, %v689
      %v704 = vpack.c.b16 %v692, %v691
      %v705 = vpack.c.b16 %v694, %v693
      %v706 = vpack.c.b16 %v696, %v695
      %v707 = vpack.c.b16 %v698, %v697
      %v708 = vpack.c.b16 %v700, %v699
      %717 = vmatprep.subr.bf16.mxu0 0
      %718 = vmatpush1.bf16.msra.mxu0 %v701
      %719 = vmatprep.subr.bf16.mxu0 0
      %720 = vmatpush1.bf16.msra.mxu0 %v702
      %721 = vmatprep.subr.bf16.mxu0 0
      %722 = vmatpush1.bf16.msra.mxu0 %v703
      %723 = vmatprep.subr.bf16.mxu0 0
      %724 = vmatpush1.bf16.msra.mxu0 %v704
      %725 = vmatprep.subr.bf16.mxu0 0
      %726 = vmatpush1.bf16.msra.mxu0 %v705
      %727 = vmatprep.subr.bf16.mxu0 0
      %728 = vmatpush1.bf16.msra.mxu0 %v706
      %729 = vmatprep.subr.bf16.mxu0 0
      %730 = vmatpush1.bf16.msra.mxu0 %v707
      %731 = vmatprep.subr.bf16.mxu0 0
      %732 = vmatpush1.bf16.msra.mxu0 %v708
      %733 = vmatprep.subr.bf16.mxu0 0
      %734 = vmatpush1.bf16.msra.mxu0 0
      %735 = vmatprep.subr.bf16.mxu0 0
      %736 = vmatpush1.bf16.msra.mxu0 0
      %737 = vmatprep.subr.bf16.mxu0 0
      %738 = vmatpush1.bf16.msra.mxu0 0
      %739 = vmatprep.subr.bf16.mxu0 0
      %740 = vmatpush1.bf16.msra.mxu0 0
      %741 = vmatprep.subr.bf16.mxu0 0
      %742 = vmatpush1.bf16.msra.mxu0 0
      %743 = vmatprep.subr.bf16.mxu0 0
      %744 = vmatpush1.bf16.msra.mxu0 0
      %745 = vmatprep.subr.bf16.mxu0 0
      %746 = vmatpush1.bf16.msra.mxu0 0
      %747 = vmatprep.subr.bf16.mxu0 0
      %748 = vmatpush1.bf16.msra.mxu0 0
      %749 = vmatprep.mubr.bf16.mxu0 0
      %750 = vmatmul.mubr.bf16.gmra.mrb[0].mxu0 %v507
      %v751 = vpop.f32.mrb[0].mxu0
      %v752 = vadd.f32 %v639, %v751
      %v753 = vpop.f32.mrb[0].mxu0
      %v754 = vpop.f32.mrb[0].mxu0
      %v755 = vadd.f32 %v642, %v754
      %v756 = vpop.f32.mrb[0].mxu0
      %757 = vmatprep.mubr.bf16.mxu0 0
      %758 = vmatmul.mubr.bf16.gmra.mrb[0].mxu0 %v508
      %v759 = vpop.f32.mrb[0].mxu0
      %v760 = vadd.f32 %v647, %v759
      %v761 = vpop.f32.mrb[0].mxu0
      %v762 = vpop.f32.mrb[0].mxu0
      %v763 = vadd.f32 %v650, %v762
      %v764 = vpop.f32.mrb[0].mxu0
      %765 = vmatprep.mubr.bf16.mxu0 0
      %766 = vmatmul.mubr.bf16.gmra.mrb[0].mxu0 %v509
      %v767 = vpop.f32.mrb[0].mxu0
      %v768 = vadd.f32 %v655, %v767
      %v769 = vpop.f32.mrb[0].mxu0
      %v770 = vpop.f32.mrb[0].mxu0
      %v771 = vadd.f32 %v658, %v770
      %v772 = vpop.f32.mrb[0].mxu0
      %773 = vmatprep.mubr.bf16.mxu0 0
      %774 = vmatmul.mubr.bf16.gmra.mrb[0].mxu0 %v510
      %v775 = vpop.f32.mrb[0].mxu0
      %v776 = vadd.f32 %v663, %v775
      %v777 = vpop.f32.mrb[0].mxu0
      %v778 = vpop.f32.mrb[0].mxu0
      %v779 = vadd.f32 %v666, %v778
      %v780 = vpop.f32.mrb[0].mxu0
      %781 = vdwg.mxu0
      %v782 = vld [vmem:[#allocation2 + $0x2] sm:$0xff]
      %v783 = vld [vmem:[#allocation2 + $0x12] sm:$0xff]
      %v784 = vld [vmem:[#allocation2 + $0x22] sm:$0xff]
      %v785 = vld [vmem:[#allocation2 + $0x32] sm:$0xff]
      %v786 = vld [vmem:[#allocation2 + $0x42] sm:$0xff]
      %v787 = vld [vmem:[#allocation2 + $0x52] sm:$0xff]
      %v788 = vld [vmem:[#allocation2 + $0x62] sm:$0xff]
      %v789 = vld [vmem:[#allocation2 + $0x72] sm:$0xff]
      %v790 = vpack.c.bf16 %v783, %v782
      %v791 = vpack.c.bf16 %v785, %v784
      %v792 = vpack.c.bf16 %v787, %v786
      %v793 = vpack.c.bf16 %v789, %v788
      %s794 = scalar_lea.vmem %s3, 128
      %v795 = vld [vmem:[%s794] sm:$0xf]
      %v796 = vld [vmem:[%s794 + $0x4] sm:$0xf]
      %v797 = vld [vmem:[%s794 + $0x8] sm:$0xf]
      %v798 = vld [vmem:[%s794 + $0xc] sm:$0xf]
      %v799 = vld [vmem:[%s794 + $0x10] sm:$0xf]
      %v800 = vld [vmem:[%s794 + $0x14] sm:$0xf]
      %v801 = vld [vmem:[%s794 + $0x18] sm:$0xf]
      %v802 = vld [vmem:[%s794 + $0x1c] sm:$0xf]
      %v803 = vld [vmem:[%s794 + $0x20] sm:$0xf]
      %v804 = vld [vmem:[%s794 + $0x24] sm:$0xf]
      %v805 = vld [vmem:[%s794 + $0x28] sm:$0xf]
      %v806 = vld [vmem:[%s794 + $0x2c] sm:$0xf]
      %v807 = vld [vmem:[%s794 + $0x30] sm:$0xf]
      %v808 = vld [vmem:[%s794 + $0x34] sm:$0xf]
      %v809 = vld [vmem:[%s794 + $0x38] sm:$0xf]
      %v810 = vld [vmem:[%s794 + $0x3c] sm:$0xf]
      %v827 = vunpack.c.l.b16 %v795
      %v828 = vunpack.c.l.b16 %v796
      %v829 = vunpack.c.l.b16 %v797
      %v830 = vunpack.c.l.b16 %v798
      %v831 = vunpack.c.l.b16 %v799
      %v832 = vunpack.c.l.b16 %v800
      %v833 = vunpack.c.l.b16 %v801
      %v834 = vunpack.c.l.b16 %v802
      %v835 = vunpack.c.l.b16 %v803
      %v836 = vunpack.c.l.b16 %v804
      %v837 = vunpack.c.l.b16 %v805
      %v838 = vunpack.c.l.b16 %v806
      %v839 = vunpack.c.l.b16 %v807
      %v840 = vunpack.c.l.b16 %v808
      %v841 = vunpack.c.l.b16 %v809
      %v842 = vunpack.c.l.b16 %v810
      %v843 = vpack.c.b16 %v828, %v827
      %v844 = vpack.c.b16 %v830, %v829
      %v845 = vpack.c.b16 %v832, %v831
      %v846 = vpack.c.b16 %v834, %v833
      %v847 = vpack.c.b16 %v836, %v835
      %v848 = vpack.c.b16 %v838, %v837
      %v849 = vpack.c.b16 %v840, %v839
      %v850 = vpack.c.b16 %v842, %v841
      %859 = vmatprep.subr.bf16.mxu0 0
      %860 = vmatpush1.bf16.msra.mxu0 %v843
      %861 = vmatprep.subr.bf16.mxu0 0
      %862 = vmatpush1.bf16.msra.mxu0 %v844
      %863 = vmatprep.subr.bf16.mxu0 0
      %864 = vmatpush1.bf16.msra.mxu0 %v845
      %865 = vmatprep.subr.bf16.mxu0 0
      %866 = vmatpush1.bf16.msra.mxu0 %v846
      %867 = vmatprep.subr.bf16.mxu0 0
      %868 = vmatpush1.bf16.msra.mxu0 %v847
      %869 = vmatprep.subr.bf16.mxu0 0
      %870 = vmatpush1.bf16.msra.mxu0 %v848
      %871 = vmatprep.subr.bf16.mxu0 0
      %872 = vmatpush1.bf16.msra.mxu0 %v849
      %873 = vmatprep.subr.bf16.mxu0 0
      %874 = vmatpush1.bf16.msra.mxu0 %v850
      %875 = vmatprep.subr.bf16.mxu0 0
      %876 = vmatpush1.bf16.msra.mxu0 0
      %877 = vmatprep.subr.bf16.mxu0 0
      %878 = vmatpush1.bf16.msra.mxu0 0
      %879 = vmatprep.subr.bf16.mxu0 0
      %880 = vmatpush1.bf16.msra.mxu0 0
      %881 = vmatprep.subr.bf16.mxu0 0
      %882 = vmatpush1.bf16.msra.mxu0 0
      %883 = vmatprep.subr.bf16.mxu0 0
      %884 = vmatpush1.bf16.msra.mxu0 0
      %885 = vmatprep.subr.bf16.mxu0 0
      %886 = vmatpush1.bf16.msra.mxu0 0
      %887 = vmatprep.subr.bf16.mxu0 0
      %888 = vmatpush1.bf16.msra.mxu0 0
      %889 = vmatprep.subr.bf16.mxu0 0
      %890 = vmatpush1.bf16.msra.mxu0 0
      %891 = vmatprep.mubr.bf16.mxu0 0
      %892 = vmatmul.mubr.bf16.gmra.mrb[0].mxu0 %v790
      %v893 = vpop.f32.mrb[0].mxu0
      %v894 = vadd.f32 0.0, %v893
      %v895 = vpop.f32.mrb[0].mxu0
      %v896 = vpop.f32.mrb[0].mxu0
      %v897 = vadd.f32 0.0, %v896
      %v898 = vpop.f32.mrb[0].mxu0
      %899 = vmatprep.mubr.bf16.mxu0 0
      %900 = vmatmul.mubr.bf16.gmra.mrb[0].mxu0 %v791
      %v901 = vpop.f32.mrb[0].mxu0
      %v902 = vadd.f32 0.0, %v901
      %v903 = vpop.f32.mrb[0].mxu0
      %v904 = vpop.f32.mrb[0].mxu0
      %v905 = vadd.f32 0.0, %v904
      %v906 = vpop.f32.mrb[0].mxu0
      %907 = vmatprep.mubr.bf16.mxu0 0
      %908 = vmatmul.mubr.bf16.gmra.mrb[0].mxu0 %v792
      %v909 = vpop.f32.mrb[0].mxu0
      %v910 = vadd.f32 0.0, %v909
      %v911 = vpop.f32.mrb[0].mxu0
      %v912 = vpop.f32.mrb[0].mxu0
      %v913 = vadd.f32 0.0, %v912
      %v914 = vpop.f32.mrb[0].mxu0
      %915 = vmatprep.mubr.bf16.mxu0 0
      %916 = vmatmul.mubr.bf16.gmra.mrb[0].mxu0 %v793
      %v917 = vpop.f32.mrb[0].mxu0
      %v918 = vadd.f32 0.0, %v917
      %v919 = vpop.f32.mrb[0].mxu0
      %v920 = vpop.f32.mrb[0].mxu0
      %v921 = vadd.f32 0.0, %v920
      %v922 = vpop.f32.mrb[0].mxu0
      %923 = vdwg.mxu0
      %v924 = vadd.f32 %v752, %v894
      %v925 = vadd.f32 %v755, %v897
      %v926 = vadd.f32 %v760, %v902
      %v927 = vadd.f32 %v763, %v905
      %v928 = vadd.f32 %v768, %v910
      %v929 = vadd.f32 %v771, %v913
      %v930 = vadd.f32 %v776, %v918
      %v931 = vadd.f32 %v779, %v921
      %v932 = vld [vmem:[%s490] sm:$0xff]
      %v933 = vld [vmem:[%s490 + $0x10] sm:$0xff]
      %v934 = vld [vmem:[%s490 + $0x20] sm:$0xff]
      %v935 = vld [vmem:[%s490 + $0x30] sm:$0xff]
      %v936 = vld [vmem:[%s490 + $0x40] sm:$0xff]
      %v937 = vld [vmem:[%s490 + $0x50] sm:$0xff]
      %v938 = vld [vmem:[%s490 + $0x60] sm:$0xff]
      %v939 = vld [vmem:[%s490 + $0x70] sm:$0xff]
      %v940 = vpack.c.bf16 %v933, %v932
      %v941 = vpack.c.bf16 %v935, %v934
      %v942 = vpack.c.bf16 %v937, %v936
      %v943 = vpack.c.bf16 %v939, %v938
      %s944 = scalar_lea.vmem %s3, 192
      %v945 = vld [vmem:[%s944] sm:$0xf]
      %v946 = vld [vmem:[%s944 + $0x4] sm:$0xf]
      %v947 = vld [vmem:[%s944 + $0x8] sm:$0xf]
      %v948 = vld [vmem:[%s944 + $0xc] sm:$0xf]
      %v949 = vld [vmem:[%s944 + $0x10] sm:$0xf]
      %v950 = vld [vmem:[%s944 + $0x14] sm:$0xf]
      %v951 = vld [vmem:[%s944 + $0x18] sm:$0xf]
      %v952 = vld [vmem:[%s944 + $0x1c] sm:$0xf]
      %v953 = vld [vmem:[%s944 + $0x20] sm:$0xf]
      %v954 = vld [vmem:[%s944 + $0x24] sm:$0xf]
      %v955 = vld [vmem:[%s944 + $0x28] sm:$0xf]
      %v956 = vld [vmem:[%s944 + $0x2c] sm:$0xf]
      %v957 = vld [vmem:[%s944 + $0x30] sm:$0xf]
      %v958 = vld [vmem:[%s944 + $0x34] sm:$0xf]
      %v959 = vld [vmem:[%s944 + $0x38] sm:$0xf]
      %v960 = vld [vmem:[%s944 + $0x3c] sm:$0xf]
      %v977 = vunpack.c.l.b16 %v945
      %v978 = vunpack.c.l.b16 %v946
      %v979 = vunpack.c.l.b16 %v947
      %v980 = vunpack.c.l.b16 %v948
      %v981 = vunpack.c.l.b16 %v949
      %v982 = vunpack.c.l.b16 %v950
      %v983 = vunpack.c.l.b16 %v951
      %v984 = vunpack.c.l.b16 %v952
      %v985 = vunpack.c.l.b16 %v953
      %v986 = vunpack.c.l.b16 %v954
      %v987 = vunpack.c.l.b16 %v955
      %v988 = vunpack.c.l.b16 %v956
      %v989 = vunpack.c.l.b16 %v957
      %v990 = vunpack.c.l.b16 %v958
      %v991 = vunpack.c.l.b16 %v959
      %v992 = vunpack.c.l.b16 %v960
      %v993 = vpack.c.b16 %v978, %v977
      %v994 = vpack.c.b16 %v980, %v979
      %v995 = vpack.c.b16 %v982, %v981
      %v996 = vpack.c.b16 %v984, %v983
      %v997 = vpack.c.b16 %v986, %v985
      %v998 = vpack.c.b16 %v988, %v987
      %v999 = vpack.c.b16 %v990, %v989
      %v1000 = vpack.c.b16 %v992, %v991
      %1009 = vmatprep.subr.bf16.mxu0 0
      %1010 = vmatpush1.bf16.msra.mxu0 %v993
      %1011 = vmatprep.subr.bf16.mxu0 0
      %1012 = vmatpush1.bf16.msra.mxu0 %v994
      %1013 = vmatprep.subr.bf16.mxu0 0
      %1014 = vmatpush1.bf16.msra.mxu0 %v995
      %1015 = vmatprep.subr.bf16.mxu0 0
      %1016 = vmatpush1.bf16.msra.mxu0 %v996
      %1017 = vmatprep.subr.bf16.mxu0 0
      %1018 = vmatpush1.bf16.msra.mxu0 %v997
      %1019 = vmatprep.subr.bf16.mxu0 0
      %1020 = vmatpush1.bf16.msra.mxu0 %v998
      %1021 = vmatprep.subr.bf16.mxu0 0
      %1022 = vmatpush1.bf16.msra.mxu0 %v999
      %1023 = vmatprep.subr.bf16.mxu0 0
      %1024 = vmatpush1.bf16.msra.mxu0 %v1000
      %1025 = vmatprep.subr.bf16.mxu0 0
      %1026 = vmatpush1.bf16.msra.mxu0 0
      %1027 = vmatprep.subr.bf16.mxu0 0
      %1028 = vmatpush1.bf16.msra.mxu0 0
      %1029 = vmatprep.subr.bf16.mxu0 0
      %1030 = vmatpush1.bf16.msra.mxu0 0
      %1031 = vmatprep.subr.bf16.mxu0 0
      %1032 = vmatpush1.bf16.msra.mxu0 0
      %1033 = vmatprep.subr.bf16.mxu0 0
      %1034 = vmatpush1.bf16.msra.mxu0 0
      %1035 = vmatprep.subr.bf16.mxu0 0
      %1036 = vmatpush1.bf16.msra.mxu0 0
      %1037 = vmatprep.subr.bf16.mxu0 0
      %1038 = vmatpush1.bf16.msra.mxu0 0
      %1039 = vmatprep.subr.bf16.mxu0 0
      %1040 = vmatpush1.bf16.msra.mxu0 0
      %1041 = vmatprep.mubr.bf16.mxu0 0
      %1042 = vmatmul.mubr.bf16.gmra.mrb[0].mxu0 %v940
      %v1043 = vpop.f32.mrb[0].mxu0
      %v1044 = vadd.f32 0.0, %v1043
      %v1045 = vpop.f32.mrb[0].mxu0
      %v1046 = vpop.f32.mrb[0].mxu0
      %v1047 = vadd.f32 0.0, %v1046
      %v1048 = vpop.f32.mrb[0].mxu0
      %1049 = vmatprep.mubr.bf16.mxu0 0
      %1050 = vmatmul.mubr.bf16.gmra.mrb[0].mxu0 %v941
      %v1051 = vpop.f32.mrb[0].mxu0
      %v1052 = vadd.f32 0.0, %v1051
      %v1053 = vpop.f32.mrb[0].mxu0
      %v1054 = vpop.f32.mrb[0].mxu0
      %v1055 = vadd.f32 0.0, %v1054
      %v1056 = vpop.f32.mrb[0].mxu0
      %1057 = vmatprep.mubr.bf16.mxu0 0
      %1058 = vmatmul.mubr.bf16.gmra.mrb[0].mxu0 %v942
      %v1059 = vpop.f32.mrb[0].mxu0
      %v1060 = vadd.f32 0.0, %v1059
      %v1061 = vpop.f32.mrb[0].mxu0
      %v1062 = vpop.f32.mrb[0].mxu0
      %v1063 = vadd.f32 0.0, %v1062
      %v1064 = vpop.f32.mrb[0].mxu0
      %1065 = vmatprep.mubr.bf16.mxu0 0
      %1066 = vmatmul.mubr.bf16.gmra.mrb[0].mxu0 %v943
      %v1067 = vpop.f32.mrb[0].mxu0
      %v1068 = vadd.f32 0.0, %v1067
      %v1069 = vpop.f32.mrb[0].mxu0
      %v1070 = vpop.f32.mrb[0].mxu0
      %v1071 = vadd.f32 0.0, %v1070
      %v1072 = vpop.f32.mrb[0].mxu0
      %1073 = vdwg.mxu0
      %v1074 = vadd.f32 %v924, %v1044
      %v1075 = vadd.f32 %v925, %v1047
      %v1076 = vadd.f32 %v926, %v1052
      %v1077 = vadd.f32 %v927, %v1055
      %v1078 = vadd.f32 %v928, %v1060
      %v1079 = vadd.f32 %v929, %v1063
      %v1080 = vadd.f32 %v930, %v1068
      %v1081 = vadd.f32 %v931, %v1071
      %v1082 = vld [vmem:[%s490 + $0x1] sm:$0xff]
      %v1083 = vld [vmem:[%s490 + $0x11] sm:$0xff]
      %v1084 = vld [vmem:[%s490 + $0x21] sm:$0xff]
      %v1085 = vld [vmem:[%s490 + $0x31] sm:$0xff]
      %v1086 = vld [vmem:[%s490 + $0x41] sm:$0xff]
      %v1087 = vld [vmem:[%s490 + $0x51] sm:$0xff]
      %v1088 = vld [vmem:[%s490 + $0x61] sm:$0xff]
      %v1089 = vld [vmem:[%s490 + $0x71] sm:$0xff]
      %v1090 = vpack.c.bf16 %v1083, %v1082
      %v1091 = vpack.c.bf16 %v1085, %v1084
      %v1092 = vpack.c.bf16 %v1087, %v1086
      %v1093 = vpack.c.bf16 %v1089, %v1088
      %s1094 = scalar_lea.vmem %s3, 256
      %v1095 = vld [vmem:[%s1094] sm:$0xf]
      %v1096 = vld [vmem:[%s1094 + $0x4] sm:$0xf]
      %v1097 = vld [vmem:[%s1094 + $0x8] sm:$0xf]
      %v1098 = vld [vmem:[%s1094 + $0xc] sm:$0xf]
      %v1099 = vld [vmem:[%s1094 + $0x10] sm:$0xf]
      %v1100 = vld [vmem:[%s1094 + $0x14] sm:$0xf]
      %v1101 = vld [vmem:[%s1094 + $0x18] sm:$0xf]
      %v1102 = vld [vmem:[%s1094 + $0x1c] sm:$0xf]
      %v1103 = vld [vmem:[%s1094 + $0x20] sm:$0xf]
      %v1104 = vld [vmem:[%s1094 + $0x24] sm:$0xf]
      %v1105 = vld [vmem:[%s1094 + $0x28] sm:$0xf]
      %v1106 = vld [vmem:[%s1094 + $0x2c] sm:$0xf]
      %v1107 = vld [vmem:[%s1094 + $0x30] sm:$0xf]
      %v1108 = vld [vmem:[%s1094 + $0x34] sm:$0xf]
      %v1109 = vld [vmem:[%s1094 + $0x38] sm:$0xf]
      %v1110 = vld [vmem:[%s1094 + $0x3c] sm:$0xf]
      %v1127 = vunpack.c.l.b16 %v1095
      %v1128 = vunpack.c.l.b16 %v1096
      %v1129 = vunpack.c.l.b16 %v1097
      %v1130 = vunpack.c.l.b16 %v1098
      %v1131 = vunpack.c.l.b16 %v1099
      %v1132 = vunpack.c.l.b16 %v1100
      %v1133 = vunpack.c.l.b16 %v1101
      %v1134 = vunpack.c.l.b16 %v1102
      %v1135 = vunpack.c.l.b16 %v1103
      %v1136 = vunpack.c.l.b16 %v1104
      %v1137 = vunpack.c.l.b16 %v1105
      %v1138 = vunpack.c.l.b16 %v1106
      %v1139 = vunpack.c.l.b16 %v1107
      %v1140 = vunpack.c.l.b16 %v1108
      %v1141 = vunpack.c.l.b16 %v1109
      %v1142 = vunpack.c.l.b16 %v1110
      %v1143 = vpack.c.b16 %v1128, %v1127
      %v1144 = vpack.c.b16 %v1130, %v1129
      %v1145 = vpack.c.b16 %v1132, %v1131
      %v1146 = vpack.c.b16 %v1134, %v1133
      %v1147 = vpack.c.b16 %v1136, %v1135
      %v1148 = vpack.c.b16 %v1138, %v1137
      %v1149 = vpack.c.b16 %v1140, %v1139
      %v1150 = vpack.c.b16 %v1142, %v1141
      %1159 = vmatprep.subr.bf16.mxu0 0
      %1160 = vmatpush1.bf16.msra.mxu0 %v1143
      %1161 = vmatprep.subr.bf16.mxu0 0
      %1162 = vmatpush1.bf16.msra.mxu0 %v1144
      %1163 = vmatprep.subr.bf16.mxu0 0
      %1164 = vmatpush1.bf16.msra.mxu0 %v1145
      %1165 = vmatprep.subr.bf16.mxu0 0
      %1166 = vmatpush1.bf16.msra.mxu0 %v1146
      %1167 = vmatprep.subr.bf16.mxu0 0
      %1168 = vmatpush1.bf16.msra.mxu0 %v1147
      %1169 = vmatprep.subr.bf16.mxu0 0
      %1170 = vmatpush1.bf16.msra.mxu0 %v1148
      %1171 = vmatprep.subr.bf16.mxu0 0
      %1172 = vmatpush1.bf16.msra.mxu0 %v1149
      %1173 = vmatprep.subr.bf16.mxu0 0
      %1174 = vmatpush1.bf16.msra.mxu0 %v1150
      %1175 = vmatprep.subr.bf16.mxu0 0
      %1176 = vmatpush1.bf16.msra.mxu0 0
      %1177 = vmatprep.subr.bf16.mxu0 0
      %1178 = vmatpush1.bf16.msra.mxu0 0
      %1179 = vmatprep.subr.bf16.mxu0 0
      %1180 = vmatpush1.bf16.msra.mxu0 0
      %1181 = vmatprep.subr.bf16.mxu0 0
      %1182 = vmatpush1.bf16.msra.mxu0 0
      %1183 = vmatprep.subr.bf16.mxu0 0
      %1184 = vmatpush1.bf16.msra.mxu0 0
      %1185 = vmatprep.subr.bf16.mxu0 0
      %1186 = vmatpush1.bf16.msra.mxu0 0
      %1187 = vmatprep.subr.bf16.mxu0 0
      %1188 = vmatpush1.bf16.msra.mxu0 0
      %1189 = vmatprep.subr.bf16.mxu0 0
      %1190 = vmatpush1.bf16.msra.mxu0 0
      %1191 = vmatprep.mubr.bf16.mxu0 0
      %1192 = vmatmul.mubr.bf16.gmra.mrb[0].mxu0 %v1090
      %v1193 = vpop.f32.mrb[0].mxu0
      %v1194 = vadd.f32 0.0, %v1193
      %v1195 = vpop.f32.mrb[0].mxu0
      %v1196 = vpop.f32.mrb[0].mxu0
      %v1197 = vadd.f32 0.0, %v1196
      %v1198 = vpop.f32.mrb[0].mxu0
      %1199 = vmatprep.mubr.bf16.mxu0 0
      %1200 = vmatmul.mubr.bf16.gmra.mrb[0].mxu0 %v1091
      %v1201 = vpop.f32.mrb[0].mxu0
      %v1202 = vadd.f32 0.0, %v1201
      %v1203 = vpop.f32.mrb[0].mxu0
      %v1204 = vpop.f32.mrb[0].mxu0
      %v1205 = vadd.f32 0.0, %v1204
      %v1206 = vpop.f32.mrb[0].mxu0
      %1207 = vmatprep.mubr.bf16.mxu0 0
      %1208 = vmatmul.mubr.bf16.gmra.mrb[0].mxu0 %v1092
      %v1209 = vpop.f32.mrb[0].mxu0
      %v1210 = vadd.f32 0.0, %v1209
      %v1211 = vpop.f32.mrb[0].mxu0
      %v1212 = vpop.f32.mrb[0].mxu0
      %v1213 = vadd.f32 0.0, %v1212
      %v1214 = vpop.f32.mrb[0].mxu0
      %1215 = vmatprep.mubr.bf16.mxu0 0
      %1216 = vmatmul.mubr.bf16.gmra.mrb[0].mxu0 %v1093
      %v1217 = vpop.f32.mrb[0].mxu0
      %v1218 = vadd.f32 0.0, %v1217
      %v1219 = vpop.f32.mrb[0].mxu0
      %v1220 = vpop.f32.mrb[0].mxu0
      %v1221 = vadd.f32 0.0, %v1220
      %v1222 = vpop.f32.mrb[0].mxu0
      %1223 = vdwg.mxu0
      %v1224 = vadd.f32 %v1074, %v1194
      %v1225 = vadd.f32 %v1075, %v1197
      %v1226 = vadd.f32 %v1076, %v1202
      %v1227 = vadd.f32 %v1077, %v1205
      %v1228 = vadd.f32 %v1078, %v1210
      %v1229 = vadd.f32 %v1079, %v1213
      %v1230 = vadd.f32 %v1080, %v1218
      %v1231 = vadd.f32 %v1081, %v1221
      %v1232 = vld [vmem:[%s490 + $0x2] sm:$0xff]
      %v1233 = vld [vmem:[%s490 + $0x12] sm:$0xff]
      %v1234 = vld [vmem:[%s490 + $0x22] sm:$0xff]
      %v1235 = vld [vmem:[%s490 + $0x32] sm:$0xff]
      %v1236 = vld [vmem:[%s490 + $0x42] sm:$0xff]
      %v1237 = vld [vmem:[%s490 + $0x52] sm:$0xff]
      %v1238 = vld [vmem:[%s490 + $0x62] sm:$0xff]
      %v1239 = vld [vmem:[%s490 + $0x72] sm:$0xff]
      %v1240 = vpack.c.bf16 %v1233, %v1232
      %v1241 = vpack.c.bf16 %v1235, %v1234
      %v1242 = vpack.c.bf16 %v1237, %v1236
      %v1243 = vpack.c.bf16 %v1239, %v1238
      %s1244 = scalar_lea.vmem %s3, 320
      %v1245 = vld [vmem:[%s1244] sm:$0xf]
      %v1246 = vld [vmem:[%s1244 + $0x4] sm:$0xf]
      %v1247 = vld [vmem:[%s1244 + $0x8] sm:$0xf]
      %v1248 = vld [vmem:[%s1244 + $0xc] sm:$0xf]
      %v1249 = vld [vmem:[%s1244 + $0x10] sm:$0xf]
      %v1250 = vld [vmem:[%s1244 + $0x14] sm:$0xf]
      %v1251 = vld [vmem:[%s1244 + $0x18] sm:$0xf]
      %v1252 = vld [vmem:[%s1244 + $0x1c] sm:$0xf]
      %v1253 = vld [vmem:[%s1244 + $0x20] sm:$0xf]
      %v1254 = vld [vmem:[%s1244 + $0x24] sm:$0xf]
      %v1255 = vld [vmem:[%s1244 + $0x28] sm:$0xf]
      %v1256 = vld [vmem:[%s1244 + $0x2c] sm:$0xf]
      %v1257 = vld [vmem:[%s1244 + $0x30] sm:$0xf]
      %v1258 = vld [vmem:[%s1244 + $0x34] sm:$0xf]
      %v1259 = vld [vmem:[%s1244 + $0x38] sm:$0xf]
      %v1260 = vld [vmem:[%s1244 + $0x3c] sm:$0xf]
      %v1277 = vunpack.c.l.b16 %v1245
      %v1278 = vunpack.c.l.b16 %v1246
      %v1279 = vunpack.c.l.b16 %v1247
      %v1280 = vunpack.c.l.b16 %v1248
      %v1281 = vunpack.c.l.b16 %v1249
      %v1282 = vunpack.c.l.b16 %v1250
      %v1283 = vunpack.c.l.b16 %v1251
      %v1284 = vunpack.c.l.b16 %v1252
      %v1285 = vunpack.c.l.b16 %v1253
      %v1286 = vunpack.c.l.b16 %v1254
      %v1287 = vunpack.c.l.b16 %v1255
      %v1288 = vunpack.c.l.b16 %v1256
      %v1289 = vunpack.c.l.b16 %v1257
      %v1290 = vunpack.c.l.b16 %v1258
      %v1291 = vunpack.c.l.b16 %v1259
      %v1292 = vunpack.c.l.b16 %v1260
      %v1293 = vpack.c.b16 %v1278, %v1277
      %v1294 = vpack.c.b16 %v1280, %v1279
      %v1295 = vpack.c.b16 %v1282, %v1281
      %v1296 = vpack.c.b16 %v1284, %v1283
      %v1297 = vpack.c.b16 %v1286, %v1285
      %v1298 = vpack.c.b16 %v1288, %v1287
      %v1299 = vpack.c.b16 %v1290, %v1289
      %v1300 = vpack.c.b16 %v1292, %v1291
      %1309 = vmatprep.subr.bf16.mxu0 0
      %1310 = vmatpush1.bf16.msra.mxu0 %v1293
      %1311 = vmatprep.subr.bf16.mxu0 0
      %1312 = vmatpush1.bf16.msra.mxu0 %v1294
      %1313 = vmatprep.subr.bf16.mxu0 0
      %1314 = vmatpush1.bf16.msra.mxu0 %v1295
      %1315 = vmatprep.subr.bf16.mxu0 0
      %1316 = vmatpush1.bf16.msra.mxu0 %v1296
      %1317 = vmatprep.subr.bf16.mxu0 0
      %1318 = vmatpush1.bf16.msra.mxu0 %v1297
      %1319 = vmatprep.subr.bf16.mxu0 0
      %1320 = vmatpush1.bf16.msra.mxu0 %v1298
      %1321 = vmatprep.subr.bf16.mxu0 0
      %1322 = vmatpush1.bf16.msra.mxu0 %v1299
      %1323 = vmatprep.subr.bf16.mxu0 0
      %1324 = vmatpush1.bf16.msra.mxu0 %v1300
      %1325 = vmatprep.subr.bf16.mxu0 0
      %1326 = vmatpush1.bf16.msra.mxu0 0
      %1327 = vmatprep.subr.bf16.mxu0 0
      %1328 = vmatpush1.bf16.msra.mxu0 0
      %1329 = vmatprep.subr.bf16.mxu0 0
      %1330 = vmatpush1.bf16.msra.mxu0 0
      %1331 = vmatprep.subr.bf16.mxu0 0
      %1332 = vmatpush1.bf16.msra.mxu0 0
      %1333 = vmatprep.subr.bf16.mxu0 0
      %1334 = vmatpush1.bf16.msra.mxu0 0
      %1335 = vmatprep.subr.bf16.mxu0 0
      %1336 = vmatpush1.bf16.msra.mxu0 0
      %1337 = vmatprep.subr.bf16.mxu0 0
      %1338 = vmatpush1.bf16.msra.mxu0 0
      %1339 = vmatprep.subr.bf16.mxu0 0
      %1340 = vmatpush1.bf16.msra.mxu0 0
      %1341 = vmatprep.mubr.bf16.mxu0 0
      %1342 = vmatmul.mubr.bf16.gmra.mrb[0].mxu0 %v1240
      %v1343 = vpop.f32.mrb[0].mxu0
      %v1344 = vadd.f32 0.0, %v1343
      %v1345 = vpop.f32.mrb[0].mxu0
      %v1346 = vpop.f32.mrb[0].mxu0
      %v1347 = vadd.f32 0.0, %v1346
      %v1348 = vpop.f32.mrb[0].mxu0
      %1349 = vmatprep.mubr.bf16.mxu0 0
      %1350 = vmatmul.mubr.bf16.gmra.mrb[0].mxu0 %v1241
      %v1351 = vpop.f32.mrb[0].mxu0
      %v1352 = vadd.f32 0.0, %v1351
      %v1353 = vpop.f32.mrb[0].mxu0
      %v1354 = vpop.f32.mrb[0].mxu0
      %v1355 = vadd.f32 0.0, %v1354
      %v1356 = vpop.f32.mrb[0].mxu0
      %1357 = vmatprep.mubr.bf16.mxu0 0
      %1358 = vmatmul.mubr.bf16.gmra.mrb[0].mxu0 %v1242
      %v1359 = vpop.f32.mrb[0].mxu0
      %v1360 = vadd.f32 0.0, %v1359
      %v1361 = vpop.f32.mrb[0].mxu0
      %v1362 = vpop.f32.mrb[0].mxu0
      %v1363 = vadd.f32 0.0, %v1362
      %v1364 = vpop.f32.mrb[0].mxu0
      %1365 = vmatprep.mubr.bf16.mxu0 0
      %1366 = vmatmul.mubr.bf16.gmra.mrb[0].mxu0 %v1243
      %v1367 = vpop.f32.mrb[0].mxu0
      %v1368 = vadd.f32 0.0, %v1367
      %v1369 = vpop.f32.mrb[0].mxu0
      %v1370 = vpop.f32.mrb[0].mxu0
      %v1371 = vadd.f32 0.0, %v1370
      %v1372 = vpop.f32.mrb[0].mxu0
      %1373 = vdwg.mxu0
      %v1374 = vadd.f32 %v1224, %v1344
      %v1375 = vadd.f32 %v1225, %v1347
      %v1376 = vadd.f32 %v1226, %v1352
      %v1377 = vadd.f32 %v1227, %v1355
      %v1378 = vadd.f32 %v1228, %v1360
      %v1379 = vadd.f32 %v1229, %v1363
      %v1380 = vadd.f32 %v1230, %v1368
      %v1381 = vadd.f32 %v1231, %v1371
      %s1382 = scalar_lea.vmem [#allocation2], 32
      %v1383 = vld [vmem:[%s1382] sm:$0xff]
      %v1384 = vld [vmem:[%s1382 + $0x10] sm:$0xff]
      %v1385 = vld [vmem:[%s1382 + $0x20] sm:$0xff]
      %v1386 = vld [vmem:[%s1382 + $0x30] sm:$0xff]
      %v1387 = vld [vmem:[%s1382 + $0x40] sm:$0xff]
      %v1388 = vld [vmem:[%s1382 + $0x50] sm:$0xff]
      %v1389 = vld [vmem:[%s1382 + $0x60] sm:$0xff]
      %v1390 = vld [vmem:[%s1382 + $0x70] sm:$0xff]
      %v1391 = vpack.c.bf16 %v1384, %v1383
      %v1392 = vpack.c.bf16 %v1386, %v1385
      %v1393 = vpack.c.bf16 %v1388, %v1387
      %v1394 = vpack.c.bf16 %v1390, %v1389
      %s1395 = scalar_lea.vmem %s3, 384
      %v1396 = vld [vmem:[%s1395] sm:$0xf]
      %v1397 = vld [vmem:[%s1395 + $0x4] sm:$0xf]
      %v1398 = vld [vmem:[%s1395 + $0x8] sm:$0xf]
      %v1399 = vld [vmem:[%s1395 + $0xc] sm:$0xf]
      %v1400 = vld [vmem:[%s1395 + $0x10] sm:$0xf]
      %v1401 = vld [vmem:[%s1395 + $0x14] sm:$0xf]
      %v1402 = vld [vmem:[%s1395 + $0x18] sm:$0xf]
      %v1403 = vld [vmem:[%s1395 + $0x1c] sm:$0xf]
      %v1404 = vld [vmem:[%s1395 + $0x20] sm:$0xf]
      %v1405 = vld [vmem:[%s1395 + $0x24] sm:$0xf]
      %v1406 = vld [vmem:[%s1395 + $0x28] sm:$0xf]
      %v1407 = vld [vmem:[%s1395 + $0x2c] sm:$0xf]
      %v1408 = vld [vmem:[%s1395 + $0x30] sm:$0xf]
      %v1409 = vld [vmem:[%s1395 + $0x34] sm:$0xf]
      %v1410 = vld [vmem:[%s1395 + $0x38] sm:$0xf]
      %v1411 = vld [vmem:[%s1395 + $0x3c] sm:$0xf]
      %v1428 = vunpack.c.l.b16 %v1396
      %v1429 = vunpack.c.l.b16 %v1397
      %v1430 = vunpack.c.l.b16 %v1398
      %v1431 = vunpack.c.l.b16 %v1399
      %v1432 = vunpack.c.l.b16 %v1400
      %v1433 = vunpack.c.l.b16 %v1401
      %v1434 = vunpack.c.l.b16 %v1402
      %v1435 = vunpack.c.l.b16 %v1403
      %v1436 = vunpack.c.l.b16 %v1404
      %v1437 = vunpack.c.l.b16 %v1405
      %v1438 = vunpack.c.l.b16 %v1406
      %v1439 = vunpack.c.l.b16 %v1407
      %v1440 = vunpack.c.l.b16 %v1408
      %v1441 = vunpack.c.l.b16 %v1409
      %v1442 = vunpack.c.l.b16 %v1410
      %v1443 = vunpack.c.l.b16 %v1411
      %v1444 = vpack.c.b16 %v1429, %v1428
      %v1445 = vpack.c.b16 %v1431, %v1430
      %v1446 = vpack.c.b16 %v1433, %v1432
      %v1447 = vpack.c.b16 %v1435, %v1434
      %v1448 = vpack.c.b16 %v1437, %v1436
      %v1449 = vpack.c.b16 %v1439, %v1438
      %v1450 = vpack.c.b16 %v1441, %v1440
      %v1451 = vpack.c.b16 %v1443, %v1442
      %1460 = vmatprep.subr.bf16.mxu0 0
      %1461 = vmatpush1.bf16.msra.mxu0 %v1444
      %1462 = vmatprep.subr.bf16.mxu0 0
      %1463 = vmatpush1.bf16.msra.mxu0 %v1445
      %1464 = vmatprep.subr.bf16.mxu0 0
      %1465 = vmatpush1.bf16.msra.mxu0 %v1446
      %1466 = vmatprep.subr.bf16.mxu0 0
      %1467 = vmatpush1.bf16.msra.mxu0 %v1447
      %1468 = vmatprep.subr.bf16.mxu0 0
      %1469 = vmatpush1.bf16.msra.mxu0 %v1448
      %1470 = vmatprep.subr.bf16.mxu0 0
      %1471 = vmatpush1.bf16.msra.mxu0 %v1449
      %1472 = vmatprep.subr.bf16.mxu0 0
      %1473 = vmatpush1.bf16.msra.mxu0 %v1450
      %1474 = vmatprep.subr.bf16.mxu0 0
      %1475 = vmatpush1.bf16.msra.mxu0 %v1451
      %1476 = vmatprep.subr.bf16.mxu0 0
      %1477 = vmatpush1.bf16.msra.mxu0 0
      %1478 = vmatprep.subr.bf16.mxu0 0
      %1479 = vmatpush1.bf16.msra.mxu0 0
      %1480 = vmatprep.subr.bf16.mxu0 0
      %1481 = vmatpush1.bf16.msra.mxu0 0
      %1482 = vmatprep.subr.bf16.mxu0 0
      %1483 = vmatpush1.bf16.msra.mxu0 0
      %1484 = vmatprep.subr.bf16.mxu0 0
      %1485 = vmatpush1.bf16.msra.mxu0 0
      %1486 = vmatprep.subr.bf16.mxu0 0
      %1487 = vmatpush1.bf16.msra.mxu0 0
      %1488 = vmatprep.subr.bf16.mxu0 0
      %1489 = vmatpush1.bf16.msra.mxu0 0
      %1490 = vmatprep.subr.bf16.mxu0 0
      %1491 = vmatpush1.bf16.msra.mxu0 0
      %1492 = vmatprep.mubr.bf16.mxu0 0
      %1493 = vmatmul.mubr.bf16.gmra.mrb[0].mxu0 %v1391
      %v1494 = vpop.f32.mrb[0].mxu0
      %v1495 = vadd.f32 0.0, %v1494
      %v1496 = vpop.f32.mrb[0].mxu0
      %v1497 = vpop.f32.mrb[0].mxu0
      %v1498 = vadd.f32 0.0, %v1497
      %v1499 = vpop.f32.mrb[0].mxu0
      %1500 = vmatprep.mubr.bf16.mxu0 0
      %1501 = vmatmul.mubr.bf16.gmra.mrb[0].mxu0 %v1392
      %v1502 = vpop.f32.mrb[0].mxu0
      %v1503 = vadd.f32 0.0, %v1502
      %v1504 = vpop.f32.mrb[0].mxu0
      %v1505 = vpop.f32.mrb[0].mxu0
      %v1506 = vadd.f32 0.0, %v1505
      %v1507 = vpop.f32.mrb[0].mxu0
      %1508 = vmatprep.mubr.bf16.mxu0 0
      %1509 = vmatmul.mubr.bf16.gmra.mrb[0].mxu0 %v1393
      %v1510 = vpop.f32.mrb[0].mxu0
      %v1511 = vadd.f32 0.0, %v1510
      %v1512 = vpop.f32.mrb[0].mxu0
      %v1513 = vpop.f32.mrb[0].mxu0
      %v1514 = vadd.f32 0.0, %v1513
      %v1515 = vpop.f32.mrb[0].mxu0
      %1516 = vmatprep.mubr.bf16.mxu0 0
      %1517 = vmatmul.mubr.bf16.gmra.mrb[0].mxu0 %v1394
      %v1518 = vpop.f32.mrb[0].mxu0
      %v1519 = vadd.f32 0.0, %v1518
      %v1520 = vpop.f32.mrb[0].mxu0
      %v1521 = vpop.f32.mrb[0].mxu0
      %v1522 = vadd.f32 0.0, %v1521
      %v1523 = vpop.f32.mrb[0].mxu0
      %1524 = vdwg.mxu0
      %v1525 = vadd.f32 %v1374, %v1495
      %v1526 = vadd.f32 %v1375, %v1498
      %v1527 = vadd.f32 %v1376, %v1503
      %v1528 = vadd.f32 %v1377, %v1506
      %v1529 = vadd.f32 %v1378, %v1511
      %v1530 = vadd.f32 %v1379, %v1514
      %v1531 = vadd.f32 %v1380, %v1519
      %v1532 = vadd.f32 %v1381, %v1522
      %v1533 = vld [vmem:[%s1382 + $0x1] sm:$0xff]
      %v1534 = vld [vmem:[%s1382 + $0x11] sm:$0xff]
      %v1535 = vld [vmem:[%s1382 + $0x21] sm:$0xff]
      %v1536 = vld [vmem:[%s1382 + $0x31] sm:$0xff]
      %v1537 = vld [vmem:[%s1382 + $0x41] sm:$0xff]
      %v1538 = vld [vmem:[%s1382 + $0x51] sm:$0xff]
      %v1539 = vld [vmem:[%s1382 + $0x61] sm:$0xff]
      %v1540 = vld [vmem:[%s1382 + $0x71] sm:$0xff]
      %v1541 = vpack.c.bf16 %v1534, %v1533
      %v1542 = vpack.c.bf16 %v1536, %v1535
      %v1543 = vpack.c.bf16 %v1538, %v1537
      %v1544 = vpack.c.bf16 %v1540, %v1539
      %s1545 = scalar_lea.vmem %s3, 448
      %v1546 = vld [vmem:[%s1545] sm:$0xf]
      %v1547 = vld [vmem:[%s1545 + $0x4] sm:$0xf]
      %v1548 = vld [vmem:[%s1545 + $0x8] sm:$0xf]
      %v1549 = vld [vmem:[%s1545 + $0xc] sm:$0xf]
      %v1550 = vld [vmem:[%s1545 + $0x10] sm:$0xf]
      %v1551 = vld [vmem:[%s1545 + $0x14] sm:$0xf]
      %v1552 = vld [vmem:[%s1545 + $0x18] sm:$0xf]
      %v1553 = vld [vmem:[%s1545 + $0x1c] sm:$0xf]
      %v1554 = vld [vmem:[%s1545 + $0x20] sm:$0xf]
      %v1555 = vld [vmem:[%s1545 + $0x24] sm:$0xf]
      %v1556 = vld [vmem:[%s1545 + $0x28] sm:$0xf]
      %v1557 = vld [vmem:[%s1545 + $0x2c] sm:$0xf]
      %v1558 = vld [vmem:[%s1545 + $0x30] sm:$0xf]
      %v1559 = vld [vmem:[%s1545 + $0x34] sm:$0xf]
      %v1560 = vld [vmem:[%s1545 + $0x38] sm:$0xf]
      %v1561 = vld [vmem:[%s1545 + $0x3c] sm:$0xf]
      %v1578 = vunpack.c.l.b16 %v1546
      %v1579 = vunpack.c.l.b16 %v1547
      %v1580 = vunpack.c.l.b16 %v1548
      %v1581 = vunpack.c.l.b16 %v1549
      %v1582 = vunpack.c.l.b16 %v1550
      %v1583 = vunpack.c.l.b16 %v1551
      %v1584 = vunpack.c.l.b16 %v1552
      %v1585 = vunpack.c.l.b16 %v1553
      %v1586 = vunpack.c.l.b16 %v1554
      %v1587 = vunpack.c.l.b16 %v1555
      %v1588 = vunpack.c.l.b16 %v1556
      %v1589 = vunpack.c.l.b16 %v1557
      %v1590 = vunpack.c.l.b16 %v1558
      %v1591 = vunpack.c.l.b16 %v1559
      %v1592 = vunpack.c.l.b16 %v1560
      %v1593 = vunpack.c.l.b16 %v1561
      %v1594 = vpack.c.b16 %v1579, %v1578
      %v1595 = vpack.c.b16 %v1581, %v1580
      %v1596 = vpack.c.b16 %v1583, %v1582
      %v1597 = vpack.c.b16 %v1585, %v1584
      %v1598 = vpack.c.b16 %v1587, %v1586
      %v1599 = vpack.c.b16 %v1589, %v1588
      %v1600 = vpack.c.b16 %v1591, %v1590
      %v1601 = vpack.c.b16 %v1593, %v1592
      %1610 = vmatprep.subr.bf16.mxu0 0
      %1611 = vmatpush1.bf16.msra.mxu0 %v1594
      %1612 = vmatprep.subr.bf16.mxu0 0
      %1613 = vmatpush1.bf16.msra.mxu0 %v1595
      %1614 = vmatprep.subr.bf16.mxu0 0
      %1615 = vmatpush1.bf16.msra.mxu0 %v1596
      %1616 = vmatprep.subr.bf16.mxu0 0
      %1617 = vmatpush1.bf16.msra.mxu0 %v1597
      %1618 = vmatprep.subr.bf16.mxu0 0
      %1619 = vmatpush1.bf16.msra.mxu0 %v1598
      %1620 = vmatprep.subr.bf16.mxu0 0
      %1621 = vmatpush1.bf16.msra.mxu0 %v1599
      %1622 = vmatprep.subr.bf16.mxu0 0
      %1623 = vmatpush1.bf16.msra.mxu0 %v1600
      %1624 = vmatprep.subr.bf16.mxu0 0
      %1625 = vmatpush1.bf16.msra.mxu0 %v1601
      %1626 = vmatprep.subr.bf16.mxu0 0
      %1627 = vmatpush1.bf16.msra.mxu0 0
      %1628 = vmatprep.subr.bf16.mxu0 0
      %1629 = vmatpush1.bf16.msra.mxu0 0
      %1630 = vmatprep.subr.bf16.mxu0 0
      %1631 = vmatpush1.bf16.msra.mxu0 0
      %1632 = vmatprep.subr.bf16.mxu0 0
      %1633 = vmatpush1.bf16.msra.mxu0 0
      %1634 = vmatprep.subr.bf16.mxu0 0
      %1635 = vmatpush1.bf16.msra.mxu0 0
      %1636 = vmatprep.subr.bf16.mxu0 0
      %1637 = vmatpush1.bf16.msra.mxu0 0
      %1638 = vmatprep.subr.bf16.mxu0 0
      %1639 = vmatpush1.bf16.msra.mxu0 0
      %1640 = vmatprep.subr.bf16.mxu0 0
      %1641 = vmatpush1.bf16.msra.mxu0 0
      %1642 = vmatprep.mubr.bf16.mxu0 0
      %1643 = vmatmul.mubr.bf16.gmra.mrb[0].mxu0 %v1541
      %v1644 = vpop.f32.mrb[0].mxu0
      %v1645 = vadd.f32 0.0, %v1644
      %v1646 = vpop.f32.mrb[0].mxu0
      %v1647 = vpop.f32.mrb[0].mxu0
      %v1648 = vadd.f32 0.0, %v1647
      %v1649 = vpop.f32.mrb[0].mxu0
      %1650 = vmatprep.mubr.bf16.mxu0 0
      %1651 = vmatmul.mubr.bf16.gmra.mrb[0].mxu0 %v1542
      %v1652 = vpop.f32.mrb[0].mxu0
      %v1653 = vadd.f32 0.0, %v1652
      %v1654 = vpop.f32.mrb[0].mxu0
      %v1655 = vpop.f32.mrb[0].mxu0
      %v1656 = vadd.f32 0.0, %v1655
      %v1657 = vpop.f32.mrb[0].mxu0
      %1658 = vmatprep.mubr.bf16.mxu0 0
      %1659 = vmatmul.mubr.bf16.gmra.mrb[0].mxu0 %v1543
      %v1660 = vpop.f32.mrb[0].mxu0
      %v1661 = vadd.f32 0.0, %v1660
      %v1662 = vpop.f32.mrb[0].mxu0
      %v1663 = vpop.f32.mrb[0].mxu0
      %v1664 = vadd.f32 0.0, %v1663
      %v1665 = vpop.f32.mrb[0].mxu0
      %1666 = vmatprep.mubr.bf16.mxu0 0
      %1667 = vmatmul.mubr.bf16.gmra.mrb[0].mxu0 %v1544
      %v1668 = vpop.f32.mrb[0].mxu0
      %v1669 = vadd.f32 0.0, %v1668
      %v1670 = vpop.f32.mrb[0].mxu0
      %v1671 = vpop.f32.mrb[0].mxu0
      %v1672 = vadd.f32 0.0, %v1671
      %v1673 = vpop.f32.mrb[0].mxu0
      %1674 = vdwg.mxu0
      %v1675 = vadd.f32 %v1525, %v1645
      %v1676 = vadd.f32 %v1526, %v1648
      %v1677 = vadd.f32 %v1527, %v1653
      %v1678 = vadd.f32 %v1528, %v1656
      %v1679 = vadd.f32 %v1529, %v1661
      %v1680 = vadd.f32 %v1530, %v1664
      %v1681 = vadd.f32 %v1531, %v1669
      %v1682 = vadd.f32 %v1532, %v1672
      %v1683 = vld [vmem:[%s1382 + $0x2] sm:$0xff]
      %v1684 = vld [vmem:[%s1382 + $0x12] sm:$0xff]
      %v1685 = vld [vmem:[%s1382 + $0x22] sm:$0xff]
      %v1686 = vld [vmem:[%s1382 + $0x32] sm:$0xff]
      %v1687 = vld [vmem:[%s1382 + $0x42] sm:$0xff]
      %v1688 = vld [vmem:[%s1382 + $0x52] sm:$0xff]
      %v1689 = vld [vmem:[%s1382 + $0x62] sm:$0xff]
      %v1690 = vld [vmem:[%s1382 + $0x72] sm:$0xff]
      %v1691 = vpack.c.bf16 %v1684, %v1683
      %v1692 = vpack.c.bf16 %v1686, %v1685
      %v1693 = vpack.c.bf16 %v1688, %v1687
      %v1694 = vpack.c.bf16 %v1690, %v1689
      %s1695 = scalar_lea.vmem %s3, 512
      %v1696 = vld [vmem:[%s1695] sm:$0xf]
      %v1697 = vld [vmem:[%s1695 + $0x4] sm:$0xf]
      %v1698 = vld [vmem:[%s1695 + $0x8] sm:$0xf]
      %v1699 = vld [vmem:[%s1695 + $0xc] sm:$0xf]
      %v1700 = vld [vmem:[%s1695 + $0x10] sm:$0xf]
      %v1701 = vld [vmem:[%s1695 + $0x14] sm:$0xf]
      %v1702 = vld [vmem:[%s1695 + $0x18] sm:$0xf]
      %v1703 = vld [vmem:[%s1695 + $0x1c] sm:$0xf]
      %v1704 = vld [vmem:[%s1695 + $0x20] sm:$0xf]
      %v1705 = vld [vmem:[%s1695 + $0x24] sm:$0xf]
      %v1706 = vld [vmem:[%s1695 + $0x28] sm:$0xf]
      %v1707 = vld [vmem:[%s1695 + $0x2c] sm:$0xf]
      %v1708 = vld [vmem:[%s1695 + $0x30] sm:$0xf]
      %v1709 = vld [vmem:[%s1695 + $0x34] sm:$0xf]
      %v1710 = vld [vmem:[%s1695 + $0x38] sm:$0xf]
      %v1711 = vld [vmem:[%s1695 + $0x3c] sm:$0xf]
      %v1728 = vunpack.c.l.b16 %v1696
      %v1729 = vunpack.c.l.b16 %v1697
      %v1730 = vunpack.c.l.b16 %v1698
      %v1731 = vunpack.c.l.b16 %v1699
      %v1732 = vunpack.c.l.b16 %v1700
      %v1733 = vunpack.c.l.b16 %v1701
      %v1734 = vunpack.c.l.b16 %v1702
      %v1735 = vunpack.c.l.b16 %v1703
      %v1736 = vunpack.c.l.b16 %v1704
      %v1737 = vunpack.c.l.b16 %v1705
      %v1738 = vunpack.c.l.b16 %v1706
      %v1739 = vunpack.c.l.b16 %v1707
      %v1740 = vunpack.c.l.b16 %v1708
      %v1741 = vunpack.c.l.b16 %v1709
      %v1742 = vunpack.c.l.b16 %v1710
      %v1743 = vunpack.c.l.b16 %v1711
      %v1744 = vpack.c.b16 %v1729, %v1728
      %v1745 = vpack.c.b16 %v1731, %v1730
      %v1746 = vpack.c.b16 %v1733, %v1732
      %v1747 = vpack.c.b16 %v1735, %v1734
      %v1748 = vpack.c.b16 %v1737, %v1736
      %v1749 = vpack.c.b16 %v1739, %v1738
      %v1750 = vpack.c.b16 %v1741, %v1740
      %v1751 = vpack.c.b16 %v1743, %v1742
      %1760 = vmatprep.subr.bf16.mxu0 0
      %1761 = vmatpush1.bf16.msra.mxu0 %v1744
      %1762 = vmatprep.subr.bf16.mxu0 0
      %1763 = vmatpush1.bf16.msra.mxu0 %v1745
      %1764 = vmatprep.subr.bf16.mxu0 0
      %1765 = vmatpush1.bf16.msra.mxu0 %v1746
      %1766 = vmatprep.subr.bf16.mxu0 0
      %1767 = vmatpush1.bf16.msra.mxu0 %v1747
      %1768 = vmatprep.subr.bf16.mxu0 0
      %1769 = vmatpush1.bf16.msra.mxu0 %v1748
      %1770 = vmatprep.subr.bf16.mxu0 0
      %1771 = vmatpush1.bf16.msra.mxu0 %v1749
      %1772 = vmatprep.subr.bf16.mxu0 0
      %1773 = vmatpush1.bf16.msra.mxu0 %v1750
      %1774 = vmatprep.subr.bf16.mxu0 0
      %1775 = vmatpush1.bf16.msra.mxu0 %v1751
      %1776 = vmatprep.subr.bf16.mxu0 0
      %1777 = vmatpush1.bf16.msra.mxu0 0
      %1778 = vmatprep.subr.bf16.mxu0 0
      %1779 = vmatpush1.bf16.msra.mxu0 0
      %1780 = vmatprep.subr.bf16.mxu0 0
      %1781 = vmatpush1.bf16.msra.mxu0 0
      %1782 = vmatprep.subr.bf16.mxu0 0
      %1783 = vmatpush1.bf16.msra.mxu0 0
      %1784 = vmatprep.subr.bf16.mxu0 0
      %1785 = vmatpush1.bf16.msra.mxu0 0
      %1786 = vmatprep.subr.bf16.mxu0 0
      %1787 = vmatpush1.bf16.msra.mxu0 0
      %1788 = vmatprep.subr.bf16.mxu0 0
      %1789 = vmatpush1.bf16.msra.mxu0 0
      %1790 = vmatprep.subr.bf16.mxu0 0
      %1791 = vmatpush1.bf16.msra.mxu0 0
      %1792 = vmatprep.mubr.bf16.mxu0 0
      %1793 = vmatmul.mubr.bf16.gmra.mrb[0].mxu0 %v1691
      %v1794 = vpop.f32.mrb[0].mxu0
      %v1795 = vadd.f32 0.0, %v1794
      %v1796 = vpop.f32.mrb[0].mxu0
      %v1797 = vpop.f32.mrb[0].mxu0
      %v1798 = vadd.f32 0.0, %v1797
      %v1799 = vpop.f32.mrb[0].mxu0
      %1800 = vmatprep.mubr.bf16.mxu0 0
      %1801 = vmatmul.mubr.bf16.gmra.mrb[0].mxu0 %v1692
      %v1802 = vpop.f32.mrb[0].mxu0
      %v1803 = vadd.f32 0.0, %v1802
      %v1804 = vpop.f32.mrb[0].mxu0
      %v1805 = vpop.f32.mrb[0].mxu0
      %v1806 = vadd.f32 0.0, %v1805
      %v1807 = vpop.f32.mrb[0].mxu0
      %1808 = vmatprep.mubr.bf16.mxu0 0
      %1809 = vmatmul.mubr.bf16.gmra.mrb[0].mxu0 %v1693
      %v1810 = vpop.f32.mrb[0].mxu0
      %v1811 = vadd.f32 0.0, %v1810
      %v1812 = vpop.f32.mrb[0].mxu0
      %v1813 = vpop.f32.mrb[0].mxu0
      %v1814 = vadd.f32 0.0, %v1813
      %v1815 = vpop.f32.mrb[0].mxu0
      %1816 = vmatprep.mubr.bf16.mxu0 0
      %1817 = vmatmul.mubr.bf16.gmra.mrb[0].mxu0 %v1694
      %v1818 = vpop.f32.mrb[0].mxu0
      %v1819 = vadd.f32 0.0, %v1818
      %v1820 = vpop.f32.mrb[0].mxu0
      %v1821 = vpop.f32.mrb[0].mxu0
      %v1822 = vadd.f32 0.0, %v1821
      %v1823 = vpop.f32.mrb[0].mxu0
      %1824 = vdwg.mxu0
      %v1825 = vadd.f32 %v1675, %v1795
      %v1826 = vadd.f32 %v1676, %v1798
      %v1827 = vadd.f32 %v1677, %v1803
      %v1828 = vadd.f32 %v1678, %v1806
      %v1829 = vadd.f32 %v1679, %v1811
      %v1830 = vadd.f32 %v1680, %v1814
      %v1831 = vadd.f32 %v1681, %v1819
      %v1832 = vadd.f32 %v1682, %v1822
      %v1833 = vld [vmem:[%s4] sm:$0x1]
      %v1835 = vlaneseq
      %v1836 = vshrl.u32 %v1835, 7
      %v1837 = vsub.s32 0, %v1836
      %v1838 = vrot.slane %v1833, %v1837
      %v1840 = vadd.f32 %v1825, %v1838
      %v1841 = vadd.f32 %v1826, %v1838
      %v1842 = vadd.f32 %v1827, %v1838
      %v1843 = vadd.f32 %v1828, %v1838
      %v1844 = vadd.f32 %v1829, %v1838
      %v1845 = vadd.f32 %v1830, %v1838
      %v1846 = vadd.f32 %v1831, %v1838
      %v1847 = vadd.f32 %v1832, %v1838
      %v1848 = vmax.f32 %v1840, 0.0
      %v1849 = vmax.f32 %v1841, 0.0
      %v1850 = vmax.f32 %v1842, 0.0
      %v1851 = vmax.f32 %v1843, 0.0
      %v1852 = vmax.f32 %v1844, 0.0
      %v1853 = vmax.f32 %v1845, 0.0
      %v1854 = vmax.f32 %v1846, 0.0
      %v1855 = vmax.f32 %v1847, 0.0
      %v1856 = vpack.c.bf16 %v1849, %v1848
      %v1857 = vpack.c.bf16 %v1851, %v1850
      %v1858 = vpack.c.bf16 %v1853, %v1852
      %v1859 = vpack.c.bf16 %v1855, %v1854
      %v1860 = vld [vmem:[%s5] sm:$0xf]
      %v1861 = vld [vmem:[%s5 + $0x4] sm:$0xf]
      %v1862 = vld [vmem:[%s5 + $0x8] sm:$0xf]
      %v1863 = vld [vmem:[%s5 + $0xc] sm:$0xf]
      %v1864 = vld [vmem:[%s5 + $0x10] sm:$0xf]
      %v1865 = vld [vmem:[%s5 + $0x14] sm:$0xf]
      %v1866 = vld [vmem:[%s5 + $0x18] sm:$0xf]
      %v1867 = vld [vmem:[%s5 + $0x1c] sm:$0xf]
      %v1868 = vld [vmem:[%s5 + $0x20] sm:$0xf]
      %v1869 = vld [vmem:[%s5 + $0x24] sm:$0xf]
      %v1870 = vld [vmem:[%s5 + $0x28] sm:$0xf]
      %v1871 = vld [vmem:[%s5 + $0x2c] sm:$0xf]
      %v1872 = vld [vmem:[%s5 + $0x30] sm:$0xf]
      %v1873 = vld [vmem:[%s5 + $0x34] sm:$0xf]
      %v1874 = vld [vmem:[%s5 + $0x38] sm:$0xf]
      %v1875 = vld [vmem:[%s5 + $0x3c] sm:$0xf]
      %v1876 = vld [vmem:[%s6] sm:$0x1]
      %v1878 = vlaneseq
      %v1879 = vshrl.u32 %v1878, 7
      %v1880 = vsub.s32 0, %v1879
      %v1881 = vrot.slane %v1876, %v1880
      %v1899 = vunpack.c.l.b16 %v1860
      %v1900 = vunpack.c.l.b16 %v1861
      %v1901 = vunpack.c.l.b16 %v1862
      %v1902 = vunpack.c.l.b16 %v1863
      %v1903 = vunpack.c.l.b16 %v1864
      %v1904 = vunpack.c.l.b16 %v1865
      %v1905 = vunpack.c.l.b16 %v1866
      %v1906 = vunpack.c.l.b16 %v1867
      %v1907 = vunpack.c.l.b16 %v1868
      %v1908 = vunpack.c.l.b16 %v1869
      %v1909 = vunpack.c.l.b16 %v1870
      %v1910 = vunpack.c.l.b16 %v1871
      %v1911 = vunpack.c.l.b16 %v1872
      %v1912 = vunpack.c.l.b16 %v1873
      %v1913 = vunpack.c.l.b16 %v1874
      %v1914 = vunpack.c.l.b16 %v1875
      %v1915 = vpack.c.b16 %v1900, %v1899
      %v1916 = vpack.c.b16 %v1902, %v1901
      %v1917 = vpack.c.b16 %v1904, %v1903
      %v1918 = vpack.c.b16 %v1906, %v1905
      %v1919 = vpack.c.b16 %v1908, %v1907
      %v1920 = vpack.c.b16 %v1910, %v1909
      %v1921 = vpack.c.b16 %v1912, %v1911
      %v1922 = vpack.c.b16 %v1914, %v1913
      %1931 = vmatprep.subr.bf16.mxu0 0
      %1932 = vmatpush1.bf16.msra.mxu0 %v1915
      %1933 = vmatprep.subr.bf16.mxu0 0
      %1934 = vmatpush1.bf16.msra.mxu0 %v1916
      %1935 = vmatprep.subr.bf16.mxu0 0
      %1936 = vmatpush1.bf16.msra.mxu0 %v1917
      %1937 = vmatprep.subr.bf16.mxu0 0
      %1938 = vmatpush1.bf16.msra.mxu0 %v1918
      %1939 = vmatprep.subr.bf16.mxu0 0
      %1940 = vmatpush1.bf16.msra.mxu0 %v1919
      %1941 = vmatprep.subr.bf16.mxu0 0
      %1942 = vmatpush1.bf16.msra.mxu0 %v1920
      %1943 = vmatprep.subr.bf16.mxu0 0
      %1944 = vmatpush1.bf16.msra.mxu0 %v1921
      %1945 = vmatprep.subr.bf16.mxu0 0
      %1946 = vmatpush1.bf16.msra.mxu0 %v1922
      %1947 = vmatprep.subr.bf16.mxu0 0
      %1948 = vmatpush1.bf16.msra.mxu0 0
      %1949 = vmatprep.subr.bf16.mxu0 0
      %1950 = vmatpush1.bf16.msra.mxu0 0
      %1951 = vmatprep.subr.bf16.mxu0 0
      %1952 = vmatpush1.bf16.msra.mxu0 0
      %1953 = vmatprep.subr.bf16.mxu0 0
      %1954 = vmatpush1.bf16.msra.mxu0 0
      %1955 = vmatprep.subr.bf16.mxu0 0
      %1956 = vmatpush1.bf16.msra.mxu0 0
      %1957 = vmatprep.subr.bf16.mxu0 0
      %1958 = vmatpush1.bf16.msra.mxu0 0
      %1959 = vmatprep.subr.bf16.mxu0 0
      %1960 = vmatpush1.bf16.msra.mxu0 0
      %1961 = vmatprep.subr.bf16.mxu0 0
      %1962 = vmatpush1.bf16.msra.mxu0 0
      %1963 = vmatprep.mubr.bf16.mxu0 0
      %1964 = vmatmul.mubr.bf16.gmra.mrb[0].mxu0 %v1856
      %v1965 = vpop.f32.mrb[0].mxu0
      %v1966 = vadd.f32 %v1881, %v1965
      %v1967 = vpop.f32.mrb[0].mxu0
      %v1968 = vpop.f32.mrb[0].mxu0
      %v1969 = vadd.f32 %v1881, %v1968
      %v1970 = vpop.f32.mrb[0].mxu0
      %1971 = vmatprep.mubr.bf16.mxu0 0
      %1972 = vmatmul.mubr.bf16.gmra.mrb[0].mxu0 %v1857
      %v1973 = vpop.f32.mrb[0].mxu0
      %v1974 = vadd.f32 %v1881, %v1973
      %v1975 = vpop.f32.mrb[0].mxu0
      %v1976 = vpop.f32.mrb[0].mxu0
      %v1977 = vadd.f32 %v1881, %v1976
      %v1978 = vpop.f32.mrb[0].mxu0
      %1979 = vmatprep.mubr.bf16.mxu0 0
      %1980 = vmatmul.mubr.bf16.gmra.mrb[0].mxu0 %v1858
      %v1981 = vpop.f32.mrb[0].mxu0
      %v1982 = vadd.f32 %v1881, %v1981
      %v1983 = vpop.f32.mrb[0].mxu0
      %v1984 = vpop.f32.mrb[0].mxu0
      %v1985 = vadd.f32 %v1881, %v1984
      %v1986 = vpop.f32.mrb[0].mxu0
      %1987 = vmatprep.mubr.bf16.mxu0 0
      %1988 = vmatmul.mubr.bf16.gmra.mrb[0].mxu0 %v1859
      %v1989 = vpop.f32.mrb[0].mxu0
      %v1990 = vadd.f32 %v1881, %v1989
      %v1991 = vpop.f32.mrb[0].mxu0
      %v1992 = vpop.f32.mrb[0].mxu0
      %v1993 = vadd.f32 %v1881, %v1992
      %v1994 = vpop.f32.mrb[0].mxu0
      %1995 = vdwg.mxu0
      %1996 = vst [vmem:[%s419] sm:$0xff] %v1966
      %1997 = vst [vmem:[%s419 + $0x8] sm:$0xff] %v1969
      %1998 = vst [vmem:[%s419 + $0x10] sm:$0xff] %v1974
      %1999 = vst [vmem:[%s419 + $0x18] sm:$0xff] %v1977
      %2000 = vst [vmem:[%s419 + $0x20] sm:$0xff] %v1982
      %2001 = vst [vmem:[%s419 + $0x28] sm:$0xff] %v1985
      %2002 = vst [vmem:[%s419 + $0x30] sm:$0xff] %v1990
      %2003 = vst [vmem:[%s419 + $0x38] sm:$0xff] %v1993
      %v2004 = vld [vmem:[%s7] sm:$0xf]
      %v2005 = vld [vmem:[%s7 + $0x4] sm:$0xf]
      %v2006 = vld [vmem:[%s7 + $0x8] sm:$0xf]
      %v2007 = vld [vmem:[%s7 + $0xc] sm:$0xf]
      %v2008 = vld [vmem:[%s7 + $0x10] sm:$0xf]
      %v2009 = vld [vmem:[%s7 + $0x14] sm:$0xf]
      %v2010 = vld [vmem:[%s7 + $0x18] sm:$0xf]
      %v2011 = vld [vmem:[%s7 + $0x1c] sm:$0xf]
      %v2012 = vld [vmem:[%s7 + $0x20] sm:$0xf]
      %v2013 = vld [vmem:[%s7 + $0x24] sm:$0xf]
      %v2014 = vld [vmem:[%s7 + $0x28] sm:$0xf]
      %v2015 = vld [vmem:[%s7 + $0x2c] sm:$0xf]
      %v2016 = vld [vmem:[%s7 + $0x30] sm:$0xf]
      %v2017 = vld [vmem:[%s7 + $0x34] sm:$0xf]
      %v2018 = vld [vmem:[%s7 + $0x38] sm:$0xf]
      %v2019 = vld [vmem:[%s7 + $0x3c] sm:$0xf]
      %v2020 = vld [vmem:[%s8] sm:$0x1]
      %v2022 = vlaneseq
      %v2023 = vshrl.u32 %v2022, 7
      %v2024 = vsub.s32 0, %v2023
      %v2025 = vrot.slane %v2020, %v2024
      %v2035 = vunpack.c.l.b16 %v424
      %v2036 = vunpack.c.l.b16 %v425
      %v2037 = vunpack.c.l.b16 %v426
      %v2038 = vunpack.c.l.b16 %v427
      %v2039 = vunpack.c.l.b16 %v428
      %v2040 = vunpack.c.l.b16 %v429
      %v2041 = vunpack.c.l.b16 %v430
      %v2042 = vunpack.c.l.b16 %v431
      %v2043 = vpack.c.b16 %v2036, %v2035
      %v2044 = vpack.c.b16 %v2038, %v2037
      %v2045 = vpack.c.b16 %v2040, %v2039
      %v2046 = vpack.c.b16 %v2042, %v2041
      %v2067 = vunpack.c.l.b16 %v2004
      %v2068 = vunpack.c.l.b16 %v2005
      %v2069 = vunpack.c.l.b16 %v2006
      %v2070 = vunpack.c.l.b16 %v2007
      %v2071 = vunpack.c.l.b16 %v2008
      %v2072 = vunpack.c.l.b16 %v2009
      %v2073 = vunpack.c.l.b16 %v2010
      %v2074 = vunpack.c.l.b16 %v2011
      %v2075 = vunpack.c.l.b16 %v2012
      %v2076 = vunpack.c.l.b16 %v2013
      %v2077 = vunpack.c.l.b16 %v2014
      %v2078 = vunpack.c.l.b16 %v2015
      %v2079 = vunpack.c.l.b16 %v2016
      %v2080 = vunpack.c.l.b16 %v2017
      %v2081 = vunpack.c.l.b16 %v2018
      %v2082 = vunpack.c.l.b16 %v2019
      %v2083 = vpack.c.b16 %v2068, %v2067
      %v2084 = vpack.c.b16 %v2070, %v2069
      %v2085 = vpack.c.b16 %v2072, %v2071
      %v2086 = vpack.c.b16 %v2074, %v2073
      %v2087 = vpack.c.b16 %v2076, %v2075
      %v2088 = vpack.c.b16 %v2078, %v2077
      %v2089 = vpack.c.b16 %v2080, %v2079
      %v2090 = vpack.c.b16 %v2082, %v2081
      %2099 = vmatprep.subr.bf16.mxu0 0
      %2100 = vmatpush1.bf16.msra.mxu0 %v2083
      %2101 = vmatprep.subr.bf16.mxu0 0
      %2102 = vmatpush1.bf16.msra.mxu0 %v2084
      %2103 = vmatprep.subr.bf16.mxu0 0
      %2104 = vmatpush1.bf16.msra.mxu0 %v2085
      %2105 = vmatprep.subr.bf16.mxu0 0
      %2106 = vmatpush1.bf16.msra.mxu0 %v2086
      %2107 = vmatprep.subr.bf16.mxu0 0
      %2108 = vmatpush1.bf16.msra.mxu0 %v2087
      %2109 = vmatprep.subr.bf16.mxu0 0
      %2110 = vmatpush1.bf16.msra.mxu0 %v2088
      %2111 = vmatprep.subr.bf16.mxu0 0
      %2112 = vmatpush1.bf16.msra.mxu0 %v2089
      %2113 = vmatprep.subr.bf16.mxu0 0
      %2114 = vmatpush1.bf16.msra.mxu0 %v2090
      %2115 = vmatprep.subr.bf16.mxu0 0
      %2116 = vmatpush1.bf16.msra.mxu0 0
      %2117 = vmatprep.subr.bf16.mxu0 0
      %2118 = vmatpush1.bf16.msra.mxu0 0
      %2119 = vmatprep.subr.bf16.mxu0 0
      %2120 = vmatpush1.bf16.msra.mxu0 0
      %2121 = vmatprep.subr.bf16.mxu0 0
      %2122 = vmatpush1.bf16.msra.mxu0 0
      %2123 = vmatprep.subr.bf16.mxu0 0
      %2124 = vmatpush1.bf16.msra.mxu0 0
      %2125 = vmatprep.subr.bf16.mxu0 0
      %2126 = vmatpush1.bf16.msra.mxu0 0
      %2127 = vmatprep.subr.bf16.mxu0 0
      %2128 = vmatpush1.bf16.msra.mxu0 0
      %2129 = vmatprep.subr.bf16.mxu0 0
      %2130 = vmatpush1.bf16.msra.mxu0 0
      %2131 = vmatprep.mubr.bf16.mxu0 0
      %2132 = vmatmul.mubr.bf16.gmra.mrb[0].mxu0 %v2043
      %v2133 = vpop.f32.mrb[0].mxu0
      %v2134 = vadd.f32 %v2025, %v2133
      %v2135 = vpop.f32.mrb[0].mxu0
      %v2136 = vpop.f32.mrb[0].mxu0
      %v2137 = vadd.f32 %v2025, %v2136
      %v2138 = vpop.f32.mrb[0].mxu0
      %2139 = vmatprep.mubr.bf16.mxu0 0
      %2140 = vmatmul.mubr.bf16.gmra.mrb[0].mxu0 %v2044
      %v2141 = vpop.f32.mrb[0].mxu0
      %v2142 = vadd.f32 %v2025, %v2141
      %v2143 = vpop.f32.mrb[0].mxu0
      %v2144 = vpop.f32.mrb[0].mxu0
      %v2145 = vadd.f32 %v2025, %v2144
      %v2146 = vpop.f32.mrb[0].mxu0
      %2147 = vmatprep.mubr.bf16.mxu0 0
      %2148 = vmatmul.mubr.bf16.gmra.mrb[0].mxu0 %v2045
      %v2149 = vpop.f32.mrb[0].mxu0
      %v2150 = vadd.f32 %v2025, %v2149
      %v2151 = vpop.f32.mrb[0].mxu0
      %v2152 = vpop.f32.mrb[0].mxu0
      %v2153 = vadd.f32 %v2025, %v2152
      %v2154 = vpop.f32.mrb[0].mxu0
      %2155 = vmatprep.mubr.bf16.mxu0 0
      %2156 = vmatmul.mubr.bf16.gmra.mrb[0].mxu0 %v2046
      %v2157 = vpop.f32.mrb[0].mxu0
      %v2158 = vadd.f32 %v2025, %v2157
      %v2159 = vpop.f32.mrb[0].mxu0
      %v2160 = vpop.f32.mrb[0].mxu0
      %v2161 = vadd.f32 %v2025, %v2160
      %v2162 = vpop.f32.mrb[0].mxu0
      %2163 = vdwg.mxu0
      %v2164 = vmax.f32 %v2134, 0.0
      %v2165 = vmax.f32 %v2137, 0.0
      %v2166 = vmax.f32 %v2142, 0.0
      %v2167 = vmax.f32 %v2145, 0.0
      %v2168 = vmax.f32 %v2150, 0.0
      %v2169 = vmax.f32 %v2153, 0.0
      %v2170 = vmax.f32 %v2158, 0.0
      %v2171 = vmax.f32 %v2161, 0.0
      %v2172 = vadd.f32 %v2164, %v2165
      %v2173 = vadd.f32 %v2172, %v2166
      %v2174 = vadd.f32 %v2173, %v2167
      %v2175 = vadd.f32 %v2174, %v2168
      %v2176 = vadd.f32 %v2175, %v2169
      %v2177 = vadd.f32 %v2176, %v2170
      %v2178 = vadd.f32 %v2177, %v2171
      %v2179 = vrot.slane %v2178, 4
      %v2180 = vadd.f32 %v2178, %v2179
      %v2181 = vrot.slane %v2180, 2
      %v2182 = vadd.f32 %v2180, %v2181
      %v2183 = vrot.slane %v2182, 1
      %v2184 = vadd.f32 %v2182, %v2183
      %v2185 = vmul.f32 %v2184, 0.015625
      %v2186 = vpack.c.bf16 %v2185, %v2185
      %v2187 = vld [vmem:[%s9] sm:$0xf]
      %v2188 = vld [vmem:[%s9 + $0x4] sm:$0xf]
      %v2189 = vld [vmem:[%s9 + $0x8] sm:$0xf]
      %v2190 = vld [vmem:[%s9 + $0xc] sm:$0xf]
      %v2191 = vld [vmem:[%s9 + $0x10] sm:$0xf]
      %v2192 = vld [vmem:[%s9 + $0x14] sm:$0xf]
      %v2193 = vld [vmem:[%s9 + $0x18] sm:$0xf]
      %v2194 = vld [vmem:[%s9 + $0x1c] sm:$0xf]
      %v2195 = vld [vmem:[%s9 + $0x20] sm:$0xf]
      %v2196 = vld [vmem:[%s9 + $0x24] sm:$0xf]
      %v2197 = vld [vmem:[%s9 + $0x28] sm:$0xf]
      %v2198 = vld [vmem:[%s9 + $0x2c] sm:$0xf]
      %v2199 = vld [vmem:[%s9 + $0x30] sm:$0xf]
      %v2200 = vld [vmem:[%s9 + $0x34] sm:$0xf]
      %v2201 = vld [vmem:[%s9 + $0x38] sm:$0xf]
      %v2202 = vld [vmem:[%s9 + $0x3c] sm:$0xf]
      %v2203 = vld [vmem:[%s10] sm:$0x1]
      %v2220 = vunpack.c.l.b16 %v2187
      %v2221 = vunpack.c.l.b16 %v2188
      %v2222 = vunpack.c.l.b16 %v2189
      %v2223 = vunpack.c.l.b16 %v2190
      %v2224 = vunpack.c.l.b16 %v2191
      %v2225 = vunpack.c.l.b16 %v2192
      %v2226 = vunpack.c.l.b16 %v2193
      %v2227 = vunpack.c.l.b16 %v2194
      %v2228 = vunpack.c.l.b16 %v2195
      %v2229 = vunpack.c.l.b16 %v2196
      %v2230 = vunpack.c.l.b16 %v2197
      %v2231 = vunpack.c.l.b16 %v2198
      %v2232 = vunpack.c.l.b16 %v2199
      %v2233 = vunpack.c.l.b16 %v2200
      %v2234 = vunpack.c.l.b16 %v2201
      %v2235 = vunpack.c.l.b16 %v2202
      %v2236 = vpack.c.b16 %v2221, %v2220
      %v2237 = vpack.c.b16 %v2223, %v2222
      %v2238 = vpack.c.b16 %v2225, %v2224
      %v2239 = vpack.c.b16 %v2227, %v2226
      %v2240 = vpack.c.b16 %v2229, %v2228
      %v2241 = vpack.c.b16 %v2231, %v2230
      %v2242 = vpack.c.b16 %v2233, %v2232
      %v2243 = vpack.c.b16 %v2235, %v2234
      %2252 = vmatprep.subr.bf16.mxu0 0
      %2253 = vmatpush1.bf16.msra.mxu0 %v2236
      %2254 = vmatprep.subr.bf16.mxu0 0
      %2255 = vmatpush1.bf16.msra.mxu0 %v2237
      %2256 = vmatprep.subr.bf16.mxu0 0
      %2257 = vmatpush1.bf16.msra.mxu0 %v2238
      %2258 = vmatprep.subr.bf16.mxu0 0
      %2259 = vmatpush1.bf16.msra.mxu0 %v2239
      %2260 = vmatprep.subr.bf16.mxu0 0
      %2261 = vmatpush1.bf16.msra.mxu0 %v2240
      %2262 = vmatprep.subr.bf16.mxu0 0
      %2263 = vmatpush1.bf16.msra.mxu0 %v2241
      %2264 = vmatprep.subr.bf16.mxu0 0
      %2265 = vmatpush1.bf16.msra.mxu0 %v2242
      %2266 = vmatprep.subr.bf16.mxu0 0
      %2267 = vmatpush1.bf16.msra.mxu0 %v2243
      %2268 = vmatprep.subr.bf16.mxu0 0
      %2269 = vmatpush1.bf16.msra.mxu0 0
      %2270 = vmatprep.subr.bf16.mxu0 0
      %2271 = vmatpush1.bf16.msra.mxu0 0
      %2272 = vmatprep.subr.bf16.mxu0 0
      %2273 = vmatpush1.bf16.msra.mxu0 0
      %2274 = vmatprep.subr.bf16.mxu0 0
      %2275 = vmatpush1.bf16.msra.mxu0 0
      %2276 = vmatprep.subr.bf16.mxu0 0
      %2277 = vmatpush1.bf16.msra.mxu0 0
      %2278 = vmatprep.subr.bf16.mxu0 0
      %2279 = vmatpush1.bf16.msra.mxu0 0
      %2280 = vmatprep.subr.bf16.mxu0 0
      %2281 = vmatpush1.bf16.msra.mxu0 0
      %2282 = vmatprep.subr.bf16.mxu0 0
      %2283 = vmatpush1.bf16.msra.mxu0 0
      %2284 = vmatprep.mubr.bf16.mxu0 0
      %2285 = vmatmul.mubr.bf16.gmra.mrb[0].mxu0 %v2186
      %v2286 = vpop.f32.mrb[0].mxu0
      %v2287 = vadd.f32 %v2203, %v2286
      %v2288 = vpop.f32.mrb[0].mxu0
      %v2289 = vpop.f32.mrb[0].mxu0
      %v2290 = vpop.f32.mrb[0].mxu0
      %2291 = vdwg.mxu0
      %2292 = vst [vmem:[%s422] sm:$0x1] %v2287
      %p2293 = scmp.lt.s32.totalorder %s24, 1
      %s2294 = scalar_select %p2293, %s24, 1
      %s2295 = smul.addr %s2294, 8
      %s2296 = smul.addr %s2295, 8
      %s2297 = scalar_lea.vmem %s11, %s2296
      %p2298 = scmp.lt.s32.totalorder %s24, 1
      %s2299 = scalar_select %p2298, %s24, 1
      %s2300 = scalar_lea.vmem %s12, %s2299
      // Predicated region
      $region65: #{generalized_rcnn_forward.3} parent=63 // pred_check
        %p2301 = pneg %p278
      $region66: #{generalized_rcnn_forward.3} parent=63 // pred_check_branch
        %2303 = sbr.rel (%p2301) target = $region68
      $region67: #{generalized_rcnn_forward.3} parent=63 // pred_region
        _
      $region68: #{generalized_rcnn_forward.3} parent=63 // pred_fallthru
        _
      // Predicated region
      $region69: #{generalized_rcnn_forward.3} parent=63 // pred_check
        %p2304 = pneg %p304
      $region70: #{generalized_rcnn_forward.3} parent=63 // pred_check_branch
        %2306 = sbr.rel (%p2304) target = $region72
      $region71: #{generalized_rcnn_forward.3} parent=63 // pred_region
        _
      $region72: #{generalized_rcnn_forward.3} parent=63 // pred_fallthru
        _
    $region64: #{generalized_rcnn_forward.3} parent=5 // pred_fallthru
      _
    %p2307 = scmp.le.s32.totalorder 2, %s19
    // Predicated region
    $region73: #{generalized_rcnn_forward.3} parent=5 // pred_check
      %p2308 = pneg %p2307
    $region74: #{generalized_rcnn_forward.3} parent=5 // pred_check_branch
      %2310 = sbr.rel (%p2308) target = $region76
    $region75: #{generalized_rcnn_forward.3} parent=5 // pred_region
      %s2311 = ssub.s32 %s19, 2
      // Predicated region
      $region77: #{generalized_rcnn_forward.3} parent=75 // pred_check
        %p2312 = pneg %p284
      $region78: #{generalized_rcnn_forward.3} parent=75 // pred_check_branch
        %2314 = sbr.rel (%p2312) target = $region80
      $region79: #{generalized_rcnn_forward.3} parent=75 // pred_region
        %p2315 = scmp.lt.s32.totalorder %s25, 1
        %s2316 = scalar_select %p2315, %s25, 1
        %s2317 = smul.addr %s2316, 8
        %s2318 = smul.addr %s2317, 8
        %s2319 = scalar_lea.vmem %s11, %s2318
      $region80: #{generalized_rcnn_forward.3} parent=75 // pred_fallthru
        _
      // Predicated region
      $region81: #{generalized_rcnn_forward.3} parent=75 // pred_check
        %p2320 = pneg %p310
      $region82: #{generalized_rcnn_forward.3} parent=75 // pred_check_branch
        %2322 = sbr.rel (%p2320) target = $region84
      $region83: #{generalized_rcnn_forward.3} parent=75 // pred_region
        %p2323 = scmp.lt.s32.totalorder %s25, 1
        %s2324 = scalar_select %p2323, %s25, 1
        %s2325 = scalar_lea.vmem %s12, %s2324
      $region84: #{generalized_rcnn_forward.3} parent=75 // pred_fallthru
        _
    $region76: #{generalized_rcnn_forward.3} parent=5 // pred_fallthru
      _
  $region6: #{generalized_rcnn_forward.3} parent=0 // loop_footer
    %s23 = sadd.s32 1, %s19
  $region7: #{generalized_rcnn_forward.3} parent=0 // loop_footer_branch
    %18 = sbr.rel target = $region3
  $region8: #{generalized_rcnn_forward.3} parent=0 // loop_exit
    _

</llo_original>
